<compile_context>
chip_gen: v5e
topology: v5e:2x2
jax: 0.10.0
libtpu: 0.0.40
codegen_flags: <defaults>
</compile_context>

<pallas_src>
import functools

import jax
import jax.numpy as jnp
import numpy as np
from jax.experimental import pallas as pl
from jax.experimental.pallas import tpu as pltpu

_LANES = 128   # channel-padding target (TPU lane width)
_WOFF = 8      # sublane-aligned column where the scratch interior starts


def basic_block_kernel(xpad_ref, w1_ref, s1_ref, b1_ref,
                       w2_ref, s2_ref, b2_ref, out_ref, mid_ref):
    """Fused conv3x3 -> BN -> ReLU -> conv3x3 -> BN -> +residual -> ReLU.

    One grid step = one batch element.  Each 3x3 conv (padding=1, stride=1) is
    a single im2col matmul on the MXU (bf16 operands, f32 accumulation).
    """
    H, W, Cp = out_ref.shape[1], out_ref.shape[2], out_ref.shape[3]
    M = H * W

    # ---- conv1: im2col patch from 9 shifted views of the padded input ----
    # Center tap (dh=dw=1) is x itself; reuse it as the residual so x is read
    # from HBM exactly once.
    center = xpad_ref[0, 1:1 + H, 1:1 + W, :].reshape(M, Cp)      # f32
    cols = []
    for dh in range(3):
        for dw in range(3):
            if dh == 1 and dw == 1:
                tap = center
            else:
                tap = xpad_ref[0, dh:dh + H, dw:dw + W, :].reshape(M, Cp)
            cols.append(tap.astype(jnp.bfloat16))
    patch1 = jnp.concatenate(cols, axis=1)                        # (M, 9*Cp)
    out1 = jnp.dot(patch1, w1_ref[...], preferred_element_type=jnp.float32)
    out1 = jnp.maximum(out1 * s1_ref[...] + b1_ref[...], 0.0)     # BN1+ReLU f32

    # ---- hand conv1's output to conv2 through VMEM scratch with a 0 halo ----
    # Zero only the halo slabs (tile-aligned stores); the interior is written
    # at sublane column _WOFF=8, so the store below is unmasked/aligned.
    mid_ref[:, :_WOFF, :] = jnp.zeros((H + 2, _WOFF, Cp), jnp.float32)
    mid_ref[:, _WOFF + W:, :] = jnp.zeros((H + 2, _WOFF, Cp), jnp.float32)
    mid_ref[0, :, :] = jnp.zeros((W + 2 * _WOFF, Cp), jnp.float32)
    mid_ref[H + 1, :, :] = jnp.zeros((W + 2 * _WOFF, Cp), jnp.float32)
    mid_ref[1:1 + H, _WOFF:_WOFF + W, :] = out1.reshape(H, W, Cp)

    # ---- conv2: same single im2col matmul structure ----
    cols = []
    for dh in range(3):
        for dw in range(3):
            if dh == 1 and dw == 1:
                tap = out1                                        # reuse interior
            else:
                c0 = _WOFF - 1 + dw
                tap = mid_ref[dh:dh + H, c0:c0 + W, :].reshape(M, Cp)
            cols.append(tap.astype(jnp.bfloat16))
    patch2 = jnp.concatenate(cols, axis=1)
    out2 = jnp.dot(patch2, w2_ref[...], preferred_element_type=jnp.float32)
    out2 = out2 * s2_ref[...] + b2_ref[...]                       # BN2, f32

    # ---- residual add + ReLU; lane-dense (Cp multiple of 128) store ----
    out_ref[0, :, :, :] = jnp.maximum(out2 + center, 0.0).reshape(H, W, Cp)


@functools.partial(jax.jit, static_argnames=("eps",))
def basic_block(x, w1, g1, beta1, rm1, rv1, w2, g2, beta2, rm2, rv2, eps=1e-5):
    """x: (N, H, W, C) f32; w*: (3, 3, Cin, Cout) HWIO; BN params: (C,)."""
    N, H, W, C = x.shape
    assert w1.shape == (3, 3, C, C) and w2.shape == (3, 3, C, C), \
        "downsample=None requires inplanes == planes (stride=1)"

    Cp = ((C + _LANES - 1) // _LANES) * _LANES
    pc = Cp - C

    # Fold eval-mode BatchNorm into per-channel scale/bias; padded channels get
    # scale = bias = 0 so they stay identically zero through the whole block.
    def fold_bn(g, b, m, v):
        s = g / jnp.sqrt(v + eps)
        return (jnp.pad(s, (0, pc)).reshape(1, Cp),
                jnp.pad(b - m * s, (0, pc)).reshape(1, Cp))

    s1, b1 = fold_bn(g1, beta1, rm1, rv1)
    s2, b2 = fold_bn(g2, beta2, rm2, rv2)

    # im2col weights: (3,3,Cp,Cp) HWIO -> (9*Cp, Cp), bf16 for the MXU.
    def im2col_w(w):
        wp = jnp.pad(w, ((0, 0), (0, 0), (0, pc), (0, pc)))
        return wp.reshape(9 * Cp, Cp).astype(jnp.bfloat16)

    w1f, w2f = im2col_w(w1), im2col_w(w2)

    # +1 spatial halo and channel padding of x (read once by the kernel; the
    # residual comes from its interior slice).
    xpad = jnp.pad(x, ((0, 0), (1, 1), (1, 1), (0, pc)))

    full = lambda shp: pl.BlockSpec(shp, lambda n: (0,) * len(shp))

    out = pl.pallas_call(
        basic_block_kernel,
        out_shape=jax.ShapeDtypeStruct((N, H, W, Cp), jnp.float32),
        grid_spec=pltpu.PrefetchScalarGridSpec(
            num_scalar_prefetch=0,
            grid=(N,),
            in_specs=[
                pl.BlockSpec((1, H + 2, W + 2, Cp), lambda n: (n, 0, 0, 0)),
                full((9 * Cp, Cp)),   # w1 (im2col, bf16) -- resident in VMEM
                full((1, Cp)),        # bn1 scale
                full((1, Cp)),        # bn1 bias
                full((9 * Cp, Cp)),   # w2 (im2col, bf16)
                full((1, Cp)),        # bn2 scale
                full((1, Cp)),        # bn2 bias
            ],
            out_specs=pl.BlockSpec((1, H, W, Cp), lambda n: (n, 0, 0, 0)),
            scratch_shapes=[
                pltpu.VMEM((H + 2, W + 2 * _WOFF, Cp), jnp.float32)],
        ),
        compiler_params=pltpu.CompilerParams(
            dimension_semantics=("parallel",)),
    )(xpad, w1f, s1, b1, w2f, s2, b2)

    return out[..., :C] if pc else out


def reference_forward(x, w1, g1, beta1, rm1, rv1, w2, g2, beta2, rm2, rv2,
                      eps=1e-5):
    """Pure-JAX reference using the same bf16-operand / f32-accum conv math."""
    def conv(a, w):
        return jax.lax.conv_general_dilated(
            a.astype(jnp.bfloat16), w.astype(jnp.bfloat16),
            window_strides=(1, 1), padding="SAME",
            dimension_numbers=("NHWC", "HWIO", "NHWC"),
            preferred_element_type=jnp.float32)

    bn = lambda a, g, b, m, v: (a - m) / jnp.sqrt(v + eps) * g + b
    o = jnp.maximum(bn(conv(x, w1), g1, beta1, rm1, rv1), 0.0)
    o = bn(conv(o, w2), g2, beta2, rm2, rv2)
    return jnp.maximum(o + x, 0.0)


if __name__ == "__main__":
    # inplanes = planes = 8, stride = 1, downsample = None (module defaults).
    # N=4 so the batch-parallel grid has >2 steps (and is a multiple of 2 for
    # v7x's two TensorCores).
    N, H, W, C = 4, 16, 16, 8
    key = jax.random.PRNGKey(0)
    ks = jax.random.split(key, 11)

    x = jax.random.normal(ks[0], (N, H, W, C), jnp.float32)

    # conv weights in HWIO (PyTorch OIHW -> transpose(2, 3, 1, 0))
    w1 = jax.random.normal(ks[1], (3, 3, C, C), jnp.float32) * 0.1
    w2 = jax.random.normal(ks[2], (3, 3, C, C), jnp.float32) * 0.1

    g1 = jax.random.uniform(ks[3], (C,), jnp.float32, 0.5, 1.5)
    beta1 = jax.random.normal(ks[4], (C,), jnp.float32) * 0.1
    rm1 = jax.random.normal(ks[5], (C,), jnp.float32) * 0.1
    rv1 = jax.random.uniform(ks[6], (C,), jnp.float32, 0.5, 1.5)

    g2 = jax.random.uniform(ks[7], (C,), jnp.float32, 0.5, 1.5)
    beta2 = jax.random.normal(ks[8], (C,), jnp.float32) * 0.1
    rm2 = jax.random.normal(ks[9], (C,), jnp.float32) * 0.1
    rv2 = jax.random.uniform(ks[10], (C,), jnp.float32, 0.5, 1.5)

    out = basic_block(x, w1, g1, beta1, rm1, rv1, w2, g2, beta2, rm2, rv2)
    out = jax.block_until_ready(out)

    ref = reference_forward(x, w1, g1, beta1, rm1, rv1,
                            w2, g2, beta2, rm2, rv2)
    np.testing.assert_allclose(np.asarray(out), np.asarray(ref),
                               rtol=1e-2, atol=1e-2)
    print("KERNEL_OK")
</pallas_src>

<mosaic_0001>
module attributes {stable_mosaic.version = 11 : i64} {
  func.func @basic_block_kernel(%arg0: i32, %arg1: memref<1x18x18x128xf32, #tpu.memory_space<vmem>>, %arg2: memref<1152x128xbf16, #tpu.memory_space<vmem>>, %arg3: memref<1x128xf32, #tpu.memory_space<vmem>>, %arg4: memref<1x128xf32, #tpu.memory_space<vmem>>, %arg5: memref<1152x128xbf16, #tpu.memory_space<vmem>>, %arg6: memref<1x128xf32, #tpu.memory_space<vmem>>, %arg7: memref<1x128xf32, #tpu.memory_space<vmem>>, %arg8: memref<1x16x16x128xf32, #tpu.memory_space<vmem>>, %arg9: memref<18x32x128xf32, #tpu.memory_space<vmem>>) attributes {dimension_semantics = [#tpu.dimension_semantics<parallel>], iteration_bounds = array<i64: 4>, scalar_prefetch = 0 : i64, scratch_operands = 1 : i64, tpu.core_type = #tpu.core_type<tc>, window_params = [{transform_indices = @transform_0, window_bounds = array<i64: 1, 18, 18, 128>}, {pipeline_mode = #tpu.pipeline_mode<synchronous>, transform_indices = @transform_1, window_bounds = array<i64: 1152, 128>}, {pipeline_mode = #tpu.pipeline_mode<synchronous>, transform_indices = @transform_2, window_bounds = array<i64: 1, 128>}, {pipeline_mode = #tpu.pipeline_mode<synchronous>, transform_indices = @transform_3, window_bounds = array<i64: 1, 128>}, {pipeline_mode = #tpu.pipeline_mode<synchronous>, transform_indices = @transform_4, window_bounds = array<i64: 1152, 128>}, {pipeline_mode = #tpu.pipeline_mode<synchronous>, transform_indices = @transform_5, window_bounds = array<i64: 1, 128>}, {pipeline_mode = #tpu.pipeline_mode<synchronous>, transform_indices = @transform_6, window_bounds = array<i64: 1, 128>}, {transform_indices = @transform_7, window_bounds = array<i64: 1, 16, 16, 128>}]} {
    %c0 = arith.constant 0 : index
    %c1 = arith.constant 1 : index
    %c1_0 = arith.constant 1 : index
    %c0_1 = arith.constant 0 : index
    %0 = vector.load %arg1[%c0, %c1, %c1_0, %c0_1] : memref<1x18x18x128xf32, #tpu.memory_space<vmem>>, vector<1x16x16x128xf32>
    %1 = vector.shape_cast %0 : vector<1x16x16x128xf32> to vector<16x16x128xf32>
    %2 = vector.shape_cast %1 : vector<16x16x128xf32> to vector<256x128xf32>
    %c0_2 = arith.constant 0 : index
    %c0_3 = arith.constant 0 : index
    %c0_4 = arith.constant 0 : index
    %c0_5 = arith.constant 0 : index
    %3 = vector.load %arg1[%c0_2, %c0_3, %c0_4, %c0_5] : memref<1x18x18x128xf32, #tpu.memory_space<vmem>>, vector<1x16x16x128xf32>
    %4 = vector.shape_cast %3 : vector<1x16x16x128xf32> to vector<16x16x128xf32>
    %5 = vector.shape_cast %4 : vector<16x16x128xf32> to vector<256x128xf32>
    %6 = arith.truncf %5 : vector<256x128xf32> to vector<256x128xbf16>
    %c0_6 = arith.constant 0 : index
    %c0_7 = arith.constant 0 : index
    %c1_8 = arith.constant 1 : index
    %c0_9 = arith.constant 0 : index
    %7 = vector.load %arg1[%c0_6, %c0_7, %c1_8, %c0_9] : memref<1x18x18x128xf32, #tpu.memory_space<vmem>>, vector<1x16x16x128xf32>
    %8 = vector.shape_cast %7 : vector<1x16x16x128xf32> to vector<16x16x128xf32>
    %9 = vector.shape_cast %8 : vector<16x16x128xf32> to vector<256x128xf32>
    %10 = arith.truncf %9 : vector<256x128xf32> to vector<256x128xbf16>
    %c0_10 = arith.constant 0 : index
    %c0_11 = arith.constant 0 : index
    %c2 = arith.constant 2 : index
    %c0_12 = arith.constant 0 : index
    %11 = vector.load %arg1[%c0_10, %c0_11, %c2, %c0_12] : memref<1x18x18x128xf32, #tpu.memory_space<vmem>>, vector<1x16x16x128xf32>
    %12 = vector.shape_cast %11 : vector<1x16x16x128xf32> to vector<16x16x128xf32>
    %13 = vector.shape_cast %12 : vector<16x16x128xf32> to vector<256x128xf32>
    %14 = arith.truncf %13 : vector<256x128xf32> to vector<256x128xbf16>
    %c0_13 = arith.constant 0 : index
    %c1_14 = arith.constant 1 : index
    %c0_15 = arith.constant 0 : index
    %c0_16 = arith.constant 0 : index
    %15 = vector.load %arg1[%c0_13, %c1_14, %c0_15, %c0_16] : memref<1x18x18x128xf32, #tpu.memory_space<vmem>>, vector<1x16x16x128xf32>
    %16 = vector.shape_cast %15 : vector<1x16x16x128xf32> to vector<16x16x128xf32>
    %17 = vector.shape_cast %16 : vector<16x16x128xf32> to vector<256x128xf32>
    %18 = arith.truncf %17 : vector<256x128xf32> to vector<256x128xbf16>
    %19 = arith.truncf %2 : vector<256x128xf32> to vector<256x128xbf16>
    %c0_17 = arith.constant 0 : index
    %c1_18 = arith.constant 1 : index
    %c2_19 = arith.constant 2 : index
    %c0_20 = arith.constant 0 : index
    %20 = vector.load %arg1[%c0_17, %c1_18, %c2_19, %c0_20] : memref<1x18x18x128xf32, #tpu.memory_space<vmem>>, vector<1x16x16x128xf32>
    %21 = vector.shape_cast %20 : vector<1x16x16x128xf32> to vector<16x16x128xf32>
    %22 = vector.shape_cast %21 : vector<16x16x128xf32> to vector<256x128xf32>
    %23 = arith.truncf %22 : vector<256x128xf32> to vector<256x128xbf16>
    %c0_21 = arith.constant 0 : index
    %c2_22 = arith.constant 2 : index
    %c0_23 = arith.constant 0 : index
    %c0_24 = arith.constant 0 : index
    %24 = vector.load %arg1[%c0_21, %c2_22, %c0_23, %c0_24] : memref<1x18x18x128xf32, #tpu.memory_space<vmem>>, vector<1x16x16x128xf32>
    %25 = vector.shape_cast %24 : vector<1x16x16x128xf32> to vector<16x16x128xf32>
    %26 = vector.shape_cast %25 : vector<16x16x128xf32> to vector<256x128xf32>
    %27 = arith.truncf %26 : vector<256x128xf32> to vector<256x128xbf16>
    %c0_25 = arith.constant 0 : index
    %c2_26 = arith.constant 2 : index
    %c1_27 = arith.constant 1 : index
    %c0_28 = arith.constant 0 : index
    %28 = vector.load %arg1[%c0_25, %c2_26, %c1_27, %c0_28] : memref<1x18x18x128xf32, #tpu.memory_space<vmem>>, vector<1x16x16x128xf32>
    %29 = vector.shape_cast %28 : vector<1x16x16x128xf32> to vector<16x16x128xf32>
    %30 = vector.shape_cast %29 : vector<16x16x128xf32> to vector<256x128xf32>
    %31 = arith.truncf %30 : vector<256x128xf32> to vector<256x128xbf16>
    %c0_29 = arith.constant 0 : index
    %c2_30 = arith.constant 2 : index
    %c2_31 = arith.constant 2 : index
    %c0_32 = arith.constant 0 : index
    %32 = vector.load %arg1[%c0_29, %c2_30, %c2_31, %c0_32] : memref<1x18x18x128xf32, #tpu.memory_space<vmem>>, vector<1x16x16x128xf32>
    %33 = vector.shape_cast %32 : vector<1x16x16x128xf32> to vector<16x16x128xf32>
    %34 = vector.shape_cast %33 : vector<16x16x128xf32> to vector<256x128xf32>
    %35 = arith.truncf %34 : vector<256x128xf32> to vector<256x128xbf16>
    %36 = tpu.concatenate %6, %10, %14, %18, %19, %23, %27, %31, %35 in 1 : vector<256x128xbf16>, vector<256x128xbf16>, vector<256x128xbf16>, vector<256x128xbf16>, vector<256x128xbf16>, vector<256x128xbf16>, vector<256x128xbf16>, vector<256x128xbf16>, vector<256x128xbf16> -> vector<256x1152xbf16>
    %c0_33 = arith.constant 0 : index
    %c0_34 = arith.constant 0 : index
    %37 = vector.load %arg2[%c0_33, %c0_34] : memref<1152x128xbf16, #tpu.memory_space<vmem>>, vector<1152x128xbf16>
    %cst = arith.constant dense<0.000000e+00> : vector<256x128xf32>
    %38 = tpu.matmul %36, %37, %cst {dimension_numbers = #tpu.dot_dimension_numbers<[1], [0], [0], [1], [0, 0, 1, 1], [], []>} : vector<256x1152xbf16>, vector<1152x128xbf16>, vector<256x128xf32> -> vector<256x128xf32>
    %c0_35 = arith.constant 0 : index
    %c0_36 = arith.constant 0 : index
    %39 = vector.load %arg3[%c0_35, %c0_36] : memref<1x128xf32, #tpu.memory_space<vmem>>, vector<1x128xf32>
    %40 = vector.broadcast %39 : vector<1x128xf32> to vector<256x128xf32>
    %41 = arith.mulf %38, %40 : vector<256x128xf32>
    %c0_37 = arith.constant 0 : index
    %c0_38 = arith.constant 0 : index
    %42 = vector.load %arg4[%c0_37, %c0_38] : memref<1x128xf32, #tpu.memory_space<vmem>>, vector<1x128xf32>
    %43 = vector.broadcast %42 : vector<1x128xf32> to vector<256x128xf32>
    %44 = arith.addf %41, %43 : vector<256x128xf32>
    %cst_39 = arith.constant 0.000000e+00 : f32
    %45 = vector.broadcast %cst_39 : f32 to vector<256x128xf32>
    %46 = arith.maximumf %44, %45 : vector<256x128xf32>
    %cst_40 = arith.constant 0.000000e+00 : f32
    %47 = vector.broadcast %cst_40 : f32 to vector<18x8x128xf32>
    %c0_41 = arith.constant 0 : index
    %c0_42 = arith.constant 0 : index
    %c0_43 = arith.constant 0 : index
    %48 = vector.load %arg9[%c0_41, %c0_42, %c0_43] : memref<18x32x128xf32, #tpu.memory_space<vmem>>, vector<18x8x128xf32>
    tpu.vector_store %arg9[%c0_41, %c0_42, %c0_43], %47 {strides = array<i32>} : memref<18x32x128xf32, #tpu.memory_space<vmem>>, vector<18x8x128xf32>,
    %cst_44 = arith.constant 0.000000e+00 : f32
    %49 = vector.broadcast %cst_44 : f32 to vector<18x8x128xf32>
    %c0_45 = arith.constant 0 : index
    %c24 = arith.constant 24 : index
    %c0_46 = arith.constant 0 : index
    %50 = vector.load %arg9[%c0_45, %c24, %c0_46] : memref<18x32x128xf32, #tpu.memory_space<vmem>>, vector<18x8x128xf32>
    tpu.vector_store %arg9[%c0_45, %c24, %c0_46], %49 {strides = array<i32>} : memref<18x32x128xf32, #tpu.memory_space<vmem>>, vector<18x8x128xf32>,
    %cst_47 = arith.constant 0.000000e+00 : f32
    %51 = vector.broadcast %cst_47 : f32 to vector<32x128xf32>
    %c0_48 = arith.constant 0 : index
    %c0_49 = arith.constant 0 : index
    %c0_50 = arith.constant 0 : index
    %52 = vector.load %arg9[%c0_48, %c0_49, %c0_50] : memref<18x32x128xf32, #tpu.memory_space<vmem>>, vector<1x32x128xf32>
    %53 = vector.shape_cast %52 : vector<1x32x128xf32> to vector<32x128xf32>
    %54 = vector.shape_cast %51 : vector<32x128xf32> to vector<1x32x128xf32>
    tpu.vector_store %arg9[%c0_48, %c0_49, %c0_50], %54 {strides = array<i32>} : memref<18x32x128xf32, #tpu.memory_space<vmem>>, vector<1x32x128xf32>,
    %cst_51 = arith.constant 0.000000e+00 : f32
    %55 = vector.broadcast %cst_51 : f32 to vector<32x128xf32>
    %c17 = arith.constant 17 : index
    %c0_52 = arith.constant 0 : index
    %c0_53 = arith.constant 0 : index
    %56 = vector.load %arg9[%c17, %c0_52, %c0_53] : memref<18x32x128xf32, #tpu.memory_space<vmem>>, vector<1x32x128xf32>
    %57 = vector.shape_cast %56 : vector<1x32x128xf32> to vector<32x128xf32>
    %58 = vector.shape_cast %55 : vector<32x128xf32> to vector<1x32x128xf32>
    tpu.vector_store %arg9[%c17, %c0_52, %c0_53], %58 {strides = array<i32>} : memref<18x32x128xf32, #tpu.memory_space<vmem>>, vector<1x32x128xf32>,
    %59 = vector.shape_cast %46 : vector<256x128xf32> to vector<16x16x128xf32>
    %c1_54 = arith.constant 1 : index
    %c8 = arith.constant 8 : index
    %c0_55 = arith.constant 0 : index
    %60 = vector.load %arg9[%c1_54, %c8, %c0_55] : memref<18x32x128xf32, #tpu.memory_space<vmem>>, vector<16x16x128xf32>
    tpu.vector_store %arg9[%c1_54, %c8, %c0_55], %59 {strides = array<i32>} : memref<18x32x128xf32, #tpu.memory_space<vmem>>, vector<16x16x128xf32>,
    %c0_56 = arith.constant 0 : index
    %c7 = arith.constant 7 : index
    %c0_57 = arith.constant 0 : index
    %61 = vector.load %arg9[%c0_56, %c7, %c0_57] : memref<18x32x128xf32, #tpu.memory_space<vmem>>, vector<16x16x128xf32>
    %62 = vector.shape_cast %61 : vector<16x16x128xf32> to vector<256x128xf32>
    %63 = arith.truncf %62 : vector<256x128xf32> to vector<256x128xbf16>
    %c0_58 = arith.constant 0 : index
    %c8_59 = arith.constant 8 : index
    %c0_60 = arith.constant 0 : index
    %64 = vector.load %arg9[%c0_58, %c8_59, %c0_60] : memref<18x32x128xf32, #tpu.memory_space<vmem>>, vector<16x16x128xf32>
    %65 = vector.shape_cast %64 : vector<16x16x128xf32> to vector<256x128xf32>
    %66 = arith.truncf %65 : vector<256x128xf32> to vector<256x128xbf16>
    %c0_61 = arith.constant 0 : index
    %c9 = arith.constant 9 : index
    %c0_62 = arith.constant 0 : index
    %67 = vector.load %arg9[%c0_61, %c9, %c0_62] : memref<18x32x128xf32, #tpu.memory_space<vmem>>, vector<16x16x128xf32>
    %68 = vector.shape_cast %67 : vector<16x16x128xf32> to vector<256x128xf32>
    %69 = arith.truncf %68 : vector<256x128xf32> to vector<256x128xbf16>
    %c1_63 = arith.constant 1 : index
    %c7_64 = arith.constant 7 : index
    %c0_65 = arith.constant 0 : index
    %70 = vector.load %arg9[%c1_63, %c7_64, %c0_65] : memref<18x32x128xf32, #tpu.memory_space<vmem>>, vector<16x16x128xf32>
    %71 = vector.shape_cast %70 : vector<16x16x128xf32> to vector<256x128xf32>
    %72 = arith.truncf %71 : vector<256x128xf32> to vector<256x128xbf16>
    %73 = arith.truncf %46 : vector<256x128xf32> to vector<256x128xbf16>
    %c1_66 = arith.constant 1 : index
    %c9_67 = arith.constant 9 : index
    %c0_68 = arith.constant 0 : index
    %74 = vector.load %arg9[%c1_66, %c9_67, %c0_68] : memref<18x32x128xf32, #tpu.memory_space<vmem>>, vector<16x16x128xf32>
    %75 = vector.shape_cast %74 : vector<16x16x128xf32> to vector<256x128xf32>
    %76 = arith.truncf %75 : vector<256x128xf32> to vector<256x128xbf16>
    %c2_69 = arith.constant 2 : index
    %c7_70 = arith.constant 7 : index
    %c0_71 = arith.constant 0 : index
    %77 = vector.load %arg9[%c2_69, %c7_70, %c0_71] : memref<18x32x128xf32, #tpu.memory_space<vmem>>, vector<16x16x128xf32>
    %78 = vector.shape_cast %77 : vector<16x16x128xf32> to vector<256x128xf32>
    %79 = arith.truncf %78 : vector<256x128xf32> to vector<256x128xbf16>
    %c2_72 = arith.constant 2 : index
    %c8_73 = arith.constant 8 : index
    %c0_74 = arith.constant 0 : index
    %80 = vector.load %arg9[%c2_72, %c8_73, %c0_74] : memref<18x32x128xf32, #tpu.memory_space<vmem>>, vector<16x16x128xf32>
    %81 = vector.shape_cast %80 : vector<16x16x128xf32> to vector<256x128xf32>
    %82 = arith.truncf %81 : vector<256x128xf32> to vector<256x128xbf16>
    %c2_75 = arith.constant 2 : index
    %c9_76 = arith.constant 9 : index
    %c0_77 = arith.constant 0 : index
    %83 = vector.load %arg9[%c2_75, %c9_76, %c0_77] : memref<18x32x128xf32, #tpu.memory_space<vmem>>, vector<16x16x128xf32>
    %84 = vector.shape_cast %83 : vector<16x16x128xf32> to vector<256x128xf32>
    %85 = arith.truncf %84 : vector<256x128xf32> to vector<256x128xbf16>
    %86 = tpu.concatenate %63, %66, %69, %72, %73, %76, %79, %82, %85 in 1 : vector<256x128xbf16>, vector<256x128xbf16>, vector<256x128xbf16>, vector<256x128xbf16>, vector<256x128xbf16>, vector<256x128xbf16>, vector<256x128xbf16>, vector<256x128xbf16>, vector<256x128xbf16> -> vector<256x1152xbf16>
    %c0_78 = arith.constant 0 : index
    %c0_79 = arith.constant 0 : index
    %87 = vector.load %arg5[%c0_78, %c0_79] : memref<1152x128xbf16, #tpu.memory_space<vmem>>, vector<1152x128xbf16>
    %cst_80 = arith.constant dense<0.000000e+00> : vector<256x128xf32>
    %88 = tpu.matmul %86, %87, %cst_80 {dimension_numbers = #tpu.dot_dimension_numbers<[1], [0], [0], [1], [0, 0, 1, 1], [], []>} : vector<256x1152xbf16>, vector<1152x128xbf16>, vector<256x128xf32> -> vector<256x128xf32>
    %c0_81 = arith.constant 0 : index
    %c0_82 = arith.constant 0 : index
    %89 = vector.load %arg6[%c0_81, %c0_82] : memref<1x128xf32, #tpu.memory_space<vmem>>, vector<1x128xf32>
    %90 = vector.broadcast %89 : vector<1x128xf32> to vector<256x128xf32>
    %91 = arith.mulf %88, %90 : vector<256x128xf32>
    %c0_83 = arith.constant 0 : index
    %c0_84 = arith.constant 0 : index
    %92 = vector.load %arg7[%c0_83, %c0_84] : memref<1x128xf32, #tpu.memory_space<vmem>>, vector<1x128xf32>
    %93 = vector.broadcast %92 : vector<1x128xf32> to vector<256x128xf32>
    %94 = arith.addf %91, %93 : vector<256x128xf32>
    %95 = arith.addf %94, %2 : vector<256x128xf32>
    %cst_85 = arith.constant 0.000000e+00 : f32
    %96 = vector.broadcast %cst_85 : f32 to vector<256x128xf32>
    %97 = arith.maximumf %95, %96 : vector<256x128xf32>
    %98 = vector.shape_cast %97 : vector<256x128xf32> to vector<16x16x128xf32>
    %c0_86 = arith.constant 0 : index
    %c0_87 = arith.constant 0 : index
    %c0_88 = arith.constant 0 : index
    %c0_89 = arith.constant 0 : index
    %99 = vector.load %arg8[%c0_86, %c0_87, %c0_88, %c0_89] : memref<1x16x16x128xf32, #tpu.memory_space<vmem>>, vector<1x16x16x128xf32>
    %100 = vector.shape_cast %99 : vector<1x16x16x128xf32> to vector<16x16x128xf32>
    %101 = vector.shape_cast %98 : vector<16x16x128xf32> to vector<1x16x16x128xf32>
    tpu.vector_store %arg8[%c0_86, %c0_87, %c0_88, %c0_89], %101 {strides = array<i32>} : memref<1x16x16x128xf32, #tpu.memory_space<vmem>>, vector<1x16x16x128xf32>,
    return
  }
  func.func @transform_0(%arg0: i32) -> (i32, i32, i32, i32) {
    %c0_i32 = arith.constant 0 : i32
    %c0_i32_0 = arith.constant 0 : i32
    %c0_i32_1 = arith.constant 0 : i32
    %c0_i32_2 = arith.constant 0 : i32
    return %arg0, %c0_i32, %c0_i32_0, %c0_i32_1 : i32, i32, i32, i32
  }
  func.func @transform_1(%arg0: i32) -> (i32, i32) {
    %c0_i32 = arith.constant 0 : i32
    %c0_i32_0 = arith.constant 0 : i32
    %c0_i32_1 = arith.constant 0 : i32
    return %c0_i32, %c0_i32_0 : i32, i32
  }
  func.func @transform_2(%arg0: i32) -> (i32, i32) {
    %c0_i32 = arith.constant 0 : i32
    %c0_i32_0 = arith.constant 0 : i32
    %c0_i32_1 = arith.constant 0 : i32
    return %c0_i32, %c0_i32_0 : i32, i32
  }
  func.func @transform_3(%arg0: i32) -> (i32, i32) {
    %c0_i32 = arith.constant 0 : i32
    %c0_i32_0 = arith.constant 0 : i32
    %c0_i32_1 = arith.constant 0 : i32
    return %c0_i32, %c0_i32_0 : i32, i32
  }
  func.func @transform_4(%arg0: i32) -> (i32, i32) {
    %c0_i32 = arith.constant 0 : i32
    %c0_i32_0 = arith.constant 0 : i32
    %c0_i32_1 = arith.constant 0 : i32
    return %c0_i32, %c0_i32_0 : i32, i32
  }
  func.func @transform_5(%arg0: i32) -> (i32, i32) {
    %c0_i32 = arith.constant 0 : i32
    %c0_i32_0 = arith.constant 0 : i32
    %c0_i32_1 = arith.constant 0 : i32
    return %c0_i32, %c0_i32_0 : i32, i32
  }
  func.func @transform_6(%arg0: i32) -> (i32, i32) {
    %c0_i32 = arith.constant 0 : i32
    %c0_i32_0 = arith.constant 0 : i32
    %c0_i32_1 = arith.constant 0 : i32
    return %c0_i32, %c0_i32_0 : i32, i32
  }
  func.func @transform_7(%arg0: i32) -> (i32, i32, i32, i32) {
    %c0_i32 = arith.constant 0 : i32
    %c0_i32_0 = arith.constant 0 : i32
    %c0_i32_1 = arith.constant 0 : i32
    %c0_i32_2 = arith.constant 0 : i32
    return %arg0, %c0_i32, %c0_i32_0, %c0_i32_1 : i32, i32, i32, i32
  }
}

</mosaic_0001>

<llo_original>
// kernel: basic_block.1
$region0: #{basic_block.1}
  #allocation0 [shape = 'u32[]', space=smem, size = 0x4, offset = 0x4, fixed_abs, tag = 'smem constant byte address 0x4 - core index']
  #allocation1 [shape = 'u32[72,128]{1,0:T(1,128)}', space=vmem, size = 0x9000, scoped, tag = 'internal scratch']
  #allocation2 [shape = 'f32[18,32,128]{2,1,0:T(8,128)}', space=vmem, size = 0x48000, scoped, tag = 'scratch operand']
  %s0 = inlined_call_operand.vmem [shape: f32[4,18,18,128], index: 0, kind: input, shape index: {}]
  %s1 = inlined_call_operand.vmem [shape: bf16[1152,128], index: 1, kind: input, shape index: {}]
  %s2 = inlined_call_operand.vmem [shape: f32[1,128], index: 2, kind: input, shape index: {}]
  %s3 = inlined_call_operand.vmem [shape: f32[1,128], index: 3, kind: input, shape index: {}]
  %s4 = inlined_call_operand.vmem [shape: bf16[1152,128], index: 4, kind: input, shape index: {}]
  %s5 = inlined_call_operand.vmem [shape: f32[1,128], index: 5, kind: input, shape index: {}]
  %s6 = inlined_call_operand.vmem [shape: f32[1,128], index: 6, kind: input, shape index: {}]
  %s7 = inlined_call_operand.vmem [shape: f32[4,16,16,128], index: 7, kind: output, shape index: {}]
  %s8 = sld [smem:[#allocation0]]
  $region61: #{basic_block.1} parent=0
    _
  %s10 = ssub.s32 1, %s8
  %s11 = scalar_select 0, %s10, %s8
  loop: start=0, step=1, limit=6
  $region2: #{basic_block.1} parent=0 // loop_pre_header
    _
  $region3: #{basic_block.1} parent=0 // loop_header
    %s13 = sphi 0, %s17
    %p14 = scmp.ge.s32.totalorder %s13, 6
    %s23 = sphi 0, %s25
    %s26 = sphi 0, %s23
    %s27 = sphi 0, %s26
    %s43 = sphi 0, %s27
    %s47 = sphi 0, %s47
    %s49 = sphi 0, %s47
    %s50 = sphi 0, %s49
    %s64 = sphi 0, %s50
    %s68 = sphi 0, %s68
    %s70 = sphi 0, %s68
    %s71 = sphi 0, %s70
    %s85 = sphi 0, %s71
    %s89 = sphi 0, %s89
    %s91 = sphi 0, %s89
    %s92 = sphi 0, %s91
    %s106 = sphi 0, %s92
    %s110 = sphi 0, %s110
    %s112 = sphi 0, %s110
    %s113 = sphi 0, %s112
    %s127 = sphi 0, %s113
    %s131 = sphi 0, %s131
    %s133 = sphi 0, %s131
    %s134 = sphi 0, %s133
    %s148 = sphi 0, %s134
    %s152 = sphi 0, %s152
    %s154 = sphi 0, %s152
    %s155 = sphi 0, %s154
    %s169 = sphi 0, %s155
    %s175 = sphi 0, %s177
    %s178 = sphi 0, %s175
    %s179 = sphi 0, %s178
    %s195 = sphi 0, %s179
  $region4: #{basic_block.1} parent=0 // loop_header_branch
    %16 = sbr.rel (%p14) target = $region8
  $region5: #{basic_block.1} parent=0 // loop_body
    %s18 = ssub.s32 %s13, 1
    %s19 = ssub.s32 %s13, 2
    %s20 = sadd.s32 %s13, 1
    %s21 = ssub.s32 %s13, %s20
    %p22 = scmp.eq.s32.totalorder %s21, 0
    %s24 = sadd.s32 %s23, 1
    %s25 = scalar_select %p22, %s23, %s24
    %p28 = pneg %p22
    %p29 = scmp.eq.s32.totalorder %s13, 3
    %p30 = por %p28, %p29
    %p31 = scmp.ne.s32.totalorder %s23, %s26
    %p32 = scmp.eq.s32.totalorder %s13, 0
    %p33 = por %p31, %p32
    %p34 = scmp.ne.s32.totalorder %s23, %s26
    %p35 = scmp.eq.s32.totalorder %s18, 3
    %p36 = por %p34, %p35
    %p37 = scmp.ne.s32.totalorder %s26, %s27
    %p38 = scmp.eq.s32.totalorder %s18, 0
    %p39 = por %p37, %p38
    %p40 = scmp.ne.s32.totalorder %s26, %s27
    %p41 = scmp.eq.s32.totalorder %s19, 3
    %p42 = por %p40, %p41
    %p44 = scmp.ne.s32.totalorder %s27, %s43
    %p45 = scmp.eq.s32.totalorder %s19, 0
    %p46 = por %p44, %p45
    %s48 = sadd.s32 %s47, 1
    %p51 = scmp.eq.s32.totalorder %s13, 3
    %p52 = scmp.ne.s32.totalorder %s47, %s49
    %p53 = scmp.eq.s32.totalorder %s13, 0
    %p54 = por %p52, %p53
    %p55 = scmp.ne.s32.totalorder %s47, %s49
    %p56 = scmp.eq.s32.totalorder %s18, 3
    %p57 = por %p55, %p56
    %p58 = scmp.ne.s32.totalorder %s49, %s50
    %p59 = scmp.eq.s32.totalorder %s18, 0
    %p60 = por %p58, %p59
    %p61 = scmp.ne.s32.totalorder %s49, %s50
    %p62 = scmp.eq.s32.totalorder %s19, 3
    %p63 = por %p61, %p62
    %p65 = scmp.ne.s32.totalorder %s50, %s64
    %p66 = scmp.eq.s32.totalorder %s19, 0
    %p67 = por %p65, %p66
    %s69 = sadd.s32 %s68, 1
    %p72 = scmp.eq.s32.totalorder %s13, 3
    %p73 = scmp.ne.s32.totalorder %s68, %s70
    %p74 = scmp.eq.s32.totalorder %s13, 0
    %p75 = por %p73, %p74
    %p76 = scmp.ne.s32.totalorder %s68, %s70
    %p77 = scmp.eq.s32.totalorder %s18, 3
    %p78 = por %p76, %p77
    %p79 = scmp.ne.s32.totalorder %s70, %s71
    %p80 = scmp.eq.s32.totalorder %s18, 0
    %p81 = por %p79, %p80
    %p82 = scmp.ne.s32.totalorder %s70, %s71
    %p83 = scmp.eq.s32.totalorder %s19, 3
    %p84 = por %p82, %p83
    %p86 = scmp.ne.s32.totalorder %s71, %s85
    %p87 = scmp.eq.s32.totalorder %s19, 0
    %p88 = por %p86, %p87
    %s90 = sadd.s32 %s89, 1
    %p93 = scmp.eq.s32.totalorder %s13, 3
    %p94 = scmp.ne.s32.totalorder %s89, %s91
    %p95 = scmp.eq.s32.totalorder %s13, 0
    %p96 = por %p94, %p95
    %p97 = scmp.ne.s32.totalorder %s89, %s91
    %p98 = scmp.eq.s32.totalorder %s18, 3
    %p99 = por %p97, %p98
    %p100 = scmp.ne.s32.totalorder %s91, %s92
    %p101 = scmp.eq.s32.totalorder %s18, 0
    %p102 = por %p100, %p101
    %p103 = scmp.ne.s32.totalorder %s91, %s92
    %p104 = scmp.eq.s32.totalorder %s19, 3
    %p105 = por %p103, %p104
    %p107 = scmp.ne.s32.totalorder %s92, %s106
    %p108 = scmp.eq.s32.totalorder %s19, 0
    %p109 = por %p107, %p108
    %s111 = sadd.s32 %s110, 1
    %p114 = scmp.eq.s32.totalorder %s13, 3
    %p115 = scmp.ne.s32.totalorder %s110, %s112
    %p116 = scmp.eq.s32.totalorder %s13, 0
    %p117 = por %p115, %p116
    %p118 = scmp.ne.s32.totalorder %s110, %s112
    %p119 = scmp.eq.s32.totalorder %s18, 3
    %p120 = por %p118, %p119
    %p121 = scmp.ne.s32.totalorder %s112, %s113
    %p122 = scmp.eq.s32.totalorder %s18, 0
    %p123 = por %p121, %p122
    %p124 = scmp.ne.s32.totalorder %s112, %s113
    %p125 = scmp.eq.s32.totalorder %s19, 3
    %p126 = por %p124, %p125
    %p128 = scmp.ne.s32.totalorder %s113, %s127
    %p129 = scmp.eq.s32.totalorder %s19, 0
    %p130 = por %p128, %p129
    %s132 = sadd.s32 %s131, 1
    %p135 = scmp.eq.s32.totalorder %s13, 3
    %p136 = scmp.ne.s32.totalorder %s131, %s133
    %p137 = scmp.eq.s32.totalorder %s13, 0
    %p138 = por %p136, %p137
    %p139 = scmp.ne.s32.totalorder %s131, %s133
    %p140 = scmp.eq.s32.totalorder %s18, 3
    %p141 = por %p139, %p140
    %p142 = scmp.ne.s32.totalorder %s133, %s134
    %p143 = scmp.eq.s32.totalorder %s18, 0
    %p144 = por %p142, %p143
    %p145 = scmp.ne.s32.totalorder %s133, %s134
    %p146 = scmp.eq.s32.totalorder %s19, 3
    %p147 = por %p145, %p146
    %p149 = scmp.ne.s32.totalorder %s134, %s148
    %p150 = scmp.eq.s32.totalorder %s19, 0
    %p151 = por %p149, %p150
    %s153 = sadd.s32 %s152, 1
    %p156 = scmp.eq.s32.totalorder %s13, 3
    %p157 = scmp.ne.s32.totalorder %s152, %s154
    %p158 = scmp.eq.s32.totalorder %s13, 0
    %p159 = por %p157, %p158
    %p160 = scmp.ne.s32.totalorder %s152, %s154
    %p161 = scmp.eq.s32.totalorder %s18, 3
    %p162 = por %p160, %p161
    %p163 = scmp.ne.s32.totalorder %s154, %s155
    %p164 = scmp.eq.s32.totalorder %s18, 0
    %p165 = por %p163, %p164
    %p166 = scmp.ne.s32.totalorder %s154, %s155
    %p167 = scmp.eq.s32.totalorder %s19, 3
    %p168 = por %p166, %p167
    %p170 = scmp.ne.s32.totalorder %s155, %s169
    %p171 = scmp.eq.s32.totalorder %s19, 0
    %p172 = por %p170, %p171
    %s173 = ssub.s32 %s13, %s20
    %p174 = scmp.eq.s32.totalorder %s173, 0
    %s176 = sadd.s32 %s175, 1
    %s177 = scalar_select %p174, %s175, %s176
    %p180 = pneg %p174
    %p181 = scmp.eq.s32.totalorder %s13, 3
    %p182 = por %p180, %p181
    %p183 = scmp.ne.s32.totalorder %s175, %s178
    %p184 = scmp.eq.s32.totalorder %s13, 0
    %p185 = por %p183, %p184
    %p186 = scmp.ne.s32.totalorder %s175, %s178
    %p187 = scmp.eq.s32.totalorder %s18, 3
    %p188 = por %p186, %p187
    %p189 = scmp.ne.s32.totalorder %s178, %s179
    %p190 = scmp.eq.s32.totalorder %s18, 0
    %p191 = por %p189, %p190
    %p192 = scmp.ne.s32.totalorder %s178, %s179
    %p193 = scmp.eq.s32.totalorder %s19, 3
    %p194 = por %p192, %p193
    %p196 = scmp.ne.s32.totalorder %s179, %s195
    %p197 = scmp.eq.s32.totalorder %s19, 0
    %p198 = por %p196, %p197
    %p199 = scmp.le.s32.totalorder 1, %s13
    %p200 = scmp.lt.s32.totalorder %s13, 5
    %p201 = pnand %p199, %p200
    %p202 = pneg %p201
    // Predicated region
    $region9: #{basic_block.1} parent=5 // pred_check
      _
    $region10: #{basic_block.1} parent=5 // pred_check_branch
      %204 = sbr.rel (%p201) target = $region12
    $region11: #{basic_block.1} parent=5 // pred_region
      %s205 = ssub.s32 %s13, 1
      // Predicated region
      $region13: #{basic_block.1} parent=11 // pred_check
        %p206 = pneg %p60
      $region14: #{basic_block.1} parent=11 // pred_check_branch
        %208 = sbr.rel (%p206) target = $region16
      $region15: #{basic_block.1} parent=11 // pred_region
        _
      $region16: #{basic_block.1} parent=11 // pred_fallthru
        _
      // Predicated region
      $region17: #{basic_block.1} parent=11 // pred_check
        %p209 = pneg %p81
      $region18: #{basic_block.1} parent=11 // pred_check_branch
        %211 = sbr.rel (%p209) target = $region20
      $region19: #{basic_block.1} parent=11 // pred_region
        _
      $region20: #{basic_block.1} parent=11 // pred_fallthru
        _
      // Predicated region
      $region21: #{basic_block.1} parent=11 // pred_check
        %p212 = pneg %p102
      $region22: #{basic_block.1} parent=11 // pred_check_branch
        %214 = sbr.rel (%p212) target = $region24
      $region23: #{basic_block.1} parent=11 // pred_region
        _
      $region24: #{basic_block.1} parent=11 // pred_fallthru
        _
      // Predicated region
      $region25: #{basic_block.1} parent=11 // pred_check
        %p215 = pneg %p123
      $region26: #{basic_block.1} parent=11 // pred_check_branch
        %217 = sbr.rel (%p215) target = $region28
      $region27: #{basic_block.1} parent=11 // pred_region
        _
      $region28: #{basic_block.1} parent=11 // pred_fallthru
        _
      // Predicated region
      $region29: #{basic_block.1} parent=11 // pred_check
        %p218 = pneg %p144
      $region30: #{basic_block.1} parent=11 // pred_check_branch
        %220 = sbr.rel (%p218) target = $region32
      $region31: #{basic_block.1} parent=11 // pred_region
        _
      $region32: #{basic_block.1} parent=11 // pred_fallthru
        _
      // Predicated region
      $region33: #{basic_block.1} parent=11 // pred_check
        %p221 = pneg %p165
      $region34: #{basic_block.1} parent=11 // pred_check_branch
        %223 = sbr.rel (%p221) target = $region36
      $region35: #{basic_block.1} parent=11 // pred_region
        _
      $region36: #{basic_block.1} parent=11 // pred_fallthru
        _
    $region12: #{basic_block.1} parent=5 // pred_fallthru
      _
    %p224 = scmp.lt.s32.totalorder %s13, 4
    // Predicated region
    $region37: #{basic_block.1} parent=5 // pred_check
      %p225 = pneg %p224
    $region38: #{basic_block.1} parent=5 // pred_check_branch
      %227 = sbr.rel (%p225) target = $region40
    $region39: #{basic_block.1} parent=5 // pred_region
      // Predicated region
      $region41: #{basic_block.1} parent=39 // pred_check
        %p228 = pneg %p33
      $region42: #{basic_block.1} parent=39 // pred_check_branch
        %230 = sbr.rel (%p228) target = $region44
      $region43: #{basic_block.1} parent=39 // pred_region
        %p231 = scmp.lt.s32.totalorder %s13, 3
        %s232 = scalar_select %p231, %s13, 3
        %s233 = smul.addr %s232, 54
        %s234 = smul.addr %s233, 8
        %s235 = scalar_lea.vmem %s0, %s234
      $region44: #{basic_block.1} parent=39 // pred_fallthru
        _
    $region40: #{basic_block.1} parent=5 // pred_fallthru
      _
    %p236 = scmp.le.s32.totalorder 1, %s13
    %p237 = scmp.lt.s32.totalorder %s13, 5
    %p238 = pnand %p236, %p237
    %p239 = pneg %p238
    // Predicated region
    $region45: #{basic_block.1} parent=5 // pred_check
      _
    $region46: #{basic_block.1} parent=5 // pred_check_branch
      %241 = sbr.rel (%p238) target = $region48
    $region47: #{basic_block.1} parent=5 // pred_region
      %s242 = ssub.s32 %s13, 1
      %p243 = scmp.lt.s32.totalorder %s18, 3
      %s244 = scalar_select %p243, %s18, 3
      %s245 = smul.addr %s244, 54
      %s246 = smul.addr %s245, 8
      %s247 = scalar_lea.vmem %s0, %s246
      %p248 = pneg %p39
      %p249 = pneg %p36
      %p250 = pneg %p60
      %p251 = pneg %p57
      %p252 = pneg %p81
      %p253 = pneg %p78
      %p254 = pneg %p102
      %p255 = pneg %p99
      %p256 = pneg %p123
      %p257 = pneg %p120
      %p258 = pneg %p144
      %p259 = pneg %p141
      %p260 = pneg %p165
      %p261 = pneg %p162
      %p262 = pneg %p191
      %p263 = pneg %p188
      %p264 = scmp.lt.s32.totalorder %s18, 3
      %s265 = scalar_select %p264, %s18, 3
      %s266 = smul.addr %s265, 32
      %s267 = smul.addr %s266, 8
      %s268 = scalar_lea.vmem %s7, %s267
      %p269 = scmp.lt.s32.totalorder %s18, 3
      %s270 = scalar_select %p269, %s18, 3
      %s271 = smul.addr %s270, 54
      %s272 = smul.addr %s271, 8
      %s273 = scalar_lea.vmem %s0, %s272
      %p274 = scmp.lt.s32.totalorder %s18, 3
      %s275 = scalar_select %p274, %s18, 3
      %s276 = smul.addr %s275, 32
      %s277 = smul.addr %s276, 8
      %s278 = scalar_lea.vmem %s7, %s277
      %s279 = scalar_lea.vmem %s273, 24
      %v280 = vld [vmem:[%s279 + $0x1] sm:$0xff]
      %v281 = vld [vmem:[%s279 + $0x9] sm:$0xff]
      %v282 = vld [vmem:[%s279 + $0x19] sm:$0xff]
      %v283 = vld [vmem:[%s279 + $0x21] sm:$0xff]
      %v284 = vld [vmem:[%s279 + $0x31] sm:$0xff]
      %v285 = vld [vmem:[%s279 + $0x39] sm:$0xff]
      %v286 = vld [vmem:[%s279 + $0x49] sm:$0xff]
      %v287 = vld [vmem:[%s279 + $0x51] sm:$0xff]
      %v288 = vld [vmem:[%s279 + $0x61] sm:$0xff]
      %v289 = vld [vmem:[%s279 + $0x69] sm:$0xff]
      %v290 = vld [vmem:[%s279 + $0x79] sm:$0xff]
      %v291 = vld [vmem:[%s279 + $0x81] sm:$0xff]
      %v292 = vld [vmem:[%s279 + $0x91] sm:$0xff]
      %v293 = vld [vmem:[%s279 + $0x99] sm:$0xff]
      %v294 = vld [vmem:[%s279 + $0xa9] sm:$0xff]
      %v295 = vld [vmem:[%s279 + $0xb1] sm:$0xff]
      %v296 = vld [vmem:[%s279 + $0xc1] sm:$0xff]
      %v297 = vld [vmem:[%s279 + $0xc9] sm:$0xff]
      %v298 = vld [vmem:[%s279 + $0xd9] sm:$0xff]
      %v299 = vld [vmem:[%s279 + $0xe1] sm:$0xff]
      %v300 = vld [vmem:[%s279 + $0xf1] sm:$0xff]
      %v301 = vld [vmem:[%s279 + $0xf9] sm:$0xff]
      %v302 = vld [vmem:[%s279 + $0x109] sm:$0xff]
      %v303 = vld [vmem:[%s279 + $0x111] sm:$0xff]
      %v304 = vld [vmem:[%s279 + $0x121] sm:$0xff]
      %v305 = vld [vmem:[%s279 + $0x129] sm:$0xff]
      %v306 = vld [vmem:[%s279 + $0x139] sm:$0xff]
      %v307 = vld [vmem:[%s279 + $0x141] sm:$0xff]
      %v308 = vld [vmem:[%s279 + $0x151] sm:$0xff]
      %v309 = vld [vmem:[%s279 + $0x159] sm:$0xff]
      %v310 = vld [vmem:[%s279 + $0x169] sm:$0xff]
      %v311 = vld [vmem:[%s279 + $0x171] sm:$0xff]
      %v312 = vld [vmem:[%s273] sm:$0xff]
      %v313 = vld [vmem:[%s273 + $0x8] sm:$0xff]
      %v314 = vld [vmem:[%s273 + $0x18] sm:$0xff]
      %v315 = vld [vmem:[%s273 + $0x20] sm:$0xff]
      %v316 = vld [vmem:[%s273 + $0x30] sm:$0xff]
      %v317 = vld [vmem:[%s273 + $0x38] sm:$0xff]
      %v318 = vld [vmem:[%s273 + $0x48] sm:$0xff]
      %v319 = vld [vmem:[%s273 + $0x50] sm:$0xff]
      %v320 = vld [vmem:[%s273 + $0x60] sm:$0xff]
      %v321 = vld [vmem:[%s273 + $0x68] sm:$0xff]
      %v322 = vld [vmem:[%s273 + $0x78] sm:$0xff]
      %v323 = vld [vmem:[%s273 + $0x80] sm:$0xff]
      %v324 = vld [vmem:[%s273 + $0x90] sm:$0xff]
      %v325 = vld [vmem:[%s273 + $0x98] sm:$0xff]
      %v326 = vld [vmem:[%s273 + $0xa8] sm:$0xff]
      %v327 = vld [vmem:[%s273 + $0xb0] sm:$0xff]
      %v328 = vld [vmem:[%s273 + $0xc0] sm:$0xff]
      %v329 = vld [vmem:[%s273 + $0xc8] sm:$0xff]
      %v330 = vld [vmem:[%s273 + $0xd8] sm:$0xff]
      %v331 = vld [vmem:[%s273 + $0xe0] sm:$0xff]
      %v332 = vld [vmem:[%s273 + $0xf0] sm:$0xff]
      %v333 = vld [vmem:[%s273 + $0xf8] sm:$0xff]
      %v334 = vld [vmem:[%s273 + $0x108] sm:$0xff]
      %v335 = vld [vmem:[%s273 + $0x110] sm:$0xff]
      %v336 = vld [vmem:[%s273 + $0x120] sm:$0xff]
      %v337 = vld [vmem:[%s273 + $0x128] sm:$0xff]
      %v338 = vld [vmem:[%s273 + $0x138] sm:$0xff]
      %v339 = vld [vmem:[%s273 + $0x140] sm:$0xff]
      %v340 = vld [vmem:[%s273 + $0x150] sm:$0xff]
      %v341 = vld [vmem:[%s273 + $0x158] sm:$0xff]
      %v342 = vld [vmem:[%s273 + $0x168] sm:$0xff]
      %v343 = vld [vmem:[%s273 + $0x170] sm:$0xff]
      %v344 = vpack.c.bf16 %v312, %v312
      %v345 = vpack.c.bf16 %v313, %v313
      %v346 = vpack.c.bf16 %v314, %v314
      %v347 = vpack.c.bf16 %v315, %v315
      %v348 = vpack.c.bf16 %v316, %v316
      %v349 = vpack.c.bf16 %v317, %v317
      %v350 = vpack.c.bf16 %v318, %v318
      %v351 = vpack.c.bf16 %v319, %v319
      %v352 = vpack.c.bf16 %v320, %v320
      %v353 = vpack.c.bf16 %v321, %v321
      %v354 = vpack.c.bf16 %v322, %v322
      %v355 = vpack.c.bf16 %v323, %v323
      %v356 = vpack.c.bf16 %v324, %v324
      %v357 = vpack.c.bf16 %v325, %v325
      %v358 = vpack.c.bf16 %v326, %v326
      %v359 = vpack.c.bf16 %v327, %v327
      %v360 = vpack.c.bf16 %v328, %v328
      %v361 = vpack.c.bf16 %v329, %v329
      %v362 = vpack.c.bf16 %v330, %v330
      %v363 = vpack.c.bf16 %v331, %v331
      %v364 = vpack.c.bf16 %v332, %v332
      %v365 = vpack.c.bf16 %v333, %v333
      %v366 = vpack.c.bf16 %v334, %v334
      %v367 = vpack.c.bf16 %v335, %v335
      %v368 = vpack.c.bf16 %v336, %v336
      %v369 = vpack.c.bf16 %v337, %v337
      %v370 = vpack.c.bf16 %v338, %v338
      %v371 = vpack.c.bf16 %v339, %v339
      %v372 = vpack.c.bf16 %v340, %v340
      %v373 = vpack.c.bf16 %v341, %v341
      %v374 = vpack.c.bf16 %v342, %v342
      %v375 = vpack.c.bf16 %v343, %v343
      %v376 = vld [vmem:[%s273 + $0x1] sm:$0xff]
      %v377 = vld [vmem:[%s273 + $0x9] sm:$0xff]
      %v378 = vld [vmem:[%s273 + $0x19] sm:$0xff]
      %v379 = vld [vmem:[%s273 + $0x21] sm:$0xff]
      %v380 = vld [vmem:[%s273 + $0x31] sm:$0xff]
      %v381 = vld [vmem:[%s273 + $0x39] sm:$0xff]
      %v382 = vld [vmem:[%s273 + $0x49] sm:$0xff]
      %v383 = vld [vmem:[%s273 + $0x51] sm:$0xff]
      %v384 = vld [vmem:[%s273 + $0x61] sm:$0xff]
      %v385 = vld [vmem:[%s273 + $0x69] sm:$0xff]
      %v386 = vld [vmem:[%s273 + $0x79] sm:$0xff]
      %v387 = vld [vmem:[%s273 + $0x81] sm:$0xff]
      %v388 = vld [vmem:[%s273 + $0x91] sm:$0xff]
      %v389 = vld [vmem:[%s273 + $0x99] sm:$0xff]
      %v390 = vld [vmem:[%s273 + $0xa9] sm:$0xff]
      %v391 = vld [vmem:[%s273 + $0xb1] sm:$0xff]
      %v392 = vld [vmem:[%s273 + $0xc1] sm:$0xff]
      %v393 = vld [vmem:[%s273 + $0xc9] sm:$0xff]
      %v394 = vld [vmem:[%s273 + $0xd9] sm:$0xff]
      %v395 = vld [vmem:[%s273 + $0xe1] sm:$0xff]
      %v396 = vld [vmem:[%s273 + $0xf1] sm:$0xff]
      %v397 = vld [vmem:[%s273 + $0xf9] sm:$0xff]
      %v398 = vld [vmem:[%s273 + $0x109] sm:$0xff]
      %v399 = vld [vmem:[%s273 + $0x111] sm:$0xff]
      %v400 = vld [vmem:[%s273 + $0x121] sm:$0xff]
      %v401 = vld [vmem:[%s273 + $0x129] sm:$0xff]
      %v402 = vld [vmem:[%s273 + $0x139] sm:$0xff]
      %v403 = vld [vmem:[%s273 + $0x141] sm:$0xff]
      %v404 = vld [vmem:[%s273 + $0x151] sm:$0xff]
      %v405 = vld [vmem:[%s273 + $0x159] sm:$0xff]
      %v406 = vld [vmem:[%s273 + $0x169] sm:$0xff]
      %v407 = vld [vmem:[%s273 + $0x171] sm:$0xff]
      %v408 = vpack.c.bf16 %v376, %v376
      %v409 = vpack.c.bf16 %v377, %v377
      %v410 = vpack.c.bf16 %v378, %v378
      %v411 = vpack.c.bf16 %v379, %v379
      %v412 = vpack.c.bf16 %v380, %v380
      %v413 = vpack.c.bf16 %v381, %v381
      %v414 = vpack.c.bf16 %v382, %v382
      %v415 = vpack.c.bf16 %v383, %v383
      %v416 = vpack.c.bf16 %v384, %v384
      %v417 = vpack.c.bf16 %v385, %v385
      %v418 = vpack.c.bf16 %v386, %v386
      %v419 = vpack.c.bf16 %v387, %v387
      %v420 = vpack.c.bf16 %v388, %v388
      %v421 = vpack.c.bf16 %v389, %v389
      %v422 = vpack.c.bf16 %v390, %v390
      %v423 = vpack.c.bf16 %v391, %v391
      %v424 = vpack.c.bf16 %v392, %v392
      %v425 = vpack.c.bf16 %v393, %v393
      %v426 = vpack.c.bf16 %v394, %v394
      %v427 = vpack.c.bf16 %v395, %v395
      %v428 = vpack.c.bf16 %v396, %v396
      %v429 = vpack.c.bf16 %v397, %v397
      %v430 = vpack.c.bf16 %v398, %v398
      %v431 = vpack.c.bf16 %v399, %v399
      %v432 = vpack.c.bf16 %v400, %v400
      %v433 = vpack.c.bf16 %v401, %v401
      %v434 = vpack.c.bf16 %v402, %v402
      %v435 = vpack.c.bf16 %v403, %v403
      %v436 = vpack.c.bf16 %v404, %v404
      %v437 = vpack.c.bf16 %v405, %v405
      %v438 = vpack.c.bf16 %v406, %v406
      %v439 = vpack.c.bf16 %v407, %v407
      %v440 = vld [vmem:[%s273 + $0x2] sm:$0xff]
      %v441 = vld [vmem:[%s273 + $0xa] sm:$0xff]
      %v442 = vld [vmem:[%s273 + $0x1a] sm:$0xff]
      %v443 = vld [vmem:[%s273 + $0x22] sm:$0xff]
      %v444 = vld [vmem:[%s273 + $0x32] sm:$0xff]
      %v445 = vld [vmem:[%s273 + $0x3a] sm:$0xff]
      %v446 = vld [vmem:[%s273 + $0x4a] sm:$0xff]
      %v447 = vld [vmem:[%s273 + $0x52] sm:$0xff]
      %v448 = vld [vmem:[%s273 + $0x62] sm:$0xff]
      %v449 = vld [vmem:[%s273 + $0x6a] sm:$0xff]
      %v450 = vld [vmem:[%s273 + $0x7a] sm:$0xff]
      %v451 = vld [vmem:[%s273 + $0x82] sm:$0xff]
      %v452 = vld [vmem:[%s273 + $0x92] sm:$0xff]
      %v453 = vld [vmem:[%s273 + $0x9a] sm:$0xff]
      %v454 = vld [vmem:[%s273 + $0xaa] sm:$0xff]
      %v455 = vld [vmem:[%s273 + $0xb2] sm:$0xff]
      %v456 = vld [vmem:[%s273 + $0xc2] sm:$0xff]
      %v457 = vld [vmem:[%s273 + $0xca] sm:$0xff]
      %v458 = vld [vmem:[%s273 + $0xda] sm:$0xff]
      %v459 = vld [vmem:[%s273 + $0xe2] sm:$0xff]
      %v460 = vld [vmem:[%s273 + $0xf2] sm:$0xff]
      %v461 = vld [vmem:[%s273 + $0xfa] sm:$0xff]
      %v462 = vld [vmem:[%s273 + $0x10a] sm:$0xff]
      %v463 = vld [vmem:[%s273 + $0x112] sm:$0xff]
      %v464 = vld [vmem:[%s273 + $0x122] sm:$0xff]
      %v465 = vld [vmem:[%s273 + $0x12a] sm:$0xff]
      %v466 = vld [vmem:[%s273 + $0x13a] sm:$0xff]
      %v467 = vld [vmem:[%s273 + $0x142] sm:$0xff]
      %v468 = vld [vmem:[%s273 + $0x152] sm:$0xff]
      %v469 = vld [vmem:[%s273 + $0x15a] sm:$0xff]
      %v470 = vld [vmem:[%s273 + $0x16a] sm:$0xff]
      %v471 = vld [vmem:[%s273 + $0x172] sm:$0xff]
      %v472 = vpack.c.bf16 %v440, %v440
      %v473 = vpack.c.bf16 %v441, %v441
      %v474 = vpack.c.bf16 %v442, %v442
      %v475 = vpack.c.bf16 %v443, %v443
      %v476 = vpack.c.bf16 %v444, %v444
      %v477 = vpack.c.bf16 %v445, %v445
      %v478 = vpack.c.bf16 %v446, %v446
      %v479 = vpack.c.bf16 %v447, %v447
      %v480 = vpack.c.bf16 %v448, %v448
      %v481 = vpack.c.bf16 %v449, %v449
      %v482 = vpack.c.bf16 %v450, %v450
      %v483 = vpack.c.bf16 %v451, %v451
      %v484 = vpack.c.bf16 %v452, %v452
      %v485 = vpack.c.bf16 %v453, %v453
      %v486 = vpack.c.bf16 %v454, %v454
      %v487 = vpack.c.bf16 %v455, %v455
      %v488 = vpack.c.bf16 %v456, %v456
      %v489 = vpack.c.bf16 %v457, %v457
      %v490 = vpack.c.bf16 %v458, %v458
      %v491 = vpack.c.bf16 %v459, %v459
      %v492 = vpack.c.bf16 %v460, %v460
      %v493 = vpack.c.bf16 %v461, %v461
      %v494 = vpack.c.bf16 %v462, %v462
      %v495 = vpack.c.bf16 %v463, %v463
      %v496 = vpack.c.bf16 %v464, %v464
      %v497 = vpack.c.bf16 %v465, %v465
      %v498 = vpack.c.bf16 %v466, %v466
      %v499 = vpack.c.bf16 %v467, %v467
      %v500 = vpack.c.bf16 %v468, %v468
      %v501 = vpack.c.bf16 %v469, %v469
      %v502 = vpack.c.bf16 %v470, %v470
      %v503 = vpack.c.bf16 %v471, %v471
      %v504 = vld [vmem:[%s279] sm:$0xff]
      %v505 = vld [vmem:[%s279 + $0x8] sm:$0xff]
      %v506 = vld [vmem:[%s279 + $0x18] sm:$0xff]
      %v507 = vld [vmem:[%s279 + $0x20] sm:$0xff]
      %v508 = vld [vmem:[%s279 + $0x30] sm:$0xff]
      %v509 = vld [vmem:[%s279 + $0x38] sm:$0xff]
      %v510 = vld [vmem:[%s279 + $0x48] sm:$0xff]
      %v511 = vld [vmem:[%s279 + $0x50] sm:$0xff]
      %v512 = vld [vmem:[%s279 + $0x60] sm:$0xff]
      %v513 = vld [vmem:[%s279 + $0x68] sm:$0xff]
      %v514 = vld [vmem:[%s279 + $0x78] sm:$0xff]
      %v515 = vld [vmem:[%s279 + $0x80] sm:$0xff]
      %v516 = vld [vmem:[%s279 + $0x90] sm:$0xff]
      %v517 = vld [vmem:[%s279 + $0x98] sm:$0xff]
      %v518 = vld [vmem:[%s279 + $0xa8] sm:$0xff]
      %v519 = vld [vmem:[%s279 + $0xb0] sm:$0xff]
      %v520 = vld [vmem:[%s279 + $0xc0] sm:$0xff]
      %v521 = vld [vmem:[%s279 + $0xc8] sm:$0xff]
      %v522 = vld [vmem:[%s279 + $0xd8] sm:$0xff]
      %v523 = vld [vmem:[%s279 + $0xe0] sm:$0xff]
      %v524 = vld [vmem:[%s279 + $0xf0] sm:$0xff]
      %v525 = vld [vmem:[%s279 + $0xf8] sm:$0xff]
      %v526 = vld [vmem:[%s279 + $0x108] sm:$0xff]
      %v527 = vld [vmem:[%s279 + $0x110] sm:$0xff]
      %v528 = vld [vmem:[%s279 + $0x120] sm:$0xff]
      %v529 = vld [vmem:[%s279 + $0x128] sm:$0xff]
      %v530 = vld [vmem:[%s279 + $0x138] sm:$0xff]
      %v531 = vld [vmem:[%s279 + $0x140] sm:$0xff]
      %v532 = vld [vmem:[%s279 + $0x150] sm:$0xff]
      %v533 = vld [vmem:[%s279 + $0x158] sm:$0xff]
      %v534 = vld [vmem:[%s279 + $0x168] sm:$0xff]
      %v535 = vld [vmem:[%s279 + $0x170] sm:$0xff]
      %v536 = vpack.c.bf16 %v504, %v504
      %v537 = vpack.c.bf16 %v505, %v505
      %v538 = vpack.c.bf16 %v506, %v506
      %v539 = vpack.c.bf16 %v507, %v507
      %v540 = vpack.c.bf16 %v508, %v508
      %v541 = vpack.c.bf16 %v509, %v509
      %v542 = vpack.c.bf16 %v510, %v510
      %v543 = vpack.c.bf16 %v511, %v511
      %v544 = vpack.c.bf16 %v512, %v512
      %v545 = vpack.c.bf16 %v513, %v513
      %v546 = vpack.c.bf16 %v514, %v514
      %v547 = vpack.c.bf16 %v515, %v515
      %v548 = vpack.c.bf16 %v516, %v516
      %v549 = vpack.c.bf16 %v517, %v517
      %v550 = vpack.c.bf16 %v518, %v518
      %v551 = vpack.c.bf16 %v519, %v519
      %v552 = vpack.c.bf16 %v520, %v520
      %v553 = vpack.c.bf16 %v521, %v521
      %v554 = vpack.c.bf16 %v522, %v522
      %v555 = vpack.c.bf16 %v523, %v523
      %v556 = vpack.c.bf16 %v524, %v524
      %v557 = vpack.c.bf16 %v525, %v525
      %v558 = vpack.c.bf16 %v526, %v526
      %v559 = vpack.c.bf16 %v527, %v527
      %v560 = vpack.c.bf16 %v528, %v528
      %v561 = vpack.c.bf16 %v529, %v529
      %v562 = vpack.c.bf16 %v530, %v530
      %v563 = vpack.c.bf16 %v531, %v531
      %v564 = vpack.c.bf16 %v532, %v532
      %v565 = vpack.c.bf16 %v533, %v533
      %v566 = vpack.c.bf16 %v534, %v534
      %v567 = vpack.c.bf16 %v535, %v535
      %v568 = vpack.c.bf16 %v280, %v280
      %v569 = vpack.c.bf16 %v281, %v281
      %v570 = vpack.c.bf16 %v282, %v282
      %v571 = vpack.c.bf16 %v283, %v283
      %v572 = vpack.c.bf16 %v284, %v284
      %v573 = vpack.c.bf16 %v285, %v285
      %v574 = vpack.c.bf16 %v286, %v286
      %v575 = vpack.c.bf16 %v287, %v287
      %v576 = vpack.c.bf16 %v288, %v288
      %v577 = vpack.c.bf16 %v289, %v289
      %v578 = vpack.c.bf16 %v290, %v290
      %v579 = vpack.c.bf16 %v291, %v291
      %v580 = vpack.c.bf16 %v292, %v292
      %v581 = vpack.c.bf16 %v293, %v293
      %v582 = vpack.c.bf16 %v294, %v294
      %v583 = vpack.c.bf16 %v295, %v295
      %v584 = vpack.c.bf16 %v296, %v296
      %v585 = vpack.c.bf16 %v297, %v297
      %v586 = vpack.c.bf16 %v298, %v298
      %v587 = vpack.c.bf16 %v299, %v299
      %v588 = vpack.c.bf16 %v300, %v300
      %v589 = vpack.c.bf16 %v301, %v301
      %v590 = vpack.c.bf16 %v302, %v302
      %v591 = vpack.c.bf16 %v303, %v303
      %v592 = vpack.c.bf16 %v304, %v304
      %v593 = vpack.c.bf16 %v305, %v305
      %v594 = vpack.c.bf16 %v306, %v306
      %v595 = vpack.c.bf16 %v307, %v307
      %v596 = vpack.c.bf16 %v308, %v308
      %v597 = vpack.c.bf16 %v309, %v309
      %v598 = vpack.c.bf16 %v310, %v310
      %v599 = vpack.c.bf16 %v311, %v311
      %v600 = vld [vmem:[%s279 + $0x2] sm:$0xff]
      %v601 = vld [vmem:[%s279 + $0xa] sm:$0xff]
      %v602 = vld [vmem:[%s279 + $0x1a] sm:$0xff]
      %v603 = vld [vmem:[%s279 + $0x22] sm:$0xff]
      %v604 = vld [vmem:[%s279 + $0x32] sm:$0xff]
      %v605 = vld [vmem:[%s279 + $0x3a] sm:$0xff]
      %v606 = vld [vmem:[%s279 + $0x4a] sm:$0xff]
      %v607 = vld [vmem:[%s279 + $0x52] sm:$0xff]
      %v608 = vld [vmem:[%s279 + $0x62] sm:$0xff]
      %v609 = vld [vmem:[%s279 + $0x6a] sm:$0xff]
      %v610 = vld [vmem:[%s279 + $0x7a] sm:$0xff]
      %v611 = vld [vmem:[%s279 + $0x82] sm:$0xff]
      %v612 = vld [vmem:[%s279 + $0x92] sm:$0xff]
      %v613 = vld [vmem:[%s279 + $0x9a] sm:$0xff]
      %v614 = vld [vmem:[%s279 + $0xaa] sm:$0xff]
      %v615 = vld [vmem:[%s279 + $0xb2] sm:$0xff]
      %v616 = vld [vmem:[%s279 + $0xc2] sm:$0xff]
      %v617 = vld [vmem:[%s279 + $0xca] sm:$0xff]
      %v618 = vld [vmem:[%s279 + $0xda] sm:$0xff]
      %v619 = vld [vmem:[%s279 + $0xe2] sm:$0xff]
      %v620 = vld [vmem:[%s279 + $0xf2] sm:$0xff]
      %v621 = vld [vmem:[%s279 + $0xfa] sm:$0xff]
      %v622 = vld [vmem:[%s279 + $0x10a] sm:$0xff]
      %v623 = vld [vmem:[%s279 + $0x112] sm:$0xff]
      %v624 = vld [vmem:[%s279 + $0x122] sm:$0xff]
      %v625 = vld [vmem:[%s279 + $0x12a] sm:$0xff]
      %v626 = vld [vmem:[%s279 + $0x13a] sm:$0xff]
      %v627 = vld [vmem:[%s279 + $0x142] sm:$0xff]
      %v628 = vld [vmem:[%s279 + $0x152] sm:$0xff]
      %v629 = vld [vmem:[%s279 + $0x15a] sm:$0xff]
      %v630 = vld [vmem:[%s279 + $0x16a] sm:$0xff]
      %v631 = vld [vmem:[%s279 + $0x172] sm:$0xff]
      %v632 = vpack.c.bf16 %v600, %v600
      %v633 = vpack.c.bf16 %v601, %v601
      %v634 = vpack.c.bf16 %v602, %v602
      %v635 = vpack.c.bf16 %v603, %v603
      %v636 = vpack.c.bf16 %v604, %v604
      %v637 = vpack.c.bf16 %v605, %v605
      %v638 = vpack.c.bf16 %v606, %v606
      %v639 = vpack.c.bf16 %v607, %v607
      %v640 = vpack.c.bf16 %v608, %v608
      %v641 = vpack.c.bf16 %v609, %v609
      %v642 = vpack.c.bf16 %v610, %v610
      %v643 = vpack.c.bf16 %v611, %v611
      %v644 = vpack.c.bf16 %v612, %v612
      %v645 = vpack.c.bf16 %v613, %v613
      %v646 = vpack.c.bf16 %v614, %v614
      %v647 = vpack.c.bf16 %v615, %v615
      %v648 = vpack.c.bf16 %v616, %v616
      %v649 = vpack.c.bf16 %v617, %v617
      %v650 = vpack.c.bf16 %v618, %v618
      %v651 = vpack.c.bf16 %v619, %v619
      %v652 = vpack.c.bf16 %v620, %v620
      %v653 = vpack.c.bf16 %v621, %v621
      %v654 = vpack.c.bf16 %v622, %v622
      %v655 = vpack.c.bf16 %v623, %v623
      %v656 = vpack.c.bf16 %v624, %v624
      %v657 = vpack.c.bf16 %v625, %v625
      %v658 = vpack.c.bf16 %v626, %v626
      %v659 = vpack.c.bf16 %v627, %v627
      %v660 = vpack.c.bf16 %v628, %v628
      %v661 = vpack.c.bf16 %v629, %v629
      %v662 = vpack.c.bf16 %v630, %v630
      %v663 = vpack.c.bf16 %v631, %v631
      %s664 = scalar_lea.vmem %s273, 48
      %v665 = vld [vmem:[%s664] sm:$0xff]
      %v666 = vld [vmem:[%s664 + $0x8] sm:$0xff]
      %v667 = vld [vmem:[%s664 + $0x18] sm:$0xff]
      %v668 = vld [vmem:[%s664 + $0x20] sm:$0xff]
      %v669 = vld [vmem:[%s664 + $0x30] sm:$0xff]
      %v670 = vld [vmem:[%s664 + $0x38] sm:$0xff]
      %v671 = vld [vmem:[%s664 + $0x48] sm:$0xff]
      %v672 = vld [vmem:[%s664 + $0x50] sm:$0xff]
      %v673 = vld [vmem:[%s664 + $0x60] sm:$0xff]
      %v674 = vld [vmem:[%s664 + $0x68] sm:$0xff]
      %v675 = vld [vmem:[%s664 + $0x78] sm:$0xff]
      %v676 = vld [vmem:[%s664 + $0x80] sm:$0xff]
      %v677 = vld [vmem:[%s664 + $0x90] sm:$0xff]
      %v678 = vld [vmem:[%s664 + $0x98] sm:$0xff]
      %v679 = vld [vmem:[%s664 + $0xa8] sm:$0xff]
      %v680 = vld [vmem:[%s664 + $0xb0] sm:$0xff]
      %v681 = vld [vmem:[%s664 + $0xc0] sm:$0xff]
      %v682 = vld [vmem:[%s664 + $0xc8] sm:$0xff]
      %v683 = vld [vmem:[%s664 + $0xd8] sm:$0xff]
      %v684 = vld [vmem:[%s664 + $0xe0] sm:$0xff]
      %v685 = vld [vmem:[%s664 + $0xf0] sm:$0xff]
      %v686 = vld [vmem:[%s664 + $0xf8] sm:$0xff]
      %v687 = vld [vmem:[%s664 + $0x108] sm:$0xff]
      %v688 = vld [vmem:[%s664 + $0x110] sm:$0xff]
      %v689 = vld [vmem:[%s664 + $0x120] sm:$0xff]
      %v690 = vld [vmem:[%s664 + $0x128] sm:$0xff]
      %v691 = vld [vmem:[%s664 + $0x138] sm:$0xff]
      %v692 = vld [vmem:[%s664 + $0x140] sm:$0xff]
      %v693 = vld [vmem:[%s664 + $0x150] sm:$0xff]
      %v694 = vld [vmem:[%s664 + $0x158] sm:$0xff]
      %v695 = vld [vmem:[%s664 + $0x168] sm:$0xff]
      %v696 = vld [vmem:[%s664 + $0x170] sm:$0xff]
      %v697 = vpack.c.bf16 %v665, %v665
      %v698 = vpack.c.bf16 %v666, %v666
      %v699 = vpack.c.bf16 %v667, %v667
      %v700 = vpack.c.bf16 %v668, %v668
      %v701 = vpack.c.bf16 %v669, %v669
      %v702 = vpack.c.bf16 %v670, %v670
      %v703 = vpack.c.bf16 %v671, %v671
      %v704 = vpack.c.bf16 %v672, %v672
      %v705 = vpack.c.bf16 %v673, %v673
      %v706 = vpack.c.bf16 %v674, %v674
      %v707 = vpack.c.bf16 %v675, %v675
      %v708 = vpack.c.bf16 %v676, %v676
      %v709 = vpack.c.bf16 %v677, %v677
      %v710 = vpack.c.bf16 %v678, %v678
      %v711 = vpack.c.bf16 %v679, %v679
      %v712 = vpack.c.bf16 %v680, %v680
      %v713 = vpack.c.bf16 %v681, %v681
      %v714 = vpack.c.bf16 %v682, %v682
      %v715 = vpack.c.bf16 %v683, %v683
      %v716 = vpack.c.bf16 %v684, %v684
      %v717 = vpack.c.bf16 %v685, %v685
      %v718 = vpack.c.bf16 %v686, %v686
      %v719 = vpack.c.bf16 %v687, %v687
      %v720 = vpack.c.bf16 %v688, %v688
      %v721 = vpack.c.bf16 %v689, %v689
      %v722 = vpack.c.bf16 %v690, %v690
      %v723 = vpack.c.bf16 %v691, %v691
      %v724 = vpack.c.bf16 %v692, %v692
      %v725 = vpack.c.bf16 %v693, %v693
      %v726 = vpack.c.bf16 %v694, %v694
      %v727 = vpack.c.bf16 %v695, %v695
      %v728 = vpack.c.bf16 %v696, %v696
      %v729 = vld [vmem:[%s664 + $0x1] sm:$0xff]
      %v730 = vld [vmem:[%s664 + $0x9] sm:$0xff]
      %v731 = vld [vmem:[%s664 + $0x19] sm:$0xff]
      %v732 = vld [vmem:[%s664 + $0x21] sm:$0xff]
      %v733 = vld [vmem:[%s664 + $0x31] sm:$0xff]
      %v734 = vld [vmem:[%s664 + $0x39] sm:$0xff]
      %v735 = vld [vmem:[%s664 + $0x49] sm:$0xff]
      %v736 = vld [vmem:[%s664 + $0x51] sm:$0xff]
      %v737 = vld [vmem:[%s664 + $0x61] sm:$0xff]
      %v738 = vld [vmem:[%s664 + $0x69] sm:$0xff]
      %v739 = vld [vmem:[%s664 + $0x79] sm:$0xff]
      %v740 = vld [vmem:[%s664 + $0x81] sm:$0xff]
      %v741 = vld [vmem:[%s664 + $0x91] sm:$0xff]
      %v742 = vld [vmem:[%s664 + $0x99] sm:$0xff]
      %v743 = vld [vmem:[%s664 + $0xa9] sm:$0xff]
      %v744 = vld [vmem:[%s664 + $0xb1] sm:$0xff]
      %v745 = vld [vmem:[%s664 + $0xc1] sm:$0xff]
      %v746 = vld [vmem:[%s664 + $0xc9] sm:$0xff]
      %v747 = vld [vmem:[%s664 + $0xd9] sm:$0xff]
      %v748 = vld [vmem:[%s664 + $0xe1] sm:$0xff]
      %v749 = vld [vmem:[%s664 + $0xf1] sm:$0xff]
      %v750 = vld [vmem:[%s664 + $0xf9] sm:$0xff]
      %v751 = vld [vmem:[%s664 + $0x109] sm:$0xff]
      %v752 = vld [vmem:[%s664 + $0x111] sm:$0xff]
      %v753 = vld [vmem:[%s664 + $0x121] sm:$0xff]
      %v754 = vld [vmem:[%s664 + $0x129] sm:$0xff]
      %v755 = vld [vmem:[%s664 + $0x139] sm:$0xff]
      %v756 = vld [vmem:[%s664 + $0x141] sm:$0xff]
      %v757 = vld [vmem:[%s664 + $0x151] sm:$0xff]
      %v758 = vld [vmem:[%s664 + $0x159] sm:$0xff]
      %v759 = vld [vmem:[%s664 + $0x169] sm:$0xff]
      %v760 = vld [vmem:[%s664 + $0x171] sm:$0xff]
      %v761 = vpack.c.bf16 %v729, %v729
      %v762 = vpack.c.bf16 %v730, %v730
      %v763 = vpack.c.bf16 %v731, %v731
      %v764 = vpack.c.bf16 %v732, %v732
      %v765 = vpack.c.bf16 %v733, %v733
      %v766 = vpack.c.bf16 %v734, %v734
      %v767 = vpack.c.bf16 %v735, %v735
      %v768 = vpack.c.bf16 %v736, %v736
      %v769 = vpack.c.bf16 %v737, %v737
      %v770 = vpack.c.bf16 %v738, %v738
      %v771 = vpack.c.bf16 %v739, %v739
      %v772 = vpack.c.bf16 %v740, %v740
      %v773 = vpack.c.bf16 %v741, %v741
      %v774 = vpack.c.bf16 %v742, %v742
      %v775 = vpack.c.bf16 %v743, %v743
      %v776 = vpack.c.bf16 %v744, %v744
      %v777 = vpack.c.bf16 %v745, %v745
      %v778 = vpack.c.bf16 %v746, %v746
      %v779 = vpack.c.bf16 %v747, %v747
      %v780 = vpack.c.bf16 %v748, %v748
      %v781 = vpack.c.bf16 %v749, %v749
      %v782 = vpack.c.bf16 %v750, %v750
      %v783 = vpack.c.bf16 %v751, %v751
      %v784 = vpack.c.bf16 %v752, %v752
      %v785 = vpack.c.bf16 %v753, %v753
      %v786 = vpack.c.bf16 %v754, %v754
      %v787 = vpack.c.bf16 %v755, %v755
      %v788 = vpack.c.bf16 %v756, %v756
      %v789 = vpack.c.bf16 %v757, %v757
      %v790 = vpack.c.bf16 %v758, %v758
      %v791 = vpack.c.bf16 %v759, %v759
      %v792 = vpack.c.bf16 %v760, %v760
      %v793 = vld [vmem:[%s664 + $0x2] sm:$0xff]
      %v794 = vld [vmem:[%s664 + $0xa] sm:$0xff]
      %v795 = vld [vmem:[%s664 + $0x1a] sm:$0xff]
      %v796 = vld [vmem:[%s664 + $0x22] sm:$0xff]
      %v797 = vld [vmem:[%s664 + $0x32] sm:$0xff]
      %v798 = vld [vmem:[%s664 + $0x3a] sm:$0xff]
      %v799 = vld [vmem:[%s664 + $0x4a] sm:$0xff]
      %v800 = vld [vmem:[%s664 + $0x52] sm:$0xff]
      %v801 = vld [vmem:[%s664 + $0x62] sm:$0xff]
      %v802 = vld [vmem:[%s664 + $0x6a] sm:$0xff]
      %v803 = vld [vmem:[%s664 + $0x7a] sm:$0xff]
      %v804 = vld [vmem:[%s664 + $0x82] sm:$0xff]
      %v805 = vld [vmem:[%s664 + $0x92] sm:$0xff]
      %v806 = vld [vmem:[%s664 + $0x9a] sm:$0xff]
      %v807 = vld [vmem:[%s664 + $0xaa] sm:$0xff]
      %v808 = vld [vmem:[%s664 + $0xb2] sm:$0xff]
      %v809 = vld [vmem:[%s664 + $0xc2] sm:$0xff]
      %v810 = vld [vmem:[%s664 + $0xca] sm:$0xff]
      %v811 = vld [vmem:[%s664 + $0xda] sm:$0xff]
      %v812 = vld [vmem:[%s664 + $0xe2] sm:$0xff]
      %v813 = vld [vmem:[%s664 + $0xf2] sm:$0xff]
      %v814 = vld [vmem:[%s664 + $0xfa] sm:$0xff]
      %v815 = vld [vmem:[%s664 + $0x10a] sm:$0xff]
      %v816 = vld [vmem:[%s664 + $0x112] sm:$0xff]
      %v817 = vld [vmem:[%s664 + $0x122] sm:$0xff]
      %v818 = vld [vmem:[%s664 + $0x12a] sm:$0xff]
      %v819 = vld [vmem:[%s664 + $0x13a] sm:$0xff]
      %v820 = vld [vmem:[%s664 + $0x142] sm:$0xff]
      %v821 = vld [vmem:[%s664 + $0x152] sm:$0xff]
      %v822 = vld [vmem:[%s664 + $0x15a] sm:$0xff]
      %v823 = vld [vmem:[%s664 + $0x16a] sm:$0xff]
      %v824 = vld [vmem:[%s664 + $0x172] sm:$0xff]
      %v825 = vpack.c.bf16 %v793, %v793
      %v826 = vpack.c.bf16 %v794, %v794
      %v827 = vpack.c.bf16 %v795, %v795
      %v828 = vpack.c.bf16 %v796, %v796
      %v829 = vpack.c.bf16 %v797, %v797
      %v830 = vpack.c.bf16 %v798, %v798
      %v831 = vpack.c.bf16 %v799, %v799
      %v832 = vpack.c.bf16 %v800, %v800
      %v833 = vpack.c.bf16 %v801, %v801
      %v834 = vpack.c.bf16 %v802, %v802
      %v835 = vpack.c.bf16 %v803, %v803
      %v836 = vpack.c.bf16 %v804, %v804
      %v837 = vpack.c.bf16 %v805, %v805
      %v838 = vpack.c.bf16 %v806, %v806
      %v839 = vpack.c.bf16 %v807, %v807
      %v840 = vpack.c.bf16 %v808, %v808
      %v841 = vpack.c.bf16 %v809, %v809
      %v842 = vpack.c.bf16 %v810, %v810
      %v843 = vpack.c.bf16 %v811, %v811
      %v844 = vpack.c.bf16 %v812, %v812
      %v845 = vpack.c.bf16 %v813, %v813
      %v846 = vpack.c.bf16 %v814, %v814
      %v847 = vpack.c.bf16 %v815, %v815
      %v848 = vpack.c.bf16 %v816, %v816
      %v849 = vpack.c.bf16 %v817, %v817
      %v850 = vpack.c.bf16 %v818, %v818
      %v851 = vpack.c.bf16 %v819, %v819
      %v852 = vpack.c.bf16 %v820, %v820
      %v853 = vpack.c.bf16 %v821, %v821
      %v854 = vpack.c.bf16 %v822, %v822
      %v855 = vpack.c.bf16 %v823, %v823
      %v856 = vpack.c.bf16 %v824, %v824
      %v889 = vunpack.c.l.b16 %v344
      %v890 = vunpack.c.l.b16 %v345
      %v891 = vunpack.c.l.b16 %v346
      %v892 = vunpack.c.l.b16 %v347
      %v893 = vunpack.c.l.b16 %v348
      %v894 = vunpack.c.l.b16 %v349
      %v895 = vunpack.c.l.b16 %v350
      %v896 = vunpack.c.l.b16 %v351
      %v897 = vunpack.c.l.b16 %v352
      %v898 = vunpack.c.l.b16 %v353
      %v899 = vunpack.c.l.b16 %v354
      %v900 = vunpack.c.l.b16 %v355
      %v901 = vunpack.c.l.b16 %v356
      %v902 = vunpack.c.l.b16 %v357
      %v903 = vunpack.c.l.b16 %v358
      %v904 = vunpack.c.l.b16 %v359
      %v905 = vunpack.c.l.b16 %v360
      %v906 = vunpack.c.l.b16 %v361
      %v907 = vunpack.c.l.b16 %v362
      %v908 = vunpack.c.l.b16 %v363
      %v909 = vunpack.c.l.b16 %v364
      %v910 = vunpack.c.l.b16 %v365
      %v911 = vunpack.c.l.b16 %v366
      %v912 = vunpack.c.l.b16 %v367
      %v913 = vunpack.c.l.b16 %v368
      %v914 = vunpack.c.l.b16 %v369
      %v915 = vunpack.c.l.b16 %v370
      %v916 = vunpack.c.l.b16 %v371
      %v917 = vunpack.c.l.b16 %v372
      %v918 = vunpack.c.l.b16 %v373
      %v919 = vunpack.c.l.b16 %v374
      %v920 = vunpack.c.l.b16 %v375
      %v921 = vpack.c.b16 %v890, %v889
      %v922 = vpack.c.b16 %v892, %v891
      %v923 = vpack.c.b16 %v894, %v893
      %v924 = vpack.c.b16 %v896, %v895
      %v925 = vpack.c.b16 %v898, %v897
      %v926 = vpack.c.b16 %v900, %v899
      %v927 = vpack.c.b16 %v902, %v901
      %v928 = vpack.c.b16 %v904, %v903
      %v929 = vpack.c.b16 %v906, %v905
      %v930 = vpack.c.b16 %v908, %v907
      %v931 = vpack.c.b16 %v910, %v909
      %v932 = vpack.c.b16 %v912, %v911
      %v933 = vpack.c.b16 %v914, %v913
      %v934 = vpack.c.b16 %v916, %v915
      %v935 = vpack.c.b16 %v918, %v917
      %v936 = vpack.c.b16 %v920, %v919
      %v985 = vunpack.c.l.b16 %v408
      %v986 = vunpack.c.l.b16 %v409
      %v987 = vunpack.c.l.b16 %v410
      %v988 = vunpack.c.l.b16 %v411
      %v989 = vunpack.c.l.b16 %v412
      %v990 = vunpack.c.l.b16 %v413
      %v991 = vunpack.c.l.b16 %v414
      %v992 = vunpack.c.l.b16 %v415
      %v993 = vunpack.c.l.b16 %v416
      %v994 = vunpack.c.l.b16 %v417
      %v995 = vunpack.c.l.b16 %v418
      %v996 = vunpack.c.l.b16 %v419
      %v997 = vunpack.c.l.b16 %v420
      %v998 = vunpack.c.l.b16 %v421
      %v999 = vunpack.c.l.b16 %v422
      %v1000 = vunpack.c.l.b16 %v423
      %v1001 = vunpack.c.l.b16 %v424
      %v1002 = vunpack.c.l.b16 %v425
      %v1003 = vunpack.c.l.b16 %v426
      %v1004 = vunpack.c.l.b16 %v427
      %v1005 = vunpack.c.l.b16 %v428
      %v1006 = vunpack.c.l.b16 %v429
      %v1007 = vunpack.c.l.b16 %v430
      %v1008 = vunpack.c.l.b16 %v431
      %v1009 = vunpack.c.l.b16 %v432
      %v1010 = vunpack.c.l.b16 %v433
      %v1011 = vunpack.c.l.b16 %v434
      %v1012 = vunpack.c.l.b16 %v435
      %v1013 = vunpack.c.l.b16 %v436
      %v1014 = vunpack.c.l.b16 %v437
      %v1015 = vunpack.c.l.b16 %v438
      %v1016 = vunpack.c.l.b16 %v439
      %v1017 = vpack.c.b16 %v986, %v985
      %v1018 = vpack.c.b16 %v988, %v987
      %v1019 = vpack.c.b16 %v990, %v989
      %v1020 = vpack.c.b16 %v992, %v991
      %v1021 = vpack.c.b16 %v994, %v993
      %v1022 = vpack.c.b16 %v996, %v995
      %v1023 = vpack.c.b16 %v998, %v997
      %v1024 = vpack.c.b16 %v1000, %v999
      %v1025 = vpack.c.b16 %v1002, %v1001
      %v1026 = vpack.c.b16 %v1004, %v1003
      %v1027 = vpack.c.b16 %v1006, %v1005
      %v1028 = vpack.c.b16 %v1008, %v1007
      %v1029 = vpack.c.b16 %v1010, %v1009
      %v1030 = vpack.c.b16 %v1012, %v1011
      %v1031 = vpack.c.b16 %v1014, %v1013
      %v1032 = vpack.c.b16 %v1016, %v1015
      %v1081 = vunpack.c.l.b16 %v472
      %v1082 = vunpack.c.l.b16 %v473
      %v1083 = vunpack.c.l.b16 %v474
      %v1084 = vunpack.c.l.b16 %v475
      %v1085 = vunpack.c.l.b16 %v476
      %v1086 = vunpack.c.l.b16 %v477
      %v1087 = vunpack.c.l.b16 %v478
      %v1088 = vunpack.c.l.b16 %v479
      %v1089 = vunpack.c.l.b16 %v480
      %v1090 = vunpack.c.l.b16 %v481
      %v1091 = vunpack.c.l.b16 %v482
      %v1092 = vunpack.c.l.b16 %v483
      %v1093 = vunpack.c.l.b16 %v484
      %v1094 = vunpack.c.l.b16 %v485
      %v1095 = vunpack.c.l.b16 %v486
      %v1096 = vunpack.c.l.b16 %v487
      %v1097 = vunpack.c.l.b16 %v488
      %v1098 = vunpack.c.l.b16 %v489
      %v1099 = vunpack.c.l.b16 %v490
      %v1100 = vunpack.c.l.b16 %v491
      %v1101 = vunpack.c.l.b16 %v492
      %v1102 = vunpack.c.l.b16 %v493
      %v1103 = vunpack.c.l.b16 %v494
      %v1104 = vunpack.c.l.b16 %v495
      %v1105 = vunpack.c.l.b16 %v496
      %v1106 = vunpack.c.l.b16 %v497
      %v1107 = vunpack.c.l.b16 %v498
      %v1108 = vunpack.c.l.b16 %v499
      %v1109 = vunpack.c.l.b16 %v500
      %v1110 = vunpack.c.l.b16 %v501
      %v1111 = vunpack.c.l.b16 %v502
      %v1112 = vunpack.c.l.b16 %v503
      %v1113 = vpack.c.b16 %v1082, %v1081
      %v1114 = vpack.c.b16 %v1084, %v1083
      %v1115 = vpack.c.b16 %v1086, %v1085
      %v1116 = vpack.c.b16 %v1088, %v1087
      %v1117 = vpack.c.b16 %v1090, %v1089
      %v1118 = vpack.c.b16 %v1092, %v1091
      %v1119 = vpack.c.b16 %v1094, %v1093
      %v1120 = vpack.c.b16 %v1096, %v1095
      %v1121 = vpack.c.b16 %v1098, %v1097
      %v1122 = vpack.c.b16 %v1100, %v1099
      %v1123 = vpack.c.b16 %v1102, %v1101
      %v1124 = vpack.c.b16 %v1104, %v1103
      %v1125 = vpack.c.b16 %v1106, %v1105
      %v1126 = vpack.c.b16 %v1108, %v1107
      %v1127 = vpack.c.b16 %v1110, %v1109
      %v1128 = vpack.c.b16 %v1112, %v1111
      %v1177 = vunpack.c.l.b16 %v536
      %v1178 = vunpack.c.l.b16 %v537
      %v1179 = vunpack.c.l.b16 %v538
      %v1180 = vunpack.c.l.b16 %v539
      %v1181 = vunpack.c.l.b16 %v540
      %v1182 = vunpack.c.l.b16 %v541
      %v1183 = vunpack.c.l.b16 %v542
      %v1184 = vunpack.c.l.b16 %v543
      %v1185 = vunpack.c.l.b16 %v544
      %v1186 = vunpack.c.l.b16 %v545
      %v1187 = vunpack.c.l.b16 %v546
      %v1188 = vunpack.c.l.b16 %v547
      %v1189 = vunpack.c.l.b16 %v548
      %v1190 = vunpack.c.l.b16 %v549
      %v1191 = vunpack.c.l.b16 %v550
      %v1192 = vunpack.c.l.b16 %v551
      %v1193 = vunpack.c.l.b16 %v552
      %v1194 = vunpack.c.l.b16 %v553
      %v1195 = vunpack.c.l.b16 %v554
      %v1196 = vunpack.c.l.b16 %v555
      %v1197 = vunpack.c.l.b16 %v556
      %v1198 = vunpack.c.l.b16 %v557
      %v1199 = vunpack.c.l.b16 %v558
      %v1200 = vunpack.c.l.b16 %v559
      %v1201 = vunpack.c.l.b16 %v560
      %v1202 = vunpack.c.l.b16 %v561
      %v1203 = vunpack.c.l.b16 %v562
      %v1204 = vunpack.c.l.b16 %v563
      %v1205 = vunpack.c.l.b16 %v564
      %v1206 = vunpack.c.l.b16 %v565
      %v1207 = vunpack.c.l.b16 %v566
      %v1208 = vunpack.c.l.b16 %v567
      %v1209 = vpack.c.b16 %v1178, %v1177
      %v1210 = vpack.c.b16 %v1180, %v1179
      %v1211 = vpack.c.b16 %v1182, %v1181
      %v1212 = vpack.c.b16 %v1184, %v1183
      %v1213 = vpack.c.b16 %v1186, %v1185
      %v1214 = vpack.c.b16 %v1188, %v1187
      %v1215 = vpack.c.b16 %v1190, %v1189
      %v1216 = vpack.c.b16 %v1192, %v1191
      %v1217 = vpack.c.b16 %v1194, %v1193
      %v1218 = vpack.c.b16 %v1196, %v1195
      %v1219 = vpack.c.b16 %v1198, %v1197
      %v1220 = vpack.c.b16 %v1200, %v1199
      %v1221 = vpack.c.b16 %v1202, %v1201
      %v1222 = vpack.c.b16 %v1204, %v1203
      %v1223 = vpack.c.b16 %v1206, %v1205
      %v1224 = vpack.c.b16 %v1208, %v1207
      %v1273 = vunpack.c.l.b16 %v568
      %v1274 = vunpack.c.l.b16 %v569
      %v1275 = vunpack.c.l.b16 %v570
      %v1276 = vunpack.c.l.b16 %v571
      %v1277 = vunpack.c.l.b16 %v572
      %v1278 = vunpack.c.l.b16 %v573
      %v1279 = vunpack.c.l.b16 %v574
      %v1280 = vunpack.c.l.b16 %v575
      %v1281 = vunpack.c.l.b16 %v576
      %v1282 = vunpack.c.l.b16 %v577
      %v1283 = vunpack.c.l.b16 %v578
      %v1284 = vunpack.c.l.b16 %v579
      %v1285 = vunpack.c.l.b16 %v580
      %v1286 = vunpack.c.l.b16 %v581
      %v1287 = vunpack.c.l.b16 %v582
      %v1288 = vunpack.c.l.b16 %v583
      %v1289 = vunpack.c.l.b16 %v584
      %v1290 = vunpack.c.l.b16 %v585
      %v1291 = vunpack.c.l.b16 %v586
      %v1292 = vunpack.c.l.b16 %v587
      %v1293 = vunpack.c.l.b16 %v588
      %v1294 = vunpack.c.l.b16 %v589
      %v1295 = vunpack.c.l.b16 %v590
      %v1296 = vunpack.c.l.b16 %v591
      %v1297 = vunpack.c.l.b16 %v592
      %v1298 = vunpack.c.l.b16 %v593
      %v1299 = vunpack.c.l.b16 %v594
      %v1300 = vunpack.c.l.b16 %v595
      %v1301 = vunpack.c.l.b16 %v596
      %v1302 = vunpack.c.l.b16 %v597
      %v1303 = vunpack.c.l.b16 %v598
      %v1304 = vunpack.c.l.b16 %v599
      %v1305 = vpack.c.b16 %v1274, %v1273
      %v1306 = vpack.c.b16 %v1276, %v1275
      %v1307 = vpack.c.b16 %v1278, %v1277
      %v1308 = vpack.c.b16 %v1280, %v1279
      %v1309 = vpack.c.b16 %v1282, %v1281
      %v1310 = vpack.c.b16 %v1284, %v1283
      %v1311 = vpack.c.b16 %v1286, %v1285
      %v1312 = vpack.c.b16 %v1288, %v1287
      %v1313 = vpack.c.b16 %v1290, %v1289
      %v1314 = vpack.c.b16 %v1292, %v1291
      %v1315 = vpack.c.b16 %v1294, %v1293
      %v1316 = vpack.c.b16 %v1296, %v1295
      %v1317 = vpack.c.b16 %v1298, %v1297
      %v1318 = vpack.c.b16 %v1300, %v1299
      %v1319 = vpack.c.b16 %v1302, %v1301
      %v1320 = vpack.c.b16 %v1304, %v1303
      %v1369 = vunpack.c.l.b16 %v632
      %v1370 = vunpack.c.l.b16 %v633
      %v1371 = vunpack.c.l.b16 %v634
      %v1372 = vunpack.c.l.b16 %v635
      %v1373 = vunpack.c.l.b16 %v636
      %v1374 = vunpack.c.l.b16 %v637
      %v1375 = vunpack.c.l.b16 %v638
      %v1376 = vunpack.c.l.b16 %v639
      %v1377 = vunpack.c.l.b16 %v640
      %v1378 = vunpack.c.l.b16 %v641
      %v1379 = vunpack.c.l.b16 %v642
      %v1380 = vunpack.c.l.b16 %v643
      %v1381 = vunpack.c.l.b16 %v644
      %v1382 = vunpack.c.l.b16 %v645
      %v1383 = vunpack.c.l.b16 %v646
      %v1384 = vunpack.c.l.b16 %v647
      %v1385 = vunpack.c.l.b16 %v648
      %v1386 = vunpack.c.l.b16 %v649
      %v1387 = vunpack.c.l.b16 %v650
      %v1388 = vunpack.c.l.b16 %v651
      %v1389 = vunpack.c.l.b16 %v652
      %v1390 = vunpack.c.l.b16 %v653
      %v1391 = vunpack.c.l.b16 %v654
      %v1392 = vunpack.c.l.b16 %v655
      %v1393 = vunpack.c.l.b16 %v656
      %v1394 = vunpack.c.l.b16 %v657
      %v1395 = vunpack.c.l.b16 %v658
      %v1396 = vunpack.c.l.b16 %v659
      %v1397 = vunpack.c.l.b16 %v660
      %v1398 = vunpack.c.l.b16 %v661
      %v1399 = vunpack.c.l.b16 %v662
      %v1400 = vunpack.c.l.b16 %v663
      %v1401 = vpack.c.b16 %v1370, %v1369
      %v1402 = vpack.c.b16 %v1372, %v1371
      %v1403 = vpack.c.b16 %v1374, %v1373
      %v1404 = vpack.c.b16 %v1376, %v1375
      %v1405 = vpack.c.b16 %v1378, %v1377
      %v1406 = vpack.c.b16 %v1380, %v1379
      %v1407 = vpack.c.b16 %v1382, %v1381
      %v1408 = vpack.c.b16 %v1384, %v1383
      %v1409 = vpack.c.b16 %v1386, %v1385
      %v1410 = vpack.c.b16 %v1388, %v1387
      %v1411 = vpack.c.b16 %v1390, %v1389
      %v1412 = vpack.c.b16 %v1392, %v1391
      %v1413 = vpack.c.b16 %v1394, %v1393
      %v1414 = vpack.c.b16 %v1396, %v1395
      %v1415 = vpack.c.b16 %v1398, %v1397
      %v1416 = vpack.c.b16 %v1400, %v1399
      %v1465 = vunpack.c.l.b16 %v697
      %v1466 = vunpack.c.l.b16 %v698
      %v1467 = vunpack.c.l.b16 %v699
      %v1468 = vunpack.c.l.b16 %v700
      %v1469 = vunpack.c.l.b16 %v701
      %v1470 = vunpack.c.l.b16 %v702
      %v1471 = vunpack.c.l.b16 %v703
      %v1472 = vunpack.c.l.b16 %v704
      %v1473 = vunpack.c.l.b16 %v705
      %v1474 = vunpack.c.l.b16 %v706
      %v1475 = vunpack.c.l.b16 %v707
      %v1476 = vunpack.c.l.b16 %v708
      %v1477 = vunpack.c.l.b16 %v709
      %v1478 = vunpack.c.l.b16 %v710
      %v1479 = vunpack.c.l.b16 %v711
      %v1480 = vunpack.c.l.b16 %v712
      %v1481 = vunpack.c.l.b16 %v713
      %v1482 = vunpack.c.l.b16 %v714
      %v1483 = vunpack.c.l.b16 %v715
      %v1484 = vunpack.c.l.b16 %v716
      %v1485 = vunpack.c.l.b16 %v717
      %v1486 = vunpack.c.l.b16 %v718
      %v1487 = vunpack.c.l.b16 %v719
      %v1488 = vunpack.c.l.b16 %v720
      %v1489 = vunpack.c.l.b16 %v721
      %v1490 = vunpack.c.l.b16 %v722
      %v1491 = vunpack.c.l.b16 %v723
      %v1492 = vunpack.c.l.b16 %v724
      %v1493 = vunpack.c.l.b16 %v725
      %v1494 = vunpack.c.l.b16 %v726
      %v1495 = vunpack.c.l.b16 %v727
      %v1496 = vunpack.c.l.b16 %v728
      %v1497 = vpack.c.b16 %v1466, %v1465
      %v1498 = vpack.c.b16 %v1468, %v1467
      %v1499 = vpack.c.b16 %v1470, %v1469
      %v1500 = vpack.c.b16 %v1472, %v1471
      %v1501 = vpack.c.b16 %v1474, %v1473
      %v1502 = vpack.c.b16 %v1476, %v1475
      %v1503 = vpack.c.b16 %v1478, %v1477
      %v1504 = vpack.c.b16 %v1480, %v1479
      %v1505 = vpack.c.b16 %v1482, %v1481
      %v1506 = vpack.c.b16 %v1484, %v1483
      %v1507 = vpack.c.b16 %v1486, %v1485
      %v1508 = vpack.c.b16 %v1488, %v1487
      %v1509 = vpack.c.b16 %v1490, %v1489
      %v1510 = vpack.c.b16 %v1492, %v1491
      %v1511 = vpack.c.b16 %v1494, %v1493
      %v1512 = vpack.c.b16 %v1496, %v1495
      %v1561 = vunpack.c.l.b16 %v761
      %v1562 = vunpack.c.l.b16 %v762
      %v1563 = vunpack.c.l.b16 %v763
      %v1564 = vunpack.c.l.b16 %v764
      %v1565 = vunpack.c.l.b16 %v765
      %v1566 = vunpack.c.l.b16 %v766
      %v1567 = vunpack.c.l.b16 %v767
      %v1568 = vunpack.c.l.b16 %v768
      %v1569 = vunpack.c.l.b16 %v769
      %v1570 = vunpack.c.l.b16 %v770
      %v1571 = vunpack.c.l.b16 %v771
      %v1572 = vunpack.c.l.b16 %v772
      %v1573 = vunpack.c.l.b16 %v773
      %v1574 = vunpack.c.l.b16 %v774
      %v1575 = vunpack.c.l.b16 %v775
      %v1576 = vunpack.c.l.b16 %v776
      %v1577 = vunpack.c.l.b16 %v777
      %v1578 = vunpack.c.l.b16 %v778
      %v1579 = vunpack.c.l.b16 %v779
      %v1580 = vunpack.c.l.b16 %v780
      %v1581 = vunpack.c.l.b16 %v781
      %v1582 = vunpack.c.l.b16 %v782
      %v1583 = vunpack.c.l.b16 %v783
      %v1584 = vunpack.c.l.b16 %v784
      %v1585 = vunpack.c.l.b16 %v785
      %v1586 = vunpack.c.l.b16 %v786
      %v1587 = vunpack.c.l.b16 %v787
      %v1588 = vunpack.c.l.b16 %v788
      %v1589 = vunpack.c.l.b16 %v789
      %v1590 = vunpack.c.l.b16 %v790
      %v1591 = vunpack.c.l.b16 %v791
      %v1592 = vunpack.c.l.b16 %v792
      %v1593 = vpack.c.b16 %v1562, %v1561
      %v1594 = vpack.c.b16 %v1564, %v1563
      %v1595 = vpack.c.b16 %v1566, %v1565
      %v1596 = vpack.c.b16 %v1568, %v1567
      %v1597 = vpack.c.b16 %v1570, %v1569
      %v1598 = vpack.c.b16 %v1572, %v1571
      %v1599 = vpack.c.b16 %v1574, %v1573
      %v1600 = vpack.c.b16 %v1576, %v1575
      %v1601 = vpack.c.b16 %v1578, %v1577
      %v1602 = vpack.c.b16 %v1580, %v1579
      %v1603 = vpack.c.b16 %v1582, %v1581
      %v1604 = vpack.c.b16 %v1584, %v1583
      %v1605 = vpack.c.b16 %v1586, %v1585
      %v1606 = vpack.c.b16 %v1588, %v1587
      %v1607 = vpack.c.b16 %v1590, %v1589
      %v1608 = vpack.c.b16 %v1592, %v1591
      %v1657 = vunpack.c.l.b16 %v825
      %v1658 = vunpack.c.l.b16 %v826
      %v1659 = vunpack.c.l.b16 %v827
      %v1660 = vunpack.c.l.b16 %v828
      %v1661 = vunpack.c.l.b16 %v829
      %v1662 = vunpack.c.l.b16 %v830
      %v1663 = vunpack.c.l.b16 %v831
      %v1664 = vunpack.c.l.b16 %v832
      %v1665 = vunpack.c.l.b16 %v833
      %v1666 = vunpack.c.l.b16 %v834
      %v1667 = vunpack.c.l.b16 %v835
      %v1668 = vunpack.c.l.b16 %v836
      %v1669 = vunpack.c.l.b16 %v837
      %v1670 = vunpack.c.l.b16 %v838
      %v1671 = vunpack.c.l.b16 %v839
      %v1672 = vunpack.c.l.b16 %v840
      %v1673 = vunpack.c.l.b16 %v841
      %v1674 = vunpack.c.l.b16 %v842
      %v1675 = vunpack.c.l.b16 %v843
      %v1676 = vunpack.c.l.b16 %v844
      %v1677 = vunpack.c.l.b16 %v845
      %v1678 = vunpack.c.l.b16 %v846
      %v1679 = vunpack.c.l.b16 %v847
      %v1680 = vunpack.c.l.b16 %v848
      %v1681 = vunpack.c.l.b16 %v849
      %v1682 = vunpack.c.l.b16 %v850
      %v1683 = vunpack.c.l.b16 %v851
      %v1684 = vunpack.c.l.b16 %v852
      %v1685 = vunpack.c.l.b16 %v853
      %v1686 = vunpack.c.l.b16 %v854
      %v1687 = vunpack.c.l.b16 %v855
      %v1688 = vunpack.c.l.b16 %v856
      %v1689 = vpack.c.b16 %v1658, %v1657
      %v1690 = vpack.c.b16 %v1660, %v1659
      %v1691 = vpack.c.b16 %v1662, %v1661
      %v1692 = vpack.c.b16 %v1664, %v1663
      %v1693 = vpack.c.b16 %v1666, %v1665
      %v1694 = vpack.c.b16 %v1668, %v1667
      %v1695 = vpack.c.b16 %v1670, %v1669
      %v1696 = vpack.c.b16 %v1672, %v1671
      %v1697 = vpack.c.b16 %v1674, %v1673
      %v1698 = vpack.c.b16 %v1676, %v1675
      %v1699 = vpack.c.b16 %v1678, %v1677
      %v1700 = vpack.c.b16 %v1680, %v1679
      %v1701 = vpack.c.b16 %v1682, %v1681
      %v1702 = vpack.c.b16 %v1684, %v1683
      %v1703 = vpack.c.b16 %v1686, %v1685
      %v1704 = vpack.c.b16 %v1688, %v1687
      %v1721 = vld [vmem:[%s1] sm:$0xf]
      %v1722 = vld [vmem:[%s1 + $0x4] sm:$0xf]
      %v1723 = vld [vmem:[%s1 + $0x8] sm:$0xf]
      %v1724 = vld [vmem:[%s1 + $0xc] sm:$0xf]
      %v1725 = vld [vmem:[%s1 + $0x10] sm:$0xf]
      %v1726 = vld [vmem:[%s1 + $0x14] sm:$0xf]
      %v1727 = vld [vmem:[%s1 + $0x18] sm:$0xf]
      %v1728 = vld [vmem:[%s1 + $0x1c] sm:$0xf]
      %v1729 = vld [vmem:[%s1 + $0x20] sm:$0xf]
      %v1730 = vld [vmem:[%s1 + $0x24] sm:$0xf]
      %v1731 = vld [vmem:[%s1 + $0x28] sm:$0xf]
      %v1732 = vld [vmem:[%s1 + $0x2c] sm:$0xf]
      %v1733 = vld [vmem:[%s1 + $0x30] sm:$0xf]
      %v1734 = vld [vmem:[%s1 + $0x34] sm:$0xf]
      %v1735 = vld [vmem:[%s1 + $0x38] sm:$0xf]
      %v1736 = vld [vmem:[%s1 + $0x3c] sm:$0xf]
      %v1737 = vld [vmem:[%s1 + $0x40] sm:$0xf]
      %v1738 = vld [vmem:[%s1 + $0x44] sm:$0xf]
      %v1739 = vld [vmem:[%s1 + $0x48] sm:$0xf]
      %v1740 = vld [vmem:[%s1 + $0x4c] sm:$0xf]
      %v1741 = vld [vmem:[%s1 + $0x50] sm:$0xf]
      %v1742 = vld [vmem:[%s1 + $0x54] sm:$0xf]
      %v1743 = vld [vmem:[%s1 + $0x58] sm:$0xf]
      %v1744 = vld [vmem:[%s1 + $0x5c] sm:$0xf]
      %v1745 = vld [vmem:[%s1 + $0x60] sm:$0xf]
      %v1746 = vld [vmem:[%s1 + $0x64] sm:$0xf]
      %v1747 = vld [vmem:[%s1 + $0x68] sm:$0xf]
      %v1748 = vld [vmem:[%s1 + $0x6c] sm:$0xf]
      %v1749 = vld [vmem:[%s1 + $0x70] sm:$0xf]
      %v1750 = vld [vmem:[%s1 + $0x74] sm:$0xf]
      %v1751 = vld [vmem:[%s1 + $0x78] sm:$0xf]
      %v1752 = vld [vmem:[%s1 + $0x7c] sm:$0xf]
      %v1753 = vld [vmem:[%s1 + $0x80] sm:$0xf]
      %v1754 = vld [vmem:[%s1 + $0x84] sm:$0xf]
      %v1755 = vld [vmem:[%s1 + $0x88] sm:$0xf]
      %v1756 = vld [vmem:[%s1 + $0x8c] sm:$0xf]
      %v1757 = vld [vmem:[%s1 + $0x90] sm:$0xf]
      %v1758 = vld [vmem:[%s1 + $0x94] sm:$0xf]
      %v1759 = vld [vmem:[%s1 + $0x98] sm:$0xf]
      %v1760 = vld [vmem:[%s1 + $0x9c] sm:$0xf]
      %v1761 = vld [vmem:[%s1 + $0xa0] sm:$0xf]
      %v1762 = vld [vmem:[%s1 + $0xa4] sm:$0xf]
      %v1763 = vld [vmem:[%s1 + $0xa8] sm:$0xf]
      %v1764 = vld [vmem:[%s1 + $0xac] sm:$0xf]
      %v1765 = vld [vmem:[%s1 + $0xb0] sm:$0xf]
      %v1766 = vld [vmem:[%s1 + $0xb4] sm:$0xf]
      %v1767 = vld [vmem:[%s1 + $0xb8] sm:$0xf]
      %v1768 = vld [vmem:[%s1 + $0xbc] sm:$0xf]
      %v1769 = vld [vmem:[%s1 + $0xc0] sm:$0xf]
      %v1770 = vld [vmem:[%s1 + $0xc4] sm:$0xf]
      %v1771 = vld [vmem:[%s1 + $0xc8] sm:$0xf]
      %v1772 = vld [vmem:[%s1 + $0xcc] sm:$0xf]
      %v1773 = vld [vmem:[%s1 + $0xd0] sm:$0xf]
      %v1774 = vld [vmem:[%s1 + $0xd4] sm:$0xf]
      %v1775 = vld [vmem:[%s1 + $0xd8] sm:$0xf]
      %v1776 = vld [vmem:[%s1 + $0xdc] sm:$0xf]
      %v1777 = vld [vmem:[%s1 + $0xe0] sm:$0xf]
      %v1778 = vld [vmem:[%s1 + $0xe4] sm:$0xf]
      %v1779 = vld [vmem:[%s1 + $0xe8] sm:$0xf]
      %v1780 = vld [vmem:[%s1 + $0xec] sm:$0xf]
      %v1781 = vld [vmem:[%s1 + $0xf0] sm:$0xf]
      %v1782 = vld [vmem:[%s1 + $0xf4] sm:$0xf]
      %v1783 = vld [vmem:[%s1 + $0xf8] sm:$0xf]
      %v1784 = vld [vmem:[%s1 + $0xfc] sm:$0xf]
      %v1785 = vld [vmem:[%s1 + $0x100] sm:$0xf]
      %v1786 = vld [vmem:[%s1 + $0x104] sm:$0xf]
      %v1787 = vld [vmem:[%s1 + $0x108] sm:$0xf]
      %v1788 = vld [vmem:[%s1 + $0x10c] sm:$0xf]
      %v1789 = vld [vmem:[%s1 + $0x110] sm:$0xf]
      %v1790 = vld [vmem:[%s1 + $0x114] sm:$0xf]
      %v1791 = vld [vmem:[%s1 + $0x118] sm:$0xf]
      %v1792 = vld [vmem:[%s1 + $0x11c] sm:$0xf]
      %v1793 = vld [vmem:[%s1 + $0x120] sm:$0xf]
      %v1794 = vld [vmem:[%s1 + $0x124] sm:$0xf]
      %v1795 = vld [vmem:[%s1 + $0x128] sm:$0xf]
      %v1796 = vld [vmem:[%s1 + $0x12c] sm:$0xf]
      %v1797 = vld [vmem:[%s1 + $0x130] sm:$0xf]
      %v1798 = vld [vmem:[%s1 + $0x134] sm:$0xf]
      %v1799 = vld [vmem:[%s1 + $0x138] sm:$0xf]
      %v1800 = vld [vmem:[%s1 + $0x13c] sm:$0xf]
      %v1801 = vld [vmem:[%s1 + $0x140] sm:$0xf]
      %v1802 = vld [vmem:[%s1 + $0x144] sm:$0xf]
      %v1803 = vld [vmem:[%s1 + $0x148] sm:$0xf]
      %v1804 = vld [vmem:[%s1 + $0x14c] sm:$0xf]
      %v1805 = vld [vmem:[%s1 + $0x150] sm:$0xf]
      %v1806 = vld [vmem:[%s1 + $0x154] sm:$0xf]
      %v1807 = vld [vmem:[%s1 + $0x158] sm:$0xf]
      %v1808 = vld [vmem:[%s1 + $0x15c] sm:$0xf]
      %v1809 = vld [vmem:[%s1 + $0x160] sm:$0xf]
      %v1810 = vld [vmem:[%s1 + $0x164] sm:$0xf]
      %v1811 = vld [vmem:[%s1 + $0x168] sm:$0xf]
      %v1812 = vld [vmem:[%s1 + $0x16c] sm:$0xf]
      %v1813 = vld [vmem:[%s1 + $0x170] sm:$0xf]
      %v1814 = vld [vmem:[%s1 + $0x174] sm:$0xf]
      %v1815 = vld [vmem:[%s1 + $0x178] sm:$0xf]
      %v1816 = vld [vmem:[%s1 + $0x17c] sm:$0xf]
      %v1817 = vld [vmem:[%s1 + $0x180] sm:$0xf]
      %v1818 = vld [vmem:[%s1 + $0x184] sm:$0xf]
      %v1819 = vld [vmem:[%s1 + $0x188] sm:$0xf]
      %v1820 = vld [vmem:[%s1 + $0x18c] sm:$0xf]
      %v1821 = vld [vmem:[%s1 + $0x190] sm:$0xf]
      %v1822 = vld [vmem:[%s1 + $0x194] sm:$0xf]
      %v1823 = vld [vmem:[%s1 + $0x198] sm:$0xf]
      %v1824 = vld [vmem:[%s1 + $0x19c] sm:$0xf]
      %v1825 = vld [vmem:[%s1 + $0x1a0] sm:$0xf]
      %v1826 = vld [vmem:[%s1 + $0x1a4] sm:$0xf]
      %v1827 = vld [vmem:[%s1 + $0x1a8] sm:$0xf]
      %v1828 = vld [vmem:[%s1 + $0x1ac] sm:$0xf]
      %v1829 = vld [vmem:[%s1 + $0x1b0] sm:$0xf]
      %v1830 = vld [vmem:[%s1 + $0x1b4] sm:$0xf]
      %v1831 = vld [vmem:[%s1 + $0x1b8] sm:$0xf]
      %v1832 = vld [vmem:[%s1 + $0x1bc] sm:$0xf]
      %v1833 = vld [vmem:[%s1 + $0x1c0] sm:$0xf]
      %v1834 = vld [vmem:[%s1 + $0x1c4] sm:$0xf]
      %v1835 = vld [vmem:[%s1 + $0x1c8] sm:$0xf]
      %v1836 = vld [vmem:[%s1 + $0x1cc] sm:$0xf]
      %v1837 = vld [vmem:[%s1 + $0x1d0] sm:$0xf]
      %v1838 = vld [vmem:[%s1 + $0x1d4] sm:$0xf]
      %v1839 = vld [vmem:[%s1 + $0x1d8] sm:$0xf]
      %v1840 = vld [vmem:[%s1 + $0x1dc] sm:$0xf]
      %v1841 = vld [vmem:[%s1 + $0x1e0] sm:$0xf]
      %v1842 = vld [vmem:[%s1 + $0x1e4] sm:$0xf]
      %v1843 = vld [vmem:[%s1 + $0x1e8] sm:$0xf]
      %v1844 = vld [vmem:[%s1 + $0x1ec] sm:$0xf]
      %v1845 = vld [vmem:[%s1 + $0x1f0] sm:$0xf]
      %v1846 = vld [vmem:[%s1 + $0x1f4] sm:$0xf]
      %v1847 = vld [vmem:[%s1 + $0x1f8] sm:$0xf]
      %v1848 = vld [vmem:[%s1 + $0x1fc] sm:$0xf]
      %v1849 = vld [vmem:[%s1 + $0x200] sm:$0xf]
      %v1850 = vld [vmem:[%s1 + $0x204] sm:$0xf]
      %v1851 = vld [vmem:[%s1 + $0x208] sm:$0xf]
      %v1852 = vld [vmem:[%s1 + $0x20c] sm:$0xf]
      %v1853 = vld [vmem:[%s1 + $0x210] sm:$0xf]
      %v1854 = vld [vmem:[%s1 + $0x214] sm:$0xf]
      %v1855 = vld [vmem:[%s1 + $0x218] sm:$0xf]
      %v1856 = vld [vmem:[%s1 + $0x21c] sm:$0xf]
      %v1857 = vld [vmem:[%s1 + $0x220] sm:$0xf]
      %v1858 = vld [vmem:[%s1 + $0x224] sm:$0xf]
      %v1859 = vld [vmem:[%s1 + $0x228] sm:$0xf]
      %v1860 = vld [vmem:[%s1 + $0x22c] sm:$0xf]
      %v1861 = vld [vmem:[%s1 + $0x230] sm:$0xf]
      %v1862 = vld [vmem:[%s1 + $0x234] sm:$0xf]
      %v1863 = vld [vmem:[%s1 + $0x238] sm:$0xf]
      %v1864 = vld [vmem:[%s1 + $0x23c] sm:$0xf]
      %v2009 = vunpack.c.l.b16 %v1721
      %v2010 = vunpack.c.l.b16 %v1722
      %v2011 = vunpack.c.l.b16 %v1723
      %v2012 = vunpack.c.l.b16 %v1724
      %v2013 = vunpack.c.l.b16 %v1725
      %v2014 = vunpack.c.l.b16 %v1726
      %v2015 = vunpack.c.l.b16 %v1727
      %v2016 = vunpack.c.l.b16 %v1728
      %v2017 = vunpack.c.l.b16 %v1729
      %v2018 = vunpack.c.l.b16 %v1730
      %v2019 = vunpack.c.l.b16 %v1731
      %v2020 = vunpack.c.l.b16 %v1732
      %v2021 = vunpack.c.l.b16 %v1733
      %v2022 = vunpack.c.l.b16 %v1734
      %v2023 = vunpack.c.l.b16 %v1735
      %v2024 = vunpack.c.l.b16 %v1736
      %v2025 = vunpack.c.l.b16 %v1737
      %v2026 = vunpack.c.l.b16 %v1738
      %v2027 = vunpack.c.l.b16 %v1739
      %v2028 = vunpack.c.l.b16 %v1740
      %v2029 = vunpack.c.l.b16 %v1741
      %v2030 = vunpack.c.l.b16 %v1742
      %v2031 = vunpack.c.l.b16 %v1743
      %v2032 = vunpack.c.l.b16 %v1744
      %v2033 = vunpack.c.l.b16 %v1745
      %v2034 = vunpack.c.l.b16 %v1746
      %v2035 = vunpack.c.l.b16 %v1747
      %v2036 = vunpack.c.l.b16 %v1748
      %v2037 = vunpack.c.l.b16 %v1749
      %v2038 = vunpack.c.l.b16 %v1750
      %v2039 = vunpack.c.l.b16 %v1751
      %v2040 = vunpack.c.l.b16 %v1752
      %v2041 = vunpack.c.l.b16 %v1753
      %v2042 = vunpack.c.l.b16 %v1754
      %v2043 = vunpack.c.l.b16 %v1755
      %v2044 = vunpack.c.l.b16 %v1756
      %v2045 = vunpack.c.l.b16 %v1757
      %v2046 = vunpack.c.l.b16 %v1758
      %v2047 = vunpack.c.l.b16 %v1759
      %v2048 = vunpack.c.l.b16 %v1760
      %v2049 = vunpack.c.l.b16 %v1761
      %v2050 = vunpack.c.l.b16 %v1762
      %v2051 = vunpack.c.l.b16 %v1763
      %v2052 = vunpack.c.l.b16 %v1764
      %v2053 = vunpack.c.l.b16 %v1765
      %v2054 = vunpack.c.l.b16 %v1766
      %v2055 = vunpack.c.l.b16 %v1767
      %v2056 = vunpack.c.l.b16 %v1768
      %v2057 = vunpack.c.l.b16 %v1769
      %v2058 = vunpack.c.l.b16 %v1770
      %v2059 = vunpack.c.l.b16 %v1771
      %v2060 = vunpack.c.l.b16 %v1772
      %v2061 = vunpack.c.l.b16 %v1773
      %v2062 = vunpack.c.l.b16 %v1774
      %v2063 = vunpack.c.l.b16 %v1775
      %v2064 = vunpack.c.l.b16 %v1776
      %v2065 = vunpack.c.l.b16 %v1777
      %v2066 = vunpack.c.l.b16 %v1778
      %v2067 = vunpack.c.l.b16 %v1779
      %v2068 = vunpack.c.l.b16 %v1780
      %v2069 = vunpack.c.l.b16 %v1781
      %v2070 = vunpack.c.l.b16 %v1782
      %v2071 = vunpack.c.l.b16 %v1783
      %v2072 = vunpack.c.l.b16 %v1784
      %v2073 = vunpack.c.l.b16 %v1785
      %v2074 = vunpack.c.l.b16 %v1786
      %v2075 = vunpack.c.l.b16 %v1787
      %v2076 = vunpack.c.l.b16 %v1788
      %v2077 = vunpack.c.l.b16 %v1789
      %v2078 = vunpack.c.l.b16 %v1790
      %v2079 = vunpack.c.l.b16 %v1791
      %v2080 = vunpack.c.l.b16 %v1792
      %v2081 = vunpack.c.l.b16 %v1793
      %v2082 = vunpack.c.l.b16 %v1794
      %v2083 = vunpack.c.l.b16 %v1795
      %v2084 = vunpack.c.l.b16 %v1796
      %v2085 = vunpack.c.l.b16 %v1797
      %v2086 = vunpack.c.l.b16 %v1798
      %v2087 = vunpack.c.l.b16 %v1799
      %v2088 = vunpack.c.l.b16 %v1800
      %v2089 = vunpack.c.l.b16 %v1801
      %v2090 = vunpack.c.l.b16 %v1802
      %v2091 = vunpack.c.l.b16 %v1803
      %v2092 = vunpack.c.l.b16 %v1804
      %v2093 = vunpack.c.l.b16 %v1805
      %v2094 = vunpack.c.l.b16 %v1806
      %v2095 = vunpack.c.l.b16 %v1807
      %v2096 = vunpack.c.l.b16 %v1808
      %v2097 = vunpack.c.l.b16 %v1809
      %v2098 = vunpack.c.l.b16 %v1810
      %v2099 = vunpack.c.l.b16 %v1811
      %v2100 = vunpack.c.l.b16 %v1812
      %v2101 = vunpack.c.l.b16 %v1813
      %v2102 = vunpack.c.l.b16 %v1814
      %v2103 = vunpack.c.l.b16 %v1815
      %v2104 = vunpack.c.l.b16 %v1816
      %v2105 = vunpack.c.l.b16 %v1817
      %v2106 = vunpack.c.l.b16 %v1818
      %v2107 = vunpack.c.l.b16 %v1819
      %v2108 = vunpack.c.l.b16 %v1820
      %v2109 = vunpack.c.l.b16 %v1821
      %v2110 = vunpack.c.l.b16 %v1822
      %v2111 = vunpack.c.l.b16 %v1823
      %v2112 = vunpack.c.l.b16 %v1824
      %v2113 = vunpack.c.l.b16 %v1825
      %v2114 = vunpack.c.l.b16 %v1826
      %v2115 = vunpack.c.l.b16 %v1827
      %v2116 = vunpack.c.l.b16 %v1828
      %v2117 = vunpack.c.l.b16 %v1829
      %v2118 = vunpack.c.l.b16 %v1830
      %v2119 = vunpack.c.l.b16 %v1831
      %v2120 = vunpack.c.l.b16 %v1832
      %v2121 = vunpack.c.l.b16 %v1833
      %v2122 = vunpack.c.l.b16 %v1834
      %v2123 = vunpack.c.l.b16 %v1835
      %v2124 = vunpack.c.l.b16 %v1836
      %v2125 = vunpack.c.l.b16 %v1837
      %v2126 = vunpack.c.l.b16 %v1838
      %v2127 = vunpack.c.l.b16 %v1839
      %v2128 = vunpack.c.l.b16 %v1840
      %v2129 = vunpack.c.l.b16 %v1841
      %v2130 = vunpack.c.l.b16 %v1842
      %v2131 = vunpack.c.l.b16 %v1843
      %v2132 = vunpack.c.l.b16 %v1844
      %v2133 = vunpack.c.l.b16 %v1845
      %v2134 = vunpack.c.l.b16 %v1846
      %v2135 = vunpack.c.l.b16 %v1847
      %v2136 = vunpack.c.l.b16 %v1848
      %v2137 = vunpack.c.l.b16 %v1849
      %v2138 = vunpack.c.l.b16 %v1850
      %v2139 = vunpack.c.l.b16 %v1851
      %v2140 = vunpack.c.l.b16 %v1852
      %v2141 = vunpack.c.l.b16 %v1853
      %v2142 = vunpack.c.l.b16 %v1854
      %v2143 = vunpack.c.l.b16 %v1855
      %v2144 = vunpack.c.l.b16 %v1856
      %v2145 = vunpack.c.l.b16 %v1857
      %v2146 = vunpack.c.l.b16 %v1858
      %v2147 = vunpack.c.l.b16 %v1859
      %v2148 = vunpack.c.l.b16 %v1860
      %v2149 = vunpack.c.l.b16 %v1861
      %v2150 = vunpack.c.l.b16 %v1862
      %v2151 = vunpack.c.l.b16 %v1863
      %v2152 = vunpack.c.l.b16 %v1864
      %v2153 = vpack.c.b16 %v2010, %v2009
      %v2154 = vpack.c.b16 %v2012, %v2011
      %v2155 = vpack.c.b16 %v2014, %v2013
      %v2156 = vpack.c.b16 %v2016, %v2015
      %v2157 = vpack.c.b16 %v2018, %v2017
      %v2158 = vpack.c.b16 %v2020, %v2019
      %v2159 = vpack.c.b16 %v2022, %v2021
      %v2160 = vpack.c.b16 %v2024, %v2023
      %v2161 = vpack.c.b16 %v2026, %v2025
      %v2162 = vpack.c.b16 %v2028, %v2027
      %v2163 = vpack.c.b16 %v2030, %v2029
      %v2164 = vpack.c.b16 %v2032, %v2031
      %v2165 = vpack.c.b16 %v2034, %v2033
      %v2166 = vpack.c.b16 %v2036, %v2035
      %v2167 = vpack.c.b16 %v2038, %v2037
      %v2168 = vpack.c.b16 %v2040, %v2039
      %v2169 = vpack.c.b16 %v2042, %v2041
      %v2170 = vpack.c.b16 %v2044, %v2043
      %v2171 = vpack.c.b16 %v2046, %v2045
      %v2172 = vpack.c.b16 %v2048, %v2047
      %v2173 = vpack.c.b16 %v2050, %v2049
      %v2174 = vpack.c.b16 %v2052, %v2051
      %v2175 = vpack.c.b16 %v2054, %v2053
      %v2176 = vpack.c.b16 %v2056, %v2055
      %v2177 = vpack.c.b16 %v2058, %v2057
      %v2178 = vpack.c.b16 %v2060, %v2059
      %v2179 = vpack.c.b16 %v2062, %v2061
      %v2180 = vpack.c.b16 %v2064, %v2063
      %v2181 = vpack.c.b16 %v2066, %v2065
      %v2182 = vpack.c.b16 %v2068, %v2067
      %v2183 = vpack.c.b16 %v2070, %v2069
      %v2184 = vpack.c.b16 %v2072, %v2071
      %v2185 = vpack.c.b16 %v2074, %v2073
      %v2186 = vpack.c.b16 %v2076, %v2075
      %v2187 = vpack.c.b16 %v2078, %v2077
      %v2188 = vpack.c.b16 %v2080, %v2079
      %v2189 = vpack.c.b16 %v2082, %v2081
      %v2190 = vpack.c.b16 %v2084, %v2083
      %v2191 = vpack.c.b16 %v2086, %v2085
      %v2192 = vpack.c.b16 %v2088, %v2087
      %v2193 = vpack.c.b16 %v2090, %v2089
      %v2194 = vpack.c.b16 %v2092, %v2091
      %v2195 = vpack.c.b16 %v2094, %v2093
      %v2196 = vpack.c.b16 %v2096, %v2095
      %v2197 = vpack.c.b16 %v2098, %v2097
      %v2198 = vpack.c.b16 %v2100, %v2099
      %v2199 = vpack.c.b16 %v2102, %v2101
      %v2200 = vpack.c.b16 %v2104, %v2103
      %v2201 = vpack.c.b16 %v2106, %v2105
      %v2202 = vpack.c.b16 %v2108, %v2107
      %v2203 = vpack.c.b16 %v2110, %v2109
      %v2204 = vpack.c.b16 %v2112, %v2111
      %v2205 = vpack.c.b16 %v2114, %v2113
      %v2206 = vpack.c.b16 %v2116, %v2115
      %v2207 = vpack.c.b16 %v2118, %v2117
      %v2208 = vpack.c.b16 %v2120, %v2119
      %v2209 = vpack.c.b16 %v2122, %v2121
      %v2210 = vpack.c.b16 %v2124, %v2123
      %v2211 = vpack.c.b16 %v2126, %v2125
      %v2212 = vpack.c.b16 %v2128, %v2127
      %v2213 = vpack.c.b16 %v2130, %v2129
      %v2214 = vpack.c.b16 %v2132, %v2131
      %v2215 = vpack.c.b16 %v2134, %v2133
      %v2216 = vpack.c.b16 %v2136, %v2135
      %v2217 = vpack.c.b16 %v2138, %v2137
      %v2218 = vpack.c.b16 %v2140, %v2139
      %v2219 = vpack.c.b16 %v2142, %v2141
      %v2220 = vpack.c.b16 %v2144, %v2143
      %v2221 = vpack.c.b16 %v2146, %v2145
      %v2222 = vpack.c.b16 %v2148, %v2147
      %v2223 = vpack.c.b16 %v2150, %v2149
      %v2224 = vpack.c.b16 %v2152, %v2151
      %2297 = vmatpush.bf16.msra.mxu0 %v2160
      %2298 = vmatpush.bf16.msra.mxu0 %v2159
      %2299 = vmatpush.bf16.msra.mxu0 %v2158
      %2300 = vmatpush.bf16.msra.mxu0 %v2157
      %2301 = vmatpush.bf16.msra.mxu0 %v2156
      %2302 = vmatpush.bf16.msra.mxu0 %v2155
      %2303 = vmatpush.bf16.msra.mxu0 %v2154
      %2304 = vmatpush.bf16.msra.mxu0 %v2153
      %2305 = vmatmul.bf16.gmra.mxu0 %v921
      %v2306 = vpop.f32.mrf.mxu0
      %v2307 = vadd.f32 0.0, %v2306
      %v2308 = vpop.f32.mrf.mxu0
      %v2309 = vadd.f32 0.0, %v2308
      %2310 = vmatmul.bf16.gmra.mxu0 %v922
      %v2311 = vpop.f32.mrf.mxu0
      %v2312 = vadd.f32 0.0, %v2311
      %v2313 = vpop.f32.mrf.mxu0
      %v2314 = vadd.f32 0.0, %v2313
      %2315 = vmatmul.bf16.gmra.mxu0 %v923
      %v2316 = vpop.f32.mrf.mxu0
      %v2317 = vadd.f32 0.0, %v2316
      %v2318 = vpop.f32.mrf.mxu0
      %v2319 = vadd.f32 0.0, %v2318
      %2320 = vmatmul.bf16.gmra.mxu0 %v924
      %v2321 = vpop.f32.mrf.mxu0
      %v2322 = vadd.f32 0.0, %v2321
      %v2323 = vpop.f32.mrf.mxu0
      %v2324 = vadd.f32 0.0, %v2323
      %2325 = vmatmul.bf16.gmra.mxu0 %v925
      %v2326 = vpop.f32.mrf.mxu0
      %v2327 = vadd.f32 0.0, %v2326
      %v2328 = vpop.f32.mrf.mxu0
      %v2329 = vadd.f32 0.0, %v2328
      %2330 = vmatmul.bf16.gmra.mxu0 %v926
      %v2331 = vpop.f32.mrf.mxu0
      %v2332 = vadd.f32 0.0, %v2331
      %v2333 = vpop.f32.mrf.mxu0
      %v2334 = vadd.f32 0.0, %v2333
      %2335 = vmatmul.bf16.gmra.mxu0 %v927
      %v2336 = vpop.f32.mrf.mxu0
      %v2337 = vadd.f32 0.0, %v2336
      %v2338 = vpop.f32.mrf.mxu0
      %v2339 = vadd.f32 0.0, %v2338
      %2340 = vmatmul.bf16.gmra.mxu0 %v928
      %v2341 = vpop.f32.mrf.mxu0
      %v2342 = vadd.f32 0.0, %v2341
      %v2343 = vpop.f32.mrf.mxu0
      %v2344 = vadd.f32 0.0, %v2343
      %2345 = vmatmul.bf16.gmra.mxu0 %v929
      %v2346 = vpop.f32.mrf.mxu0
      %v2347 = vadd.f32 0.0, %v2346
      %v2348 = vpop.f32.mrf.mxu0
      %v2349 = vadd.f32 0.0, %v2348
      %2350 = vmatmul.bf16.gmra.mxu0 %v930
      %v2351 = vpop.f32.mrf.mxu0
      %v2352 = vadd.f32 0.0, %v2351
      %v2353 = vpop.f32.mrf.mxu0
      %v2354 = vadd.f32 0.0, %v2353
      %2355 = vmatmul.bf16.gmra.mxu0 %v931
      %v2356 = vpop.f32.mrf.mxu0
      %v2357 = vadd.f32 0.0, %v2356
      %v2358 = vpop.f32.mrf.mxu0
      %v2359 = vadd.f32 0.0, %v2358
      %2360 = vmatmul.bf16.gmra.mxu0 %v932
      %v2361 = vpop.f32.mrf.mxu0
      %v2362 = vadd.f32 0.0, %v2361
      %v2363 = vpop.f32.mrf.mxu0
      %v2364 = vadd.f32 0.0, %v2363
      %2365 = vmatmul.bf16.gmra.mxu0 %v933
      %v2366 = vpop.f32.mrf.mxu0
      %v2367 = vadd.f32 0.0, %v2366
      %v2368 = vpop.f32.mrf.mxu0
      %v2369 = vadd.f32 0.0, %v2368
      %2370 = vmatmul.bf16.gmra.mxu0 %v934
      %v2371 = vpop.f32.mrf.mxu0
      %v2372 = vadd.f32 0.0, %v2371
      %v2373 = vpop.f32.mrf.mxu0
      %v2374 = vadd.f32 0.0, %v2373
      %2375 = vmatmul.bf16.gmra.mxu0 %v935
      %v2376 = vpop.f32.mrf.mxu0
      %v2377 = vadd.f32 0.0, %v2376
      %v2378 = vpop.f32.mrf.mxu0
      %v2379 = vadd.f32 0.0, %v2378
      %2380 = vmatmul.bf16.gmra.mxu0 %v936
      %v2381 = vpop.f32.mrf.mxu0
      %v2382 = vadd.f32 0.0, %v2381
      %v2383 = vpop.f32.mrf.mxu0
      %v2384 = vadd.f32 0.0, %v2383
      %2385 = vdwg.mxu0
      %2386 = vmatpush.bf16.msra.mxu0 %v2168
      %2387 = vmatpush.bf16.msra.mxu0 %v2167
      %2388 = vmatpush.bf16.msra.mxu0 %v2166
      %2389 = vmatpush.bf16.msra.mxu0 %v2165
      %2390 = vmatpush.bf16.msra.mxu0 %v2164
      %2391 = vmatpush.bf16.msra.mxu0 %v2163
      %2392 = vmatpush.bf16.msra.mxu0 %v2162
      %2393 = vmatpush.bf16.msra.mxu0 %v2161
      %2394 = vmatmul.bf16.gmra.mxu0 %v1017
      %v2395 = vpop.f32.mrf.mxu0
      %v2396 = vadd.f32 %v2307, %v2395
      %v2397 = vpop.f32.mrf.mxu0
      %v2398 = vadd.f32 %v2309, %v2397
      %2399 = vmatmul.bf16.gmra.mxu0 %v1018
      %v2400 = vpop.f32.mrf.mxu0
      %v2401 = vadd.f32 %v2312, %v2400
      %v2402 = vpop.f32.mrf.mxu0
      %v2403 = vadd.f32 %v2314, %v2402
      %2404 = vmatmul.bf16.gmra.mxu0 %v1019
      %v2405 = vpop.f32.mrf.mxu0
      %v2406 = vadd.f32 %v2317, %v2405
      %v2407 = vpop.f32.mrf.mxu0
      %v2408 = vadd.f32 %v2319, %v2407
      %2409 = vmatmul.bf16.gmra.mxu0 %v1020
      %v2410 = vpop.f32.mrf.mxu0
      %v2411 = vadd.f32 %v2322, %v2410
      %v2412 = vpop.f32.mrf.mxu0
      %v2413 = vadd.f32 %v2324, %v2412
      %2414 = vmatmul.bf16.gmra.mxu0 %v1021
      %v2415 = vpop.f32.mrf.mxu0
      %v2416 = vadd.f32 %v2327, %v2415
      %v2417 = vpop.f32.mrf.mxu0
      %v2418 = vadd.f32 %v2329, %v2417
      %2419 = vmatmul.bf16.gmra.mxu0 %v1022
      %v2420 = vpop.f32.mrf.mxu0
      %v2421 = vadd.f32 %v2332, %v2420
      %v2422 = vpop.f32.mrf.mxu0
      %v2423 = vadd.f32 %v2334, %v2422
      %2424 = vmatmul.bf16.gmra.mxu0 %v1023
      %v2425 = vpop.f32.mrf.mxu0
      %v2426 = vadd.f32 %v2337, %v2425
      %v2427 = vpop.f32.mrf.mxu0
      %v2428 = vadd.f32 %v2339, %v2427
      %2429 = vmatmul.bf16.gmra.mxu0 %v1024
      %v2430 = vpop.f32.mrf.mxu0
      %v2431 = vadd.f32 %v2342, %v2430
      %v2432 = vpop.f32.mrf.mxu0
      %v2433 = vadd.f32 %v2344, %v2432
      %2434 = vmatmul.bf16.gmra.mxu0 %v1025
      %v2435 = vpop.f32.mrf.mxu0
      %v2436 = vadd.f32 %v2347, %v2435
      %v2437 = vpop.f32.mrf.mxu0
      %v2438 = vadd.f32 %v2349, %v2437
      %2439 = vmatmul.bf16.gmra.mxu0 %v1026
      %v2440 = vpop.f32.mrf.mxu0
      %v2441 = vadd.f32 %v2352, %v2440
      %v2442 = vpop.f32.mrf.mxu0
      %v2443 = vadd.f32 %v2354, %v2442
      %2444 = vmatmul.bf16.gmra.mxu0 %v1027
      %v2445 = vpop.f32.mrf.mxu0
      %v2446 = vadd.f32 %v2357, %v2445
      %v2447 = vpop.f32.mrf.mxu0
      %v2448 = vadd.f32 %v2359, %v2447
      %2449 = vmatmul.bf16.gmra.mxu0 %v1028
      %v2450 = vpop.f32.mrf.mxu0
      %v2451 = vadd.f32 %v2362, %v2450
      %v2452 = vpop.f32.mrf.mxu0
      %v2453 = vadd.f32 %v2364, %v2452
      %2454 = vmatmul.bf16.gmra.mxu0 %v1029
      %v2455 = vpop.f32.mrf.mxu0
      %v2456 = vadd.f32 %v2367, %v2455
      %v2457 = vpop.f32.mrf.mxu0
      %v2458 = vadd.f32 %v2369, %v2457
      %2459 = vmatmul.bf16.gmra.mxu0 %v1030
      %v2460 = vpop.f32.mrf.mxu0
      %v2461 = vadd.f32 %v2372, %v2460
      %v2462 = vpop.f32.mrf.mxu0
      %v2463 = vadd.f32 %v2374, %v2462
      %2464 = vmatmul.bf16.gmra.mxu0 %v1031
      %v2465 = vpop.f32.mrf.mxu0
      %v2466 = vadd.f32 %v2377, %v2465
      %v2467 = vpop.f32.mrf.mxu0
      %v2468 = vadd.f32 %v2379, %v2467
      %2469 = vmatmul.bf16.gmra.mxu0 %v1032
      %v2470 = vpop.f32.mrf.mxu0
      %v2471 = vadd.f32 %v2382, %v2470
      %v2472 = vpop.f32.mrf.mxu0
      %v2473 = vadd.f32 %v2384, %v2472
      %2474 = vdwg.mxu0
      %2475 = vmatpush.bf16.msra.mxu0 %v2176
      %2476 = vmatpush.bf16.msra.mxu0 %v2175
      %2477 = vmatpush.bf16.msra.mxu0 %v2174
      %2478 = vmatpush.bf16.msra.mxu0 %v2173
      %2479 = vmatpush.bf16.msra.mxu0 %v2172
      %2480 = vmatpush.bf16.msra.mxu0 %v2171
      %2481 = vmatpush.bf16.msra.mxu0 %v2170
      %2482 = vmatpush.bf16.msra.mxu0 %v2169
      %2483 = vmatmul.bf16.gmra.mxu0 %v1113
      %v2484 = vpop.f32.mrf.mxu0
      %v2485 = vadd.f32 %v2396, %v2484
      %v2486 = vpop.f32.mrf.mxu0
      %v2487 = vadd.f32 %v2398, %v2486
      %2488 = vmatmul.bf16.gmra.mxu0 %v1114
      %v2489 = vpop.f32.mrf.mxu0
      %v2490 = vadd.f32 %v2401, %v2489
      %v2491 = vpop.f32.mrf.mxu0
      %v2492 = vadd.f32 %v2403, %v2491
      %2493 = vmatmul.bf16.gmra.mxu0 %v1115
      %v2494 = vpop.f32.mrf.mxu0
      %v2495 = vadd.f32 %v2406, %v2494
      %v2496 = vpop.f32.mrf.mxu0
      %v2497 = vadd.f32 %v2408, %v2496
      %2498 = vmatmul.bf16.gmra.mxu0 %v1116
      %v2499 = vpop.f32.mrf.mxu0
      %v2500 = vadd.f32 %v2411, %v2499
      %v2501 = vpop.f32.mrf.mxu0
      %v2502 = vadd.f32 %v2413, %v2501
      %2503 = vmatmul.bf16.gmra.mxu0 %v1117
      %v2504 = vpop.f32.mrf.mxu0
      %v2505 = vadd.f32 %v2416, %v2504
      %v2506 = vpop.f32.mrf.mxu0
      %v2507 = vadd.f32 %v2418, %v2506
      %2508 = vmatmul.bf16.gmra.mxu0 %v1118
      %v2509 = vpop.f32.mrf.mxu0
      %v2510 = vadd.f32 %v2421, %v2509
      %v2511 = vpop.f32.mrf.mxu0
      %v2512 = vadd.f32 %v2423, %v2511
      %2513 = vmatmul.bf16.gmra.mxu0 %v1119
      %v2514 = vpop.f32.mrf.mxu0
      %v2515 = vadd.f32 %v2426, %v2514
      %v2516 = vpop.f32.mrf.mxu0
      %v2517 = vadd.f32 %v2428, %v2516
      %2518 = vmatmul.bf16.gmra.mxu0 %v1120
      %v2519 = vpop.f32.mrf.mxu0
      %v2520 = vadd.f32 %v2431, %v2519
      %v2521 = vpop.f32.mrf.mxu0
      %v2522 = vadd.f32 %v2433, %v2521
      %2523 = vmatmul.bf16.gmra.mxu0 %v1121
      %v2524 = vpop.f32.mrf.mxu0
      %v2525 = vadd.f32 %v2436, %v2524
      %v2526 = vpop.f32.mrf.mxu0
      %v2527 = vadd.f32 %v2438, %v2526
      %2528 = vmatmul.bf16.gmra.mxu0 %v1122
      %v2529 = vpop.f32.mrf.mxu0
      %v2530 = vadd.f32 %v2441, %v2529
      %v2531 = vpop.f32.mrf.mxu0
      %v2532 = vadd.f32 %v2443, %v2531
      %2533 = vmatmul.bf16.gmra.mxu0 %v1123
      %v2534 = vpop.f32.mrf.mxu0
      %v2535 = vadd.f32 %v2446, %v2534
      %v2536 = vpop.f32.mrf.mxu0
      %v2537 = vadd.f32 %v2448, %v2536
      %2538 = vmatmul.bf16.gmra.mxu0 %v1124
      %v2539 = vpop.f32.mrf.mxu0
      %v2540 = vadd.f32 %v2451, %v2539
      %v2541 = vpop.f32.mrf.mxu0
      %v2542 = vadd.f32 %v2453, %v2541
      %2543 = vmatmul.bf16.gmra.mxu0 %v1125
      %v2544 = vpop.f32.mrf.mxu0
      %v2545 = vadd.f32 %v2456, %v2544
      %v2546 = vpop.f32.mrf.mxu0
      %v2547 = vadd.f32 %v2458, %v2546
      %2548 = vmatmul.bf16.gmra.mxu0 %v1126
      %v2549 = vpop.f32.mrf.mxu0
      %v2550 = vadd.f32 %v2461, %v2549
      %v2551 = vpop.f32.mrf.mxu0
      %v2552 = vadd.f32 %v2463, %v2551
      %2553 = vmatmul.bf16.gmra.mxu0 %v1127
      %v2554 = vpop.f32.mrf.mxu0
      %v2555 = vadd.f32 %v2466, %v2554
      %v2556 = vpop.f32.mrf.mxu0
      %v2557 = vadd.f32 %v2468, %v2556
      %2558 = vmatmul.bf16.gmra.mxu0 %v1128
      %v2559 = vpop.f32.mrf.mxu0
      %v2560 = vadd.f32 %v2471, %v2559
      %v2561 = vpop.f32.mrf.mxu0
      %v2562 = vadd.f32 %v2473, %v2561
      %2563 = vdwg.mxu0
      %2564 = vmatpush.bf16.msra.mxu0 %v2184
      %2565 = vmatpush.bf16.msra.mxu0 %v2183
      %2566 = vmatpush.bf16.msra.mxu0 %v2182
      %2567 = vmatpush.bf16.msra.mxu0 %v2181
      %2568 = vmatpush.bf16.msra.mxu0 %v2180
      %2569 = vmatpush.bf16.msra.mxu0 %v2179
      %2570 = vmatpush.bf16.msra.mxu0 %v2178
      %2571 = vmatpush.bf16.msra.mxu0 %v2177
      %2572 = vmatmul.bf16.gmra.mxu0 %v1209
      %v2573 = vpop.f32.mrf.mxu0
      %v2574 = vadd.f32 %v2485, %v2573
      %v2575 = vpop.f32.mrf.mxu0
      %v2576 = vadd.f32 %v2487, %v2575
      %2577 = vmatmul.bf16.gmra.mxu0 %v1210
      %v2578 = vpop.f32.mrf.mxu0
      %v2579 = vadd.f32 %v2490, %v2578
      %v2580 = vpop.f32.mrf.mxu0
      %v2581 = vadd.f32 %v2492, %v2580
      %2582 = vmatmul.bf16.gmra.mxu0 %v1211
      %v2583 = vpop.f32.mrf.mxu0
      %v2584 = vadd.f32 %v2495, %v2583
      %v2585 = vpop.f32.mrf.mxu0
      %v2586 = vadd.f32 %v2497, %v2585
      %2587 = vmatmul.bf16.gmra.mxu0 %v1212
      %v2588 = vpop.f32.mrf.mxu0
      %v2589 = vadd.f32 %v2500, %v2588
      %v2590 = vpop.f32.mrf.mxu0
      %v2591 = vadd.f32 %v2502, %v2590
      %2592 = vmatmul.bf16.gmra.mxu0 %v1213
      %v2593 = vpop.f32.mrf.mxu0
      %v2594 = vadd.f32 %v2505, %v2593
      %v2595 = vpop.f32.mrf.mxu0
      %v2596 = vadd.f32 %v2507, %v2595
      %2597 = vmatmul.bf16.gmra.mxu0 %v1214
      %v2598 = vpop.f32.mrf.mxu0
      %v2599 = vadd.f32 %v2510, %v2598
      %v2600 = vpop.f32.mrf.mxu0
      %v2601 = vadd.f32 %v2512, %v2600
      %2602 = vmatmul.bf16.gmra.mxu0 %v1215
      %v2603 = vpop.f32.mrf.mxu0
      %v2604 = vadd.f32 %v2515, %v2603
      %v2605 = vpop.f32.mrf.mxu0
      %v2606 = vadd.f32 %v2517, %v2605
      %2607 = vmatmul.bf16.gmra.mxu0 %v1216
      %v2608 = vpop.f32.mrf.mxu0
      %v2609 = vadd.f32 %v2520, %v2608
      %v2610 = vpop.f32.mrf.mxu0
      %v2611 = vadd.f32 %v2522, %v2610
      %2612 = vmatmul.bf16.gmra.mxu0 %v1217
      %v2613 = vpop.f32.mrf.mxu0
      %v2614 = vadd.f32 %v2525, %v2613
      %v2615 = vpop.f32.mrf.mxu0
      %v2616 = vadd.f32 %v2527, %v2615
      %2617 = vmatmul.bf16.gmra.mxu0 %v1218
      %v2618 = vpop.f32.mrf.mxu0
      %v2619 = vadd.f32 %v2530, %v2618
      %v2620 = vpop.f32.mrf.mxu0
      %v2621 = vadd.f32 %v2532, %v2620
      %2622 = vmatmul.bf16.gmra.mxu0 %v1219
      %v2623 = vpop.f32.mrf.mxu0
      %v2624 = vadd.f32 %v2535, %v2623
      %v2625 = vpop.f32.mrf.mxu0
      %v2626 = vadd.f32 %v2537, %v2625
      %2627 = vmatmul.bf16.gmra.mxu0 %v1220
      %v2628 = vpop.f32.mrf.mxu0
      %v2629 = vadd.f32 %v2540, %v2628
      %v2630 = vpop.f32.mrf.mxu0
      %v2631 = vadd.f32 %v2542, %v2630
      %2632 = vmatmul.bf16.gmra.mxu0 %v1221
      %v2633 = vpop.f32.mrf.mxu0
      %v2634 = vadd.f32 %v2545, %v2633
      %v2635 = vpop.f32.mrf.mxu0
      %v2636 = vadd.f32 %v2547, %v2635
      %2637 = vmatmul.bf16.gmra.mxu0 %v1222
      %v2638 = vpop.f32.mrf.mxu0
      %v2639 = vadd.f32 %v2550, %v2638
      %v2640 = vpop.f32.mrf.mxu0
      %v2641 = vadd.f32 %v2552, %v2640
      %2642 = vmatmul.bf16.gmra.mxu0 %v1223
      %v2643 = vpop.f32.mrf.mxu0
      %v2644 = vadd.f32 %v2555, %v2643
      %v2645 = vpop.f32.mrf.mxu0
      %v2646 = vadd.f32 %v2557, %v2645
      %2647 = vmatmul.bf16.gmra.mxu0 %v1224
      %v2648 = vpop.f32.mrf.mxu0
      %v2649 = vadd.f32 %v2560, %v2648
      %v2650 = vpop.f32.mrf.mxu0
      %v2651 = vadd.f32 %v2562, %v2650
      %2652 = vdwg.mxu0
      %2653 = vmatpush.bf16.msra.mxu0 %v2192
      %2654 = vmatpush.bf16.msra.mxu0 %v2191
      %2655 = vmatpush.bf16.msra.mxu0 %v2190
      %2656 = vmatpush.bf16.msra.mxu0 %v2189
      %2657 = vmatpush.bf16.msra.mxu0 %v2188
      %2658 = vmatpush.bf16.msra.mxu0 %v2187
      %2659 = vmatpush.bf16.msra.mxu0 %v2186
      %2660 = vmatpush.bf16.msra.mxu0 %v2185
      %2661 = vmatmul.bf16.gmra.mxu0 %v1305
      %v2662 = vpop.f32.mrf.mxu0
      %v2663 = vadd.f32 %v2574, %v2662
      %v2664 = vpop.f32.mrf.mxu0
      %v2665 = vadd.f32 %v2576, %v2664
      %2666 = vmatmul.bf16.gmra.mxu0 %v1306
      %v2667 = vpop.f32.mrf.mxu0
      %v2668 = vadd.f32 %v2579, %v2667
      %v2669 = vpop.f32.mrf.mxu0
      %v2670 = vadd.f32 %v2581, %v2669
      %2671 = vmatmul.bf16.gmra.mxu0 %v1307
      %v2672 = vpop.f32.mrf.mxu0
      %v2673 = vadd.f32 %v2584, %v2672
      %v2674 = vpop.f32.mrf.mxu0
      %v2675 = vadd.f32 %v2586, %v2674
      %2676 = vmatmul.bf16.gmra.mxu0 %v1308
      %v2677 = vpop.f32.mrf.mxu0
      %v2678 = vadd.f32 %v2589, %v2677
      %v2679 = vpop.f32.mrf.mxu0
      %v2680 = vadd.f32 %v2591, %v2679
      %2681 = vmatmul.bf16.gmra.mxu0 %v1309
      %v2682 = vpop.f32.mrf.mxu0
      %v2683 = vadd.f32 %v2594, %v2682
      %v2684 = vpop.f32.mrf.mxu0
      %v2685 = vadd.f32 %v2596, %v2684
      %2686 = vmatmul.bf16.gmra.mxu0 %v1310
      %v2687 = vpop.f32.mrf.mxu0
      %v2688 = vadd.f32 %v2599, %v2687
      %v2689 = vpop.f32.mrf.mxu0
      %v2690 = vadd.f32 %v2601, %v2689
      %2691 = vmatmul.bf16.gmra.mxu0 %v1311
      %v2692 = vpop.f32.mrf.mxu0
      %v2693 = vadd.f32 %v2604, %v2692
      %v2694 = vpop.f32.mrf.mxu0
      %v2695 = vadd.f32 %v2606, %v2694
      %2696 = vmatmul.bf16.gmra.mxu0 %v1312
      %v2697 = vpop.f32.mrf.mxu0
      %v2698 = vadd.f32 %v2609, %v2697
      %v2699 = vpop.f32.mrf.mxu0
      %v2700 = vadd.f32 %v2611, %v2699
      %2701 = vmatmul.bf16.gmra.mxu0 %v1313
      %v2702 = vpop.f32.mrf.mxu0
      %v2703 = vadd.f32 %v2614, %v2702
      %v2704 = vpop.f32.mrf.mxu0
      %v2705 = vadd.f32 %v2616, %v2704
      %2706 = vmatmul.bf16.gmra.mxu0 %v1314
      %v2707 = vpop.f32.mrf.mxu0
      %v2708 = vadd.f32 %v2619, %v2707
      %v2709 = vpop.f32.mrf.mxu0
      %v2710 = vadd.f32 %v2621, %v2709
      %2711 = vmatmul.bf16.gmra.mxu0 %v1315
      %v2712 = vpop.f32.mrf.mxu0
      %v2713 = vadd.f32 %v2624, %v2712
      %v2714 = vpop.f32.mrf.mxu0
      %v2715 = vadd.f32 %v2626, %v2714
      %2716 = vmatmul.bf16.gmra.mxu0 %v1316
      %v2717 = vpop.f32.mrf.mxu0
      %v2718 = vadd.f32 %v2629, %v2717
      %v2719 = vpop.f32.mrf.mxu0
      %v2720 = vadd.f32 %v2631, %v2719
      %2721 = vmatmul.bf16.gmra.mxu0 %v1317
      %v2722 = vpop.f32.mrf.mxu0
      %v2723 = vadd.f32 %v2634, %v2722
      %v2724 = vpop.f32.mrf.mxu0
      %v2725 = vadd.f32 %v2636, %v2724
      %2726 = vmatmul.bf16.gmra.mxu0 %v1318
      %v2727 = vpop.f32.mrf.mxu0
      %v2728 = vadd.f32 %v2639, %v2727
      %v2729 = vpop.f32.mrf.mxu0
      %v2730 = vadd.f32 %v2641, %v2729
      %2731 = vmatmul.bf16.gmra.mxu0 %v1319
      %v2732 = vpop.f32.mrf.mxu0
      %v2733 = vadd.f32 %v2644, %v2732
      %v2734 = vpop.f32.mrf.mxu0
      %v2735 = vadd.f32 %v2646, %v2734
      %2736 = vmatmul.bf16.gmra.mxu0 %v1320
      %v2737 = vpop.f32.mrf.mxu0
      %v2738 = vadd.f32 %v2649, %v2737
      %v2739 = vpop.f32.mrf.mxu0
      %v2740 = vadd.f32 %v2651, %v2739
      %2741 = vdwg.mxu0
      %2742 = vmatpush.bf16.msra.mxu0 %v2200
      %2743 = vmatpush.bf16.msra.mxu0 %v2199
      %2744 = vmatpush.bf16.msra.mxu0 %v2198
      %2745 = vmatpush.bf16.msra.mxu0 %v2197
      %2746 = vmatpush.bf16.msra.mxu0 %v2196
      %2747 = vmatpush.bf16.msra.mxu0 %v2195
      %2748 = vmatpush.bf16.msra.mxu0 %v2194
      %2749 = vmatpush.bf16.msra.mxu0 %v2193
      %2750 = vmatmul.bf16.gmra.mxu0 %v1401
      %v2751 = vpop.f32.mrf.mxu0
      %v2752 = vadd.f32 %v2663, %v2751
      %v2753 = vpop.f32.mrf.mxu0
      %v2754 = vadd.f32 %v2665, %v2753
      %2755 = vmatmul.bf16.gmra.mxu0 %v1402
      %v2756 = vpop.f32.mrf.mxu0
      %v2757 = vadd.f32 %v2668, %v2756
      %v2758 = vpop.f32.mrf.mxu0
      %v2759 = vadd.f32 %v2670, %v2758
      %2760 = vmatmul.bf16.gmra.mxu0 %v1403
      %v2761 = vpop.f32.mrf.mxu0
      %v2762 = vadd.f32 %v2673, %v2761
      %v2763 = vpop.f32.mrf.mxu0
      %v2764 = vadd.f32 %v2675, %v2763
      %2765 = vmatmul.bf16.gmra.mxu0 %v1404
      %v2766 = vpop.f32.mrf.mxu0
      %v2767 = vadd.f32 %v2678, %v2766
      %v2768 = vpop.f32.mrf.mxu0
      %v2769 = vadd.f32 %v2680, %v2768
      %2770 = vmatmul.bf16.gmra.mxu0 %v1405
      %v2771 = vpop.f32.mrf.mxu0
      %v2772 = vadd.f32 %v2683, %v2771
      %v2773 = vpop.f32.mrf.mxu0
      %v2774 = vadd.f32 %v2685, %v2773
      %2775 = vmatmul.bf16.gmra.mxu0 %v1406
      %v2776 = vpop.f32.mrf.mxu0
      %v2777 = vadd.f32 %v2688, %v2776
      %v2778 = vpop.f32.mrf.mxu0
      %v2779 = vadd.f32 %v2690, %v2778
      %2780 = vmatmul.bf16.gmra.mxu0 %v1407
      %v2781 = vpop.f32.mrf.mxu0
      %v2782 = vadd.f32 %v2693, %v2781
      %v2783 = vpop.f32.mrf.mxu0
      %v2784 = vadd.f32 %v2695, %v2783
      %2785 = vmatmul.bf16.gmra.mxu0 %v1408
      %v2786 = vpop.f32.mrf.mxu0
      %v2787 = vadd.f32 %v2698, %v2786
      %v2788 = vpop.f32.mrf.mxu0
      %v2789 = vadd.f32 %v2700, %v2788
      %2790 = vmatmul.bf16.gmra.mxu0 %v1409
      %v2791 = vpop.f32.mrf.mxu0
      %v2792 = vadd.f32 %v2703, %v2791
      %v2793 = vpop.f32.mrf.mxu0
      %v2794 = vadd.f32 %v2705, %v2793
      %2795 = vmatmul.bf16.gmra.mxu0 %v1410
      %v2796 = vpop.f32.mrf.mxu0
      %v2797 = vadd.f32 %v2708, %v2796
      %v2798 = vpop.f32.mrf.mxu0
      %v2799 = vadd.f32 %v2710, %v2798
      %2800 = vmatmul.bf16.gmra.mxu0 %v1411
      %v2801 = vpop.f32.mrf.mxu0
      %v2802 = vadd.f32 %v2713, %v2801
      %v2803 = vpop.f32.mrf.mxu0
      %v2804 = vadd.f32 %v2715, %v2803
      %2805 = vmatmul.bf16.gmra.mxu0 %v1412
      %v2806 = vpop.f32.mrf.mxu0
      %v2807 = vadd.f32 %v2718, %v2806
      %v2808 = vpop.f32.mrf.mxu0
      %v2809 = vadd.f32 %v2720, %v2808
      %2810 = vmatmul.bf16.gmra.mxu0 %v1413
      %v2811 = vpop.f32.mrf.mxu0
      %v2812 = vadd.f32 %v2723, %v2811
      %v2813 = vpop.f32.mrf.mxu0
      %v2814 = vadd.f32 %v2725, %v2813
      %2815 = vmatmul.bf16.gmra.mxu0 %v1414
      %v2816 = vpop.f32.mrf.mxu0
      %v2817 = vadd.f32 %v2728, %v2816
      %v2818 = vpop.f32.mrf.mxu0
      %v2819 = vadd.f32 %v2730, %v2818
      %2820 = vmatmul.bf16.gmra.mxu0 %v1415
      %v2821 = vpop.f32.mrf.mxu0
      %v2822 = vadd.f32 %v2733, %v2821
      %v2823 = vpop.f32.mrf.mxu0
      %v2824 = vadd.f32 %v2735, %v2823
      %2825 = vmatmul.bf16.gmra.mxu0 %v1416
      %v2826 = vpop.f32.mrf.mxu0
      %v2827 = vadd.f32 %v2738, %v2826
      %v2828 = vpop.f32.mrf.mxu0
      %v2829 = vadd.f32 %v2740, %v2828
      %2830 = vdwg.mxu0
      %2831 = vmatpush.bf16.msra.mxu0 %v2208
      %2832 = vmatpush.bf16.msra.mxu0 %v2207
      %2833 = vmatpush.bf16.msra.mxu0 %v2206
      %2834 = vmatpush.bf16.msra.mxu0 %v2205
      %2835 = vmatpush.bf16.msra.mxu0 %v2204
      %2836 = vmatpush.bf16.msra.mxu0 %v2203
      %2837 = vmatpush.bf16.msra.mxu0 %v2202
      %2838 = vmatpush.bf16.msra.mxu0 %v2201
      %2839 = vmatmul.bf16.gmra.mxu0 %v1497
      %v2840 = vpop.f32.mrf.mxu0
      %v2841 = vadd.f32 %v2752, %v2840
      %v2842 = vpop.f32.mrf.mxu0
      %v2843 = vadd.f32 %v2754, %v2842
      %2844 = vmatmul.bf16.gmra.mxu0 %v1498
      %v2845 = vpop.f32.mrf.mxu0
      %v2846 = vadd.f32 %v2757, %v2845
      %v2847 = vpop.f32.mrf.mxu0
      %v2848 = vadd.f32 %v2759, %v2847
      %2849 = vmatmul.bf16.gmra.mxu0 %v1499
      %v2850 = vpop.f32.mrf.mxu0
      %v2851 = vadd.f32 %v2762, %v2850
      %v2852 = vpop.f32.mrf.mxu0
      %v2853 = vadd.f32 %v2764, %v2852
      %2854 = vmatmul.bf16.gmra.mxu0 %v1500
      %v2855 = vpop.f32.mrf.mxu0
      %v2856 = vadd.f32 %v2767, %v2855
      %v2857 = vpop.f32.mrf.mxu0
      %v2858 = vadd.f32 %v2769, %v2857
      %2859 = vmatmul.bf16.gmra.mxu0 %v1501
      %v2860 = vpop.f32.mrf.mxu0
      %v2861 = vadd.f32 %v2772, %v2860
      %v2862 = vpop.f32.mrf.mxu0
      %v2863 = vadd.f32 %v2774, %v2862
      %2864 = vmatmul.bf16.gmra.mxu0 %v1502
      %v2865 = vpop.f32.mrf.mxu0
      %v2866 = vadd.f32 %v2777, %v2865
      %v2867 = vpop.f32.mrf.mxu0
      %v2868 = vadd.f32 %v2779, %v2867
      %2869 = vmatmul.bf16.gmra.mxu0 %v1503
      %v2870 = vpop.f32.mrf.mxu0
      %v2871 = vadd.f32 %v2782, %v2870
      %v2872 = vpop.f32.mrf.mxu0
      %v2873 = vadd.f32 %v2784, %v2872
      %2874 = vmatmul.bf16.gmra.mxu0 %v1504
      %v2875 = vpop.f32.mrf.mxu0
      %v2876 = vadd.f32 %v2787, %v2875
      %v2877 = vpop.f32.mrf.mxu0
      %v2878 = vadd.f32 %v2789, %v2877
      %2879 = vmatmul.bf16.gmra.mxu0 %v1505
      %v2880 = vpop.f32.mrf.mxu0
      %v2881 = vadd.f32 %v2792, %v2880
      %v2882 = vpop.f32.mrf.mxu0
      %v2883 = vadd.f32 %v2794, %v2882
      %2884 = vmatmul.bf16.gmra.mxu0 %v1506
      %v2885 = vpop.f32.mrf.mxu0
      %v2886 = vadd.f32 %v2797, %v2885
      %v2887 = vpop.f32.mrf.mxu0
      %v2888 = vadd.f32 %v2799, %v2887
      %2889 = vmatmul.bf16.gmra.mxu0 %v1507
      %v2890 = vpop.f32.mrf.mxu0
      %v2891 = vadd.f32 %v2802, %v2890
      %v2892 = vpop.f32.mrf.mxu0
      %v2893 = vadd.f32 %v2804, %v2892
      %2894 = vmatmul.bf16.gmra.mxu0 %v1508
      %v2895 = vpop.f32.mrf.mxu0
      %v2896 = vadd.f32 %v2807, %v2895
      %v2897 = vpop.f32.mrf.mxu0
      %v2898 = vadd.f32 %v2809, %v2897
      %2899 = vmatmul.bf16.gmra.mxu0 %v1509
      %v2900 = vpop.f32.mrf.mxu0
      %v2901 = vadd.f32 %v2812, %v2900
      %v2902 = vpop.f32.mrf.mxu0
      %v2903 = vadd.f32 %v2814, %v2902
      %2904 = vmatmul.bf16.gmra.mxu0 %v1510
      %v2905 = vpop.f32.mrf.mxu0
      %v2906 = vadd.f32 %v2817, %v2905
      %v2907 = vpop.f32.mrf.mxu0
      %v2908 = vadd.f32 %v2819, %v2907
      %2909 = vmatmul.bf16.gmra.mxu0 %v1511
      %v2910 = vpop.f32.mrf.mxu0
      %v2911 = vadd.f32 %v2822, %v2910
      %v2912 = vpop.f32.mrf.mxu0
      %v2913 = vadd.f32 %v2824, %v2912
      %2914 = vmatmul.bf16.gmra.mxu0 %v1512
      %v2915 = vpop.f32.mrf.mxu0
      %v2916 = vadd.f32 %v2827, %v2915
      %v2917 = vpop.f32.mrf.mxu0
      %v2918 = vadd.f32 %v2829, %v2917
      %2919 = vdwg.mxu0
      %2920 = vmatpush.bf16.msra.mxu0 %v2216
      %2921 = vmatpush.bf16.msra.mxu0 %v2215
      %2922 = vmatpush.bf16.msra.mxu0 %v2214
      %2923 = vmatpush.bf16.msra.mxu0 %v2213
      %2924 = vmatpush.bf16.msra.mxu0 %v2212
      %2925 = vmatpush.bf16.msra.mxu0 %v2211
      %2926 = vmatpush.bf16.msra.mxu0 %v2210
      %2927 = vmatpush.bf16.msra.mxu0 %v2209
      %2928 = vmatmul.bf16.gmra.mxu0 %v1593
      %v2929 = vpop.f32.mrf.mxu0
      %v2930 = vadd.f32 %v2841, %v2929
      %v2931 = vpop.f32.mrf.mxu0
      %v2932 = vadd.f32 %v2843, %v2931
      %2933 = vmatmul.bf16.gmra.mxu0 %v1594
      %v2934 = vpop.f32.mrf.mxu0
      %v2935 = vadd.f32 %v2846, %v2934
      %v2936 = vpop.f32.mrf.mxu0
      %v2937 = vadd.f32 %v2848, %v2936
      %2938 = vmatmul.bf16.gmra.mxu0 %v1595
      %v2939 = vpop.f32.mrf.mxu0
      %v2940 = vadd.f32 %v2851, %v2939
      %v2941 = vpop.f32.mrf.mxu0
      %v2942 = vadd.f32 %v2853, %v2941
      %2943 = vmatmul.bf16.gmra.mxu0 %v1596
      %v2944 = vpop.f32.mrf.mxu0
      %v2945 = vadd.f32 %v2856, %v2944
      %v2946 = vpop.f32.mrf.mxu0
      %v2947 = vadd.f32 %v2858, %v2946
      %2948 = vmatmul.bf16.gmra.mxu0 %v1597
      %v2949 = vpop.f32.mrf.mxu0
      %v2950 = vadd.f32 %v2861, %v2949
      %v2951 = vpop.f32.mrf.mxu0
      %v2952 = vadd.f32 %v2863, %v2951
      %2953 = vmatmul.bf16.gmra.mxu0 %v1598
      %v2954 = vpop.f32.mrf.mxu0
      %v2955 = vadd.f32 %v2866, %v2954
      %v2956 = vpop.f32.mrf.mxu0
      %v2957 = vadd.f32 %v2868, %v2956
      %2958 = vmatmul.bf16.gmra.mxu0 %v1599
      %v2959 = vpop.f32.mrf.mxu0
      %v2960 = vadd.f32 %v2871, %v2959
      %v2961 = vpop.f32.mrf.mxu0
      %v2962 = vadd.f32 %v2873, %v2961
      %2963 = vmatmul.bf16.gmra.mxu0 %v1600
      %v2964 = vpop.f32.mrf.mxu0
      %v2965 = vadd.f32 %v2876, %v2964
      %v2966 = vpop.f32.mrf.mxu0
      %v2967 = vadd.f32 %v2878, %v2966
      %2968 = vmatmul.bf16.gmra.mxu0 %v1601
      %v2969 = vpop.f32.mrf.mxu0
      %v2970 = vadd.f32 %v2881, %v2969
      %v2971 = vpop.f32.mrf.mxu0
      %v2972 = vadd.f32 %v2883, %v2971
      %2973 = vmatmul.bf16.gmra.mxu0 %v1602
      %v2974 = vpop.f32.mrf.mxu0
      %v2975 = vadd.f32 %v2886, %v2974
      %v2976 = vpop.f32.mrf.mxu0
      %v2977 = vadd.f32 %v2888, %v2976
      %2978 = vmatmul.bf16.gmra.mxu0 %v1603
      %v2979 = vpop.f32.mrf.mxu0
      %v2980 = vadd.f32 %v2891, %v2979
      %v2981 = vpop.f32.mrf.mxu0
      %v2982 = vadd.f32 %v2893, %v2981
      %2983 = vmatmul.bf16.gmra.mxu0 %v1604
      %v2984 = vpop.f32.mrf.mxu0
      %v2985 = vadd.f32 %v2896, %v2984
      %v2986 = vpop.f32.mrf.mxu0
      %v2987 = vadd.f32 %v2898, %v2986
      %2988 = vmatmul.bf16.gmra.mxu0 %v1605
      %v2989 = vpop.f32.mrf.mxu0
      %v2990 = vadd.f32 %v2901, %v2989
      %v2991 = vpop.f32.mrf.mxu0
      %v2992 = vadd.f32 %v2903, %v2991
      %2993 = vmatmul.bf16.gmra.mxu0 %v1606
      %v2994 = vpop.f32.mrf.mxu0
      %v2995 = vadd.f32 %v2906, %v2994
      %v2996 = vpop.f32.mrf.mxu0
      %v2997 = vadd.f32 %v2908, %v2996
      %2998 = vmatmul.bf16.gmra.mxu0 %v1607
      %v2999 = vpop.f32.mrf.mxu0
      %v3000 = vadd.f32 %v2911, %v2999
      %v3001 = vpop.f32.mrf.mxu0
      %v3002 = vadd.f32 %v2913, %v3001
      %3003 = vmatmul.bf16.gmra.mxu0 %v1608
      %v3004 = vpop.f32.mrf.mxu0
      %v3005 = vadd.f32 %v2916, %v3004
      %v3006 = vpop.f32.mrf.mxu0
      %v3007 = vadd.f32 %v2918, %v3006
      %3008 = vdwg.mxu0
      %3009 = vmatpush.bf16.msra.mxu0 %v2224
      %3010 = vmatpush.bf16.msra.mxu0 %v2223
      %3011 = vmatpush.bf16.msra.mxu0 %v2222
      %3012 = vmatpush.bf16.msra.mxu0 %v2221
      %3013 = vmatpush.bf16.msra.mxu0 %v2220
      %3014 = vmatpush.bf16.msra.mxu0 %v2219
      %3015 = vmatpush.bf16.msra.mxu0 %v2218
      %3016 = vmatpush.bf16.msra.mxu0 %v2217
      %3017 = vmatmul.bf16.gmra.mxu0 %v1689
      %v3018 = vpop.f32.mrf.mxu0
      %v3019 = vadd.f32 %v2930, %v3018
      %v3020 = vpop.f32.mrf.mxu0
      %v3021 = vadd.f32 %v2932, %v3020
      %3022 = vmatmul.bf16.gmra.mxu0 %v1690
      %v3023 = vpop.f32.mrf.mxu0
      %v3024 = vadd.f32 %v2935, %v3023
      %v3025 = vpop.f32.mrf.mxu0
      %v3026 = vadd.f32 %v2937, %v3025
      %3027 = vmatmul.bf16.gmra.mxu0 %v1691
      %v3028 = vpop.f32.mrf.mxu0
      %v3029 = vadd.f32 %v2940, %v3028
      %v3030 = vpop.f32.mrf.mxu0
      %v3031 = vadd.f32 %v2942, %v3030
      %3032 = vmatmul.bf16.gmra.mxu0 %v1692
      %v3033 = vpop.f32.mrf.mxu0
      %v3034 = vadd.f32 %v2945, %v3033
      %v3035 = vpop.f32.mrf.mxu0
      %v3036 = vadd.f32 %v2947, %v3035
      %3037 = vmatmul.bf16.gmra.mxu0 %v1693
      %v3038 = vpop.f32.mrf.mxu0
      %v3039 = vadd.f32 %v2950, %v3038
      %v3040 = vpop.f32.mrf.mxu0
      %v3041 = vadd.f32 %v2952, %v3040
      %3042 = vmatmul.bf16.gmra.mxu0 %v1694
      %v3043 = vpop.f32.mrf.mxu0
      %v3044 = vadd.f32 %v2955, %v3043
      %v3045 = vpop.f32.mrf.mxu0
      %v3046 = vadd.f32 %v2957, %v3045
      %3047 = vmatmul.bf16.gmra.mxu0 %v1695
      %v3048 = vpop.f32.mrf.mxu0
      %v3049 = vadd.f32 %v2960, %v3048
      %v3050 = vpop.f32.mrf.mxu0
      %v3051 = vadd.f32 %v2962, %v3050
      %3052 = vmatmul.bf16.gmra.mxu0 %v1696
      %v3053 = vpop.f32.mrf.mxu0
      %v3054 = vadd.f32 %v2965, %v3053
      %v3055 = vpop.f32.mrf.mxu0
      %v3056 = vadd.f32 %v2967, %v3055
      %3057 = vmatmul.bf16.gmra.mxu0 %v1697
      %v3058 = vpop.f32.mrf.mxu0
      %v3059 = vadd.f32 %v2970, %v3058
      %v3060 = vpop.f32.mrf.mxu0
      %v3061 = vadd.f32 %v2972, %v3060
      %3062 = vmatmul.bf16.gmra.mxu0 %v1698
      %v3063 = vpop.f32.mrf.mxu0
      %v3064 = vadd.f32 %v2975, %v3063
      %v3065 = vpop.f32.mrf.mxu0
      %v3066 = vadd.f32 %v2977, %v3065
      %3067 = vmatmul.bf16.gmra.mxu0 %v1699
      %v3068 = vpop.f32.mrf.mxu0
      %v3069 = vadd.f32 %v2980, %v3068
      %v3070 = vpop.f32.mrf.mxu0
      %v3071 = vadd.f32 %v2982, %v3070
      %3072 = vmatmul.bf16.gmra.mxu0 %v1700
      %v3073 = vpop.f32.mrf.mxu0
      %v3074 = vadd.f32 %v2985, %v3073
      %v3075 = vpop.f32.mrf.mxu0
      %v3076 = vadd.f32 %v2987, %v3075
      %3077 = vmatmul.bf16.gmra.mxu0 %v1701
      %v3078 = vpop.f32.mrf.mxu0
      %v3079 = vadd.f32 %v2990, %v3078
      %v3080 = vpop.f32.mrf.mxu0
      %v3081 = vadd.f32 %v2992, %v3080
      %3082 = vmatmul.bf16.gmra.mxu0 %v1702
      %v3083 = vpop.f32.mrf.mxu0
      %v3084 = vadd.f32 %v2995, %v3083
      %v3085 = vpop.f32.mrf.mxu0
      %v3086 = vadd.f32 %v2997, %v3085
      %3087 = vmatmul.bf16.gmra.mxu0 %v1703
      %v3088 = vpop.f32.mrf.mxu0
      %v3089 = vadd.f32 %v3000, %v3088
      %v3090 = vpop.f32.mrf.mxu0
      %v3091 = vadd.f32 %v3002, %v3090
      %3092 = vmatmul.bf16.gmra.mxu0 %v1704
      %v3093 = vpop.f32.mrf.mxu0
      %v3094 = vadd.f32 %v3005, %v3093
      %v3095 = vpop.f32.mrf.mxu0
      %v3096 = vadd.f32 %v3007, %v3095
      %3097 = vdwg.mxu0
      %v3098 = vld [vmem:[%s2] sm:$0x1]
      %v3100 = vperm.slane %v3098, 0
      %v3102 = vmul.f32 %v3019, %v3100
      %v3103 = vmul.f32 %v3021, %v3100
      %v3104 = vmul.f32 %v3024, %v3100
      %v3105 = vmul.f32 %v3026, %v3100
      %v3106 = vmul.f32 %v3029, %v3100
      %v3107 = vmul.f32 %v3031, %v3100
      %v3108 = vmul.f32 %v3034, %v3100
      %v3109 = vmul.f32 %v3036, %v3100
      %v3110 = vmul.f32 %v3039, %v3100
      %v3111 = vmul.f32 %v3041, %v3100
      %v3112 = vmul.f32 %v3044, %v3100
      %v3113 = vmul.f32 %v3046, %v3100
      %v3114 = vmul.f32 %v3049, %v3100
      %v3115 = vmul.f32 %v3051, %v3100
      %v3116 = vmul.f32 %v3054, %v3100
      %v3117 = vmul.f32 %v3056, %v3100
      %v3118 = vmul.f32 %v3059, %v3100
      %v3119 = vmul.f32 %v3061, %v3100
      %v3120 = vmul.f32 %v3064, %v3100
      %v3121 = vmul.f32 %v3066, %v3100
      %v3122 = vmul.f32 %v3069, %v3100
      %v3123 = vmul.f32 %v3071, %v3100
      %v3124 = vmul.f32 %v3074, %v3100
      %v3125 = vmul.f32 %v3076, %v3100
      %v3126 = vmul.f32 %v3079, %v3100
      %v3127 = vmul.f32 %v3081, %v3100
      %v3128 = vmul.f32 %v3084, %v3100
      %v3129 = vmul.f32 %v3086, %v3100
      %v3130 = vmul.f32 %v3089, %v3100
      %v3131 = vmul.f32 %v3091, %v3100
      %v3132 = vmul.f32 %v3094, %v3100
      %v3133 = vmul.f32 %v3096, %v3100
      %v3134 = vld [vmem:[%s3] sm:$0x1]
      %v3136 = vperm.slane %v3134, 0
      %v3138 = vadd.f32 %v3102, %v3136
      %v3139 = vadd.f32 %v3103, %v3136
      %v3140 = vadd.f32 %v3104, %v3136
      %v3141 = vadd.f32 %v3105, %v3136
      %v3142 = vadd.f32 %v3106, %v3136
      %v3143 = vadd.f32 %v3107, %v3136
      %v3144 = vadd.f32 %v3108, %v3136
      %v3145 = vadd.f32 %v3109, %v3136
      %v3146 = vadd.f32 %v3110, %v3136
      %v3147 = vadd.f32 %v3111, %v3136
      %v3148 = vadd.f32 %v3112, %v3136
      %v3149 = vadd.f32 %v3113, %v3136
      %v3150 = vadd.f32 %v3114, %v3136
      %v3151 = vadd.f32 %v3115, %v3136
      %v3152 = vadd.f32 %v3116, %v3136
      %v3153 = vadd.f32 %v3117, %v3136
      %v3154 = vadd.f32 %v3118, %v3136
      %v3155 = vadd.f32 %v3119, %v3136
      %v3156 = vadd.f32 %v3120, %v3136
      %v3157 = vadd.f32 %v3121, %v3136
      %v3158 = vadd.f32 %v3122, %v3136
      %v3159 = vadd.f32 %v3123, %v3136
      %v3160 = vadd.f32 %v3124, %v3136
      %v3161 = vadd.f32 %v3125, %v3136
      %v3162 = vadd.f32 %v3126, %v3136
      %v3163 = vadd.f32 %v3127, %v3136
      %v3164 = vadd.f32 %v3128, %v3136
      %v3165 = vadd.f32 %v3129, %v3136
      %v3166 = vadd.f32 %v3130, %v3136
      %v3167 = vadd.f32 %v3131, %v3136
      %v3168 = vadd.f32 %v3132, %v3136
      %v3169 = vadd.f32 %v3133, %v3136
      %v3170 = vmax.f32 %v3138, 0.0
      %v3171 = vmax.f32 %v3139, 0.0
      %v3172 = vmax.f32 %v3140, 0.0
      %v3173 = vmax.f32 %v3141, 0.0
      %v3174 = vmax.f32 %v3142, 0.0
      %v3175 = vmax.f32 %v3143, 0.0
      %v3176 = vmax.f32 %v3144, 0.0
      %v3177 = vmax.f32 %v3145, 0.0
      %v3178 = vmax.f32 %v3146, 0.0
      %v3179 = vmax.f32 %v3147, 0.0
      %v3180 = vmax.f32 %v3148, 0.0
      %v3181 = vmax.f32 %v3149, 0.0
      %v3182 = vmax.f32 %v3150, 0.0
      %v3183 = vmax.f32 %v3151, 0.0
      %v3184 = vmax.f32 %v3152, 0.0
      %v3185 = vmax.f32 %v3153, 0.0
      %v3186 = vmax.f32 %v3154, 0.0
      %v3187 = vmax.f32 %v3155, 0.0
      %v3188 = vmax.f32 %v3156, 0.0
      %v3189 = vmax.f32 %v3157, 0.0
      %v3190 = vmax.f32 %v3158, 0.0
      %v3191 = vmax.f32 %v3159, 0.0
      %v3192 = vmax.f32 %v3160, 0.0
      %v3193 = vmax.f32 %v3161, 0.0
      %v3194 = vmax.f32 %v3162, 0.0
      %v3195 = vmax.f32 %v3163, 0.0
      %v3196 = vmax.f32 %v3164, 0.0
      %v3197 = vmax.f32 %v3165, 0.0
      %v3198 = vmax.f32 %v3166, 0.0
      %v3199 = vmax.f32 %v3167, 0.0
      %v3200 = vmax.f32 %v3168, 0.0
      %v3201 = vmax.f32 %v3169, 0.0
      %3202 = vst [vmem:[#allocation2] sm:$0xff] 0.0
      %3203 = vst [vmem:[#allocation2 + $0x20] sm:$0xff] 0.0
      %3204 = vst [vmem:[#allocation2 + $0x40] sm:$0xff] 0.0
      %3205 = vst [vmem:[#allocation2 + $0x60] sm:$0xff] 0.0
      %3206 = vst [vmem:[#allocation2 + $0x80] sm:$0xff] 0.0
      %3207 = vst [vmem:[#allocation2 + $0xa0] sm:$0xff] 0.0
      %3208 = vst [vmem:[#allocation2 + $0xc0] sm:$0xff] 0.0
      %3209 = vst [vmem:[#allocation2 + $0xe0] sm:$0xff] 0.0
      %3210 = vst [vmem:[#allocation2 + $0x100] sm:$0xff] 0.0
      %3211 = vst [vmem:[#allocation2 + $0x120] sm:$0xff] 0.0
      %3212 = vst [vmem:[#allocation2 + $0x140] sm:$0xff] 0.0
      %3213 = vst [vmem:[#allocation2 + $0x160] sm:$0xff] 0.0
      %3214 = vst [vmem:[#allocation2 + $0x180] sm:$0xff] 0.0
      %3215 = vst [vmem:[#allocation2 + $0x1a0] sm:$0xff] 0.0
      %3216 = vst [vmem:[#allocation2 + $0x1c0] sm:$0xff] 0.0
      %3217 = vst [vmem:[#allocation2 + $0x1e0] sm:$0xff] 0.0
      %3218 = vst [vmem:[#allocation2 + $0x200] sm:$0xff] 0.0
      %3219 = vst [vmem:[#allocation2 + $0x220] sm:$0xff] 0.0
      %3220 = vst [vmem:[#allocation2 + $0x18] sm:$0xff] 0.0
      %3221 = vst [vmem:[#allocation2 + $0x38] sm:$0xff] 0.0
      %3222 = vst [vmem:[#allocation2 + $0x58] sm:$0xff] 0.0
      %3223 = vst [vmem:[#allocation2 + $0x78] sm:$0xff] 0.0
      %3224 = vst [vmem:[#allocation2 + $0x98] sm:$0xff] 0.0
      %3225 = vst [vmem:[#allocation2 + $0xb8] sm:$0xff] 0.0
      %3226 = vst [vmem:[#allocation2 + $0xd8] sm:$0xff] 0.0
      %3227 = vst [vmem:[#allocation2 + $0xf8] sm:$0xff] 0.0
      %3228 = vst [vmem:[#allocation2 + $0x118] sm:$0xff] 0.0
      %3229 = vst [vmem:[#allocation2 + $0x138] sm:$0xff] 0.0
      %3230 = vst [vmem:[#allocation2 + $0x158] sm:$0xff] 0.0
      %3231 = vst [vmem:[#allocation2 + $0x178] sm:$0xff] 0.0
      %3232 = vst [vmem:[#allocation2 + $0x198] sm:$0xff] 0.0
      %3233 = vst [vmem:[#allocation2 + $0x1b8] sm:$0xff] 0.0
      %3234 = vst [vmem:[#allocation2 + $0x1d8] sm:$0xff] 0.0
      %3235 = vst [vmem:[#allocation2 + $0x1f8] sm:$0xff] 0.0
      %3236 = vst [vmem:[#allocation2 + $0x218] sm:$0xff] 0.0
      %3237 = vst [vmem:[#allocation2 + $0x238] sm:$0xff] 0.0
      %3238 = vst [vmem:[#allocation2] sm:$0xff] 0.0
      %3239 = vst [vmem:[#allocation2 + $0x8] sm:$0xff] 0.0
      %3240 = vst [vmem:[#allocation2 + $0x10] sm:$0xff] 0.0
      %3241 = vst [vmem:[#allocation2 + $0x18] sm:$0xff] 0.0
      %s3242 = scalar_lea.vmem [#allocation2], 544
      %3243 = vst [vmem:[%s3242] sm:$0xff] 0.0
      %3244 = vst [vmem:[%s3242 + $0x8] sm:$0xff] 0.0
      %3245 = vst [vmem:[%s3242 + $0x10] sm:$0xff] 0.0
      %3246 = vst [vmem:[%s3242 + $0x18] sm:$0xff] 0.0
      %s3247 = scalar_lea.vmem [#allocation2], 32
      %3248 = vst [vmem:[%s3247 + $0x8] sm:$0xff] %v3170
      %3249 = vst [vmem:[%s3247 + $0x10] sm:$0xff] %v3171
      %3250 = vst [vmem:[%s3247 + $0x28] sm:$0xff] %v3172
      %3251 = vst [vmem:[%s3247 + $0x30] sm:$0xff] %v3173
      %3252 = vst [vmem:[%s3247 + $0x48] sm:$0xff] %v3174
      %3253 = vst [vmem:[%s3247 + $0x50] sm:$0xff] %v3175
      %3254 = vst [vmem:[%s3247 + $0x68] sm:$0xff] %v3176
      %3255 = vst [vmem:[%s3247 + $0x70] sm:$0xff] %v3177
      %3256 = vst [vmem:[%s3247 + $0x88] sm:$0xff] %v3178
      %3257 = vst [vmem:[%s3247 + $0x90] sm:$0xff] %v3179
      %3258 = vst [vmem:[%s3247 + $0xa8] sm:$0xff] %v3180
      %3259 = vst [vmem:[%s3247 + $0xb0] sm:$0xff] %v3181
      %3260 = vst [vmem:[%s3247 + $0xc8] sm:$0xff] %v3182
      %3261 = vst [vmem:[%s3247 + $0xd0] sm:$0xff] %v3183
      %3262 = vst [vmem:[%s3247 + $0xe8] sm:$0xff] %v3184
      %3263 = vst [vmem:[%s3247 + $0xf0] sm:$0xff] %v3185
      %3264 = vst [vmem:[%s3247 + $0x108] sm:$0xff] %v3186
      %3265 = vst [vmem:[%s3247 + $0x110] sm:$0xff] %v3187
      %3266 = vst [vmem:[%s3247 + $0x128] sm:$0xff] %v3188
      %3267 = vst [vmem:[%s3247 + $0x130] sm:$0xff] %v3189
      %3268 = vst [vmem:[%s3247 + $0x148] sm:$0xff] %v3190
      %3269 = vst [vmem:[%s3247 + $0x150] sm:$0xff] %v3191
      %3270 = vst [vmem:[%s3247 + $0x168] sm:$0xff] %v3192
      %3271 = vst [vmem:[%s3247 + $0x170] sm:$0xff] %v3193
      %3272 = vst [vmem:[%s3247 + $0x188] sm:$0xff] %v3194
      %3273 = vst [vmem:[%s3247 + $0x190] sm:$0xff] %v3195
      %3274 = vst [vmem:[%s3247 + $0x1a8] sm:$0xff] %v3196
      %3275 = vst [vmem:[%s3247 + $0x1b0] sm:$0xff] %v3197
      %3276 = vst [vmem:[%s3247 + $0x1c8] sm:$0xff] %v3198
      %3277 = vst [vmem:[%s3247 + $0x1d0] sm:$0xff] %v3199
      %3278 = vst [vmem:[%s3247 + $0x1e8] sm:$0xff] %v3200
      %3279 = vst [vmem:[%s3247 + $0x1f0] sm:$0xff] %v3201
      %v3280 = vld [vmem:[#allocation2 + $0x7] sm:$0xff]
      %v3281 = vld [vmem:[#allocation2 + $0xf] sm:$0xff]
      %v3282 = vld [vmem:[#allocation2 + $0x27] sm:$0xff]
      %v3283 = vld [vmem:[#allocation2 + $0x2f] sm:$0xff]
      %v3284 = vld [vmem:[#allocation2 + $0x47] sm:$0xff]
      %v3285 = vld [vmem:[#allocation2 + $0x4f] sm:$0xff]
      %v3286 = vld [vmem:[#allocation2 + $0x67] sm:$0xff]
      %v3287 = vld [vmem:[#allocation2 + $0x6f] sm:$0xff]
      %v3288 = vld [vmem:[#allocation2 + $0x87] sm:$0xff]
      %v3289 = vld [vmem:[#allocation2 + $0x8f] sm:$0xff]
      %v3290 = vld [vmem:[#allocation2 + $0xa7] sm:$0xff]
      %v3291 = vld [vmem:[#allocation2 + $0xaf] sm:$0xff]
      %v3292 = vld [vmem:[#allocation2 + $0xc7] sm:$0xff]
      %v3293 = vld [vmem:[#allocation2 + $0xcf] sm:$0xff]
      %v3294 = vld [vmem:[#allocation2 + $0xe7] sm:$0xff]
      %v3295 = vld [vmem:[#allocation2 + $0xef] sm:$0xff]
      %v3296 = vld [vmem:[#allocation2 + $0x107] sm:$0xff]
      %v3297 = vld [vmem:[#allocation2 + $0x10f] sm:$0xff]
      %v3298 = vld [vmem:[#allocation2 + $0x127] sm:$0xff]
      %v3299 = vld [vmem:[#allocation2 + $0x12f] sm:$0xff]
      %v3300 = vld [vmem:[#allocation2 + $0x147] sm:$0xff]
      %v3301 = vld [vmem:[#allocation2 + $0x14f] sm:$0xff]
      %v3302 = vld [vmem:[#allocation2 + $0x167] sm:$0xff]
      %v3303 = vld [vmem:[#allocation2 + $0x16f] sm:$0xff]
      %v3304 = vld [vmem:[#allocation2 + $0x187] sm:$0xff]
      %v3305 = vld [vmem:[#allocation2 + $0x18f] sm:$0xff]
      %v3306 = vld [vmem:[#allocation2 + $0x1a7] sm:$0xff]
      %v3307 = vld [vmem:[#allocation2 + $0x1af] sm:$0xff]
      %v3308 = vld [vmem:[#allocation2 + $0x1c7] sm:$0xff]
      %v3309 = vld [vmem:[#allocation2 + $0x1cf] sm:$0xff]
      %v3310 = vld [vmem:[#allocation2 + $0x1e7] sm:$0xff]
      %v3311 = vld [vmem:[#allocation2 + $0x1ef] sm:$0xff]
      %v3312 = vpack.c.bf16 %v3280, %v3280
      %v3313 = vpack.c.bf16 %v3281, %v3281
      %v3314 = vpack.c.bf16 %v3282, %v3282
      %v3315 = vpack.c.bf16 %v3283, %v3283
      %v3316 = vpack.c.bf16 %v3284, %v3284
      %v3317 = vpack.c.bf16 %v3285, %v3285
      %v3318 = vpack.c.bf16 %v3286, %v3286
      %v3319 = vpack.c.bf16 %v3287, %v3287
      %v3320 = vpack.c.bf16 %v3288, %v3288
      %v3321 = vpack.c.bf16 %v3289, %v3289
      %v3322 = vpack.c.bf16 %v3290, %v3290
      %v3323 = vpack.c.bf16 %v3291, %v3291
      %v3324 = vpack.c.bf16 %v3292, %v3292
      %v3325 = vpack.c.bf16 %v3293, %v3293
      %v3326 = vpack.c.bf16 %v3294, %v3294
      %v3327 = vpack.c.bf16 %v3295, %v3295
      %v3328 = vpack.c.bf16 %v3296, %v3296
      %v3329 = vpack.c.bf16 %v3297, %v3297
      %v3330 = vpack.c.bf16 %v3298, %v3298
      %v3331 = vpack.c.bf16 %v3299, %v3299
      %v3332 = vpack.c.bf16 %v3300, %v3300
      %v3333 = vpack.c.bf16 %v3301, %v3301
      %v3334 = vpack.c.bf16 %v3302, %v3302
      %v3335 = vpack.c.bf16 %v3303, %v3303
      %v3336 = vpack.c.bf16 %v3304, %v3304
      %v3337 = vpack.c.bf16 %v3305, %v3305
      %v3338 = vpack.c.bf16 %v3306, %v3306
      %v3339 = vpack.c.bf16 %v3307, %v3307
      %v3340 = vpack.c.bf16 %v3308, %v3308
      %v3341 = vpack.c.bf16 %v3309, %v3309
      %v3342 = vpack.c.bf16 %v3310, %v3310
      %v3343 = vpack.c.bf16 %v3311, %v3311
      %v3344 = vld [vmem:[#allocation2 + $0x8] sm:$0xff]
      %v3345 = vld [vmem:[#allocation2 + $0x10] sm:$0xff]
      %v3346 = vld [vmem:[#allocation2 + $0x28] sm:$0xff]
      %v3347 = vld [vmem:[#allocation2 + $0x30] sm:$0xff]
      %v3348 = vld [vmem:[#allocation2 + $0x48] sm:$0xff]
      %v3349 = vld [vmem:[#allocation2 + $0x50] sm:$0xff]
      %v3350 = vld [vmem:[#allocation2 + $0x68] sm:$0xff]
      %v3351 = vld [vmem:[#allocation2 + $0x70] sm:$0xff]
      %v3352 = vld [vmem:[#allocation2 + $0x88] sm:$0xff]
      %v3353 = vld [vmem:[#allocation2 + $0x90] sm:$0xff]
      %v3354 = vld [vmem:[#allocation2 + $0xa8] sm:$0xff]
      %v3355 = vld [vmem:[#allocation2 + $0xb0] sm:$0xff]
      %v3356 = vld [vmem:[#allocation2 + $0xc8] sm:$0xff]
      %v3357 = vld [vmem:[#allocation2 + $0xd0] sm:$0xff]
      %v3358 = vld [vmem:[#allocation2 + $0xe8] sm:$0xff]
      %v3359 = vld [vmem:[#allocation2 + $0xf0] sm:$0xff]
      %v3360 = vld [vmem:[#allocation2 + $0x108] sm:$0xff]
      %v3361 = vld [vmem:[#allocation2 + $0x110] sm:$0xff]
      %v3362 = vld [vmem:[#allocation2 + $0x128] sm:$0xff]
      %v3363 = vld [vmem:[#allocation2 + $0x130] sm:$0xff]
      %v3364 = vld [vmem:[#allocation2 + $0x148] sm:$0xff]
      %v3365 = vld [vmem:[#allocation2 + $0x150] sm:$0xff]
      %v3366 = vld [vmem:[#allocation2 + $0x168] sm:$0xff]
      %v3367 = vld [vmem:[#allocation2 + $0x170] sm:$0xff]
      %v3368 = vld [vmem:[#allocation2 + $0x188] sm:$0xff]
      %v3369 = vld [vmem:[#allocation2 + $0x190] sm:$0xff]
      %v3370 = vld [vmem:[#allocation2 + $0x1a8] sm:$0xff]
      %v3371 = vld [vmem:[#allocation2 + $0x1b0] sm:$0xff]
      %v3372 = vld [vmem:[#allocation2 + $0x1c8] sm:$0xff]
      %v3373 = vld [vmem:[#allocation2 + $0x1d0] sm:$0xff]
      %v3374 = vld [vmem:[#allocation2 + $0x1e8] sm:$0xff]
      %v3375 = vld [vmem:[#allocation2 + $0x1f0] sm:$0xff]
      %v3376 = vpack.c.bf16 %v3344, %v3344
      %v3377 = vpack.c.bf16 %v3345, %v3345
      %v3378 = vpack.c.bf16 %v3346, %v3346
      %v3379 = vpack.c.bf16 %v3347, %v3347
      %v3380 = vpack.c.bf16 %v3348, %v3348
      %v3381 = vpack.c.bf16 %v3349, %v3349
      %v3382 = vpack.c.bf16 %v3350, %v3350
      %v3383 = vpack.c.bf16 %v3351, %v3351
      %v3384 = vpack.c.bf16 %v3352, %v3352
      %v3385 = vpack.c.bf16 %v3353, %v3353
      %v3386 = vpack.c.bf16 %v3354, %v3354
      %v3387 = vpack.c.bf16 %v3355, %v3355
      %v3388 = vpack.c.bf16 %v3356, %v3356
      %v3389 = vpack.c.bf16 %v3357, %v3357
      %v3390 = vpack.c.bf16 %v3358, %v3358
      %v3391 = vpack.c.bf16 %v3359, %v3359
      %v3392 = vpack.c.bf16 %v3360, %v3360
      %v3393 = vpack.c.bf16 %v3361, %v3361
      %v3394 = vpack.c.bf16 %v3362, %v3362
      %v3395 = vpack.c.bf16 %v3363, %v3363
      %v3396 = vpack.c.bf16 %v3364, %v3364
      %v3397 = vpack.c.bf16 %v3365, %v3365
      %v3398 = vpack.c.bf16 %v3366, %v3366
      %v3399 = vpack.c.bf16 %v3367, %v3367
      %v3400 = vpack.c.bf16 %v3368, %v3368
      %v3401 = vpack.c.bf16 %v3369, %v3369
      %v3402 = vpack.c.bf16 %v3370, %v3370
      %v3403 = vpack.c.bf16 %v3371, %v3371
      %v3404 = vpack.c.bf16 %v3372, %v3372
      %v3405 = vpack.c.bf16 %v3373, %v3373
      %v3406 = vpack.c.bf16 %v3374, %v3374
      %v3407 = vpack.c.bf16 %v3375, %v3375
      %v3408 = vld [vmem:[#allocation2 + $0x9] sm:$0xff]
      %v3409 = vld [vmem:[#allocation2 + $0x11] sm:$0xff]
      %v3410 = vld [vmem:[#allocation2 + $0x29] sm:$0xff]
      %v3411 = vld [vmem:[#allocation2 + $0x31] sm:$0xff]
      %v3412 = vld [vmem:[#allocation2 + $0x49] sm:$0xff]
      %v3413 = vld [vmem:[#allocation2 + $0x51] sm:$0xff]
      %v3414 = vld [vmem:[#allocation2 + $0x69] sm:$0xff]
      %v3415 = vld [vmem:[#allocation2 + $0x71] sm:$0xff]
      %v3416 = vld [vmem:[#allocation2 + $0x89] sm:$0xff]
      %v3417 = vld [vmem:[#allocation2 + $0x91] sm:$0xff]
      %v3418 = vld [vmem:[#allocation2 + $0xa9] sm:$0xff]
      %v3419 = vld [vmem:[#allocation2 + $0xb1] sm:$0xff]
      %v3420 = vld [vmem:[#allocation2 + $0xc9] sm:$0xff]
      %v3421 = vld [vmem:[#allocation2 + $0xd1] sm:$0xff]
      %v3422 = vld [vmem:[#allocation2 + $0xe9] sm:$0xff]
      %v3423 = vld [vmem:[#allocation2 + $0xf1] sm:$0xff]
      %v3424 = vld [vmem:[#allocation2 + $0x109] sm:$0xff]
      %v3425 = vld [vmem:[#allocation2 + $0x111] sm:$0xff]
      %v3426 = vld [vmem:[#allocation2 + $0x129] sm:$0xff]
      %v3427 = vld [vmem:[#allocation2 + $0x131] sm:$0xff]
      %v3428 = vld [vmem:[#allocation2 + $0x149] sm:$0xff]
      %v3429 = vld [vmem:[#allocation2 + $0x151] sm:$0xff]
      %v3430 = vld [vmem:[#allocation2 + $0x169] sm:$0xff]
      %v3431 = vld [vmem:[#allocation2 + $0x171] sm:$0xff]
      %v3432 = vld [vmem:[#allocation2 + $0x189] sm:$0xff]
      %v3433 = vld [vmem:[#allocation2 + $0x191] sm:$0xff]
      %v3434 = vld [vmem:[#allocation2 + $0x1a9] sm:$0xff]
      %v3435 = vld [vmem:[#allocation2 + $0x1b1] sm:$0xff]
      %v3436 = vld [vmem:[#allocation2 + $0x1c9] sm:$0xff]
      %v3437 = vld [vmem:[#allocation2 + $0x1d1] sm:$0xff]
      %v3438 = vld [vmem:[#allocation2 + $0x1e9] sm:$0xff]
      %v3439 = vld [vmem:[#allocation2 + $0x1f1] sm:$0xff]
      %v3440 = vpack.c.bf16 %v3408, %v3408
      %v3441 = vpack.c.bf16 %v3409, %v3409
      %v3442 = vpack.c.bf16 %v3410, %v3410
      %v3443 = vpack.c.bf16 %v3411, %v3411
      %v3444 = vpack.c.bf16 %v3412, %v3412
      %v3445 = vpack.c.bf16 %v3413, %v3413
      %v3446 = vpack.c.bf16 %v3414, %v3414
      %v3447 = vpack.c.bf16 %v3415, %v3415
      %v3448 = vpack.c.bf16 %v3416, %v3416
      %v3449 = vpack.c.bf16 %v3417, %v3417
      %v3450 = vpack.c.bf16 %v3418, %v3418
      %v3451 = vpack.c.bf16 %v3419, %v3419
      %v3452 = vpack.c.bf16 %v3420, %v3420
      %v3453 = vpack.c.bf16 %v3421, %v3421
      %v3454 = vpack.c.bf16 %v3422, %v3422
      %v3455 = vpack.c.bf16 %v3423, %v3423
      %v3456 = vpack.c.bf16 %v3424, %v3424
      %v3457 = vpack.c.bf16 %v3425, %v3425
      %v3458 = vpack.c.bf16 %v3426, %v3426
      %v3459 = vpack.c.bf16 %v3427, %v3427
      %v3460 = vpack.c.bf16 %v3428, %v3428
      %v3461 = vpack.c.bf16 %v3429, %v3429
      %v3462 = vpack.c.bf16 %v3430, %v3430
      %v3463 = vpack.c.bf16 %v3431, %v3431
      %v3464 = vpack.c.bf16 %v3432, %v3432
      %v3465 = vpack.c.bf16 %v3433, %v3433
      %v3466 = vpack.c.bf16 %v3434, %v3434
      %v3467 = vpack.c.bf16 %v3435, %v3435
      %v3468 = vpack.c.bf16 %v3436, %v3436
      %v3469 = vpack.c.bf16 %v3437, %v3437
      %v3470 = vpack.c.bf16 %v3438, %v3438
      %v3471 = vpack.c.bf16 %v3439, %v3439
      %v3472 = vld [vmem:[%s3247 + $0x7] sm:$0xff]
      %v3473 = vld [vmem:[%s3247 + $0xf] sm:$0xff]
      %v3474 = vld [vmem:[%s3247 + $0x27] sm:$0xff]
      %v3475 = vld [vmem:[%s3247 + $0x2f] sm:$0xff]
      %v3476 = vld [vmem:[%s3247 + $0x47] sm:$0xff]
      %v3477 = vld [vmem:[%s3247 + $0x4f] sm:$0xff]
      %v3478 = vld [vmem:[%s3247 + $0x67] sm:$0xff]
      %v3479 = vld [vmem:[%s3247 + $0x6f] sm:$0xff]
      %v3480 = vld [vmem:[%s3247 + $0x87] sm:$0xff]
      %v3481 = vld [vmem:[%s3247 + $0x8f] sm:$0xff]
      %v3482 = vld [vmem:[%s3247 + $0xa7] sm:$0xff]
      %v3483 = vld [vmem:[%s3247 + $0xaf] sm:$0xff]
      %v3484 = vld [vmem:[%s3247 + $0xc7] sm:$0xff]
      %v3485 = vld [vmem:[%s3247 + $0xcf] sm:$0xff]
      %v3486 = vld [vmem:[%s3247 + $0xe7] sm:$0xff]
      %v3487 = vld [vmem:[%s3247 + $0xef] sm:$0xff]
      %v3488 = vld [vmem:[%s3247 + $0x107] sm:$0xff]
      %v3489 = vld [vmem:[%s3247 + $0x10f] sm:$0xff]
      %v3490 = vld [vmem:[%s3247 + $0x127] sm:$0xff]
      %v3491 = vld [vmem:[%s3247 + $0x12f] sm:$0xff]
      %v3492 = vld [vmem:[%s3247 + $0x147] sm:$0xff]
      %v3493 = vld [vmem:[%s3247 + $0x14f] sm:$0xff]
      %v3494 = vld [vmem:[%s3247 + $0x167] sm:$0xff]
      %v3495 = vld [vmem:[%s3247 + $0x16f] sm:$0xff]
      %v3496 = vld [vmem:[%s3247 + $0x187] sm:$0xff]
      %v3497 = vld [vmem:[%s3247 + $0x18f] sm:$0xff]
      %v3498 = vld [vmem:[%s3247 + $0x1a7] sm:$0xff]
      %v3499 = vld [vmem:[%s3247 + $0x1af] sm:$0xff]
      %v3500 = vld [vmem:[%s3247 + $0x1c7] sm:$0xff]
      %v3501 = vld [vmem:[%s3247 + $0x1cf] sm:$0xff]
      %v3502 = vld [vmem:[%s3247 + $0x1e7] sm:$0xff]
      %v3503 = vld [vmem:[%s3247 + $0x1ef] sm:$0xff]
      %v3504 = vpack.c.bf16 %v3472, %v3472
      %v3505 = vpack.c.bf16 %v3473, %v3473
      %v3506 = vpack.c.bf16 %v3474, %v3474
      %v3507 = vpack.c.bf16 %v3475, %v3475
      %v3508 = vpack.c.bf16 %v3476, %v3476
      %v3509 = vpack.c.bf16 %v3477, %v3477
      %v3510 = vpack.c.bf16 %v3478, %v3478
      %v3511 = vpack.c.bf16 %v3479, %v3479
      %v3512 = vpack.c.bf16 %v3480, %v3480
      %v3513 = vpack.c.bf16 %v3481, %v3481
      %v3514 = vpack.c.bf16 %v3482, %v3482
      %v3515 = vpack.c.bf16 %v3483, %v3483
      %v3516 = vpack.c.bf16 %v3484, %v3484
      %v3517 = vpack.c.bf16 %v3485, %v3485
      %v3518 = vpack.c.bf16 %v3486, %v3486
      %v3519 = vpack.c.bf16 %v3487, %v3487
      %v3520 = vpack.c.bf16 %v3488, %v3488
      %v3521 = vpack.c.bf16 %v3489, %v3489
      %v3522 = vpack.c.bf16 %v3490, %v3490
      %v3523 = vpack.c.bf16 %v3491, %v3491
      %v3524 = vpack.c.bf16 %v3492, %v3492
      %v3525 = vpack.c.bf16 %v3493, %v3493
      %v3526 = vpack.c.bf16 %v3494, %v3494
      %v3527 = vpack.c.bf16 %v3495, %v3495
      %v3528 = vpack.c.bf16 %v3496, %v3496
      %v3529 = vpack.c.bf16 %v3497, %v3497
      %v3530 = vpack.c.bf16 %v3498, %v3498
      %v3531 = vpack.c.bf16 %v3499, %v3499
      %v3532 = vpack.c.bf16 %v3500, %v3500
      %v3533 = vpack.c.bf16 %v3501, %v3501
      %v3534 = vpack.c.bf16 %v3502, %v3502
      %v3535 = vpack.c.bf16 %v3503, %v3503
      %v3536 = vpack.c.bf16 %v3170, %v3170
      %v3537 = vpack.c.bf16 %v3171, %v3171
      %v3538 = vpack.c.bf16 %v3172, %v3172
      %v3539 = vpack.c.bf16 %v3173, %v3173
      %v3540 = vpack.c.bf16 %v3174, %v3174
      %v3541 = vpack.c.bf16 %v3175, %v3175
      %v3542 = vpack.c.bf16 %v3176, %v3176
      %v3543 = vpack.c.bf16 %v3177, %v3177
      %v3544 = vpack.c.bf16 %v3178, %v3178
      %v3545 = vpack.c.bf16 %v3179, %v3179
      %v3546 = vpack.c.bf16 %v3180, %v3180
      %v3547 = vpack.c.bf16 %v3181, %v3181
      %v3548 = vpack.c.bf16 %v3182, %v3182
      %v3549 = vpack.c.bf16 %v3183, %v3183
      %v3550 = vpack.c.bf16 %v3184, %v3184
      %v3551 = vpack.c.bf16 %v3185, %v3185
      %v3552 = vpack.c.bf16 %v3186, %v3186
      %v3553 = vpack.c.bf16 %v3187, %v3187
      %v3554 = vpack.c.bf16 %v3188, %v3188
      %v3555 = vpack.c.bf16 %v3189, %v3189
      %v3556 = vpack.c.bf16 %v3190, %v3190
      %v3557 = vpack.c.bf16 %v3191, %v3191
      %v3558 = vpack.c.bf16 %v3192, %v3192
      %v3559 = vpack.c.bf16 %v3193, %v3193
      %v3560 = vpack.c.bf16 %v3194, %v3194
      %v3561 = vpack.c.bf16 %v3195, %v3195
      %v3562 = vpack.c.bf16 %v3196, %v3196
      %v3563 = vpack.c.bf16 %v3197, %v3197
      %v3564 = vpack.c.bf16 %v3198, %v3198
      %v3565 = vpack.c.bf16 %v3199, %v3199
      %v3566 = vpack.c.bf16 %v3200, %v3200
      %v3567 = vpack.c.bf16 %v3201, %v3201
      %v3568 = vld [vmem:[%s3247 + $0x9] sm:$0xff]
      %v3569 = vld [vmem:[%s3247 + $0x11] sm:$0xff]
      %v3570 = vld [vmem:[%s3247 + $0x29] sm:$0xff]
      %v3571 = vld [vmem:[%s3247 + $0x31] sm:$0xff]
      %v3572 = vld [vmem:[%s3247 + $0x49] sm:$0xff]
      %v3573 = vld [vmem:[%s3247 + $0x51] sm:$0xff]
      %v3574 = vld [vmem:[%s3247 + $0x69] sm:$0xff]
      %v3575 = vld [vmem:[%s3247 + $0x71] sm:$0xff]
      %v3576 = vld [vmem:[%s3247 + $0x89] sm:$0xff]
      %v3577 = vld [vmem:[%s3247 + $0x91] sm:$0xff]
      %v3578 = vld [vmem:[%s3247 + $0xa9] sm:$0xff]
      %v3579 = vld [vmem:[%s3247 + $0xb1] sm:$0xff]
      %v3580 = vld [vmem:[%s3247 + $0xc9] sm:$0xff]
      %v3581 = vld [vmem:[%s3247 + $0xd1] sm:$0xff]
      %v3582 = vld [vmem:[%s3247 + $0xe9] sm:$0xff]
      %v3583 = vld [vmem:[%s3247 + $0xf1] sm:$0xff]
      %v3584 = vld [vmem:[%s3247 + $0x109] sm:$0xff]
      %v3585 = vld [vmem:[%s3247 + $0x111] sm:$0xff]
      %v3586 = vld [vmem:[%s3247 + $0x129] sm:$0xff]
      %v3587 = vld [vmem:[%s3247 + $0x131] sm:$0xff]
      %v3588 = vld [vmem:[%s3247 + $0x149] sm:$0xff]
      %v3589 = vld [vmem:[%s3247 + $0x151] sm:$0xff]
      %v3590 = vld [vmem:[%s3247 + $0x169] sm:$0xff]
      %v3591 = vld [vmem:[%s3247 + $0x171] sm:$0xff]
      %v3592 = vld [vmem:[%s3247 + $0x189] sm:$0xff]
      %v3593 = vld [vmem:[%s3247 + $0x191] sm:$0xff]
      %v3594 = vld [vmem:[%s3247 + $0x1a9] sm:$0xff]
      %v3595 = vld [vmem:[%s3247 + $0x1b1] sm:$0xff]
      %v3596 = vld [vmem:[%s3247 + $0x1c9] sm:$0xff]
      %v3597 = vld [vmem:[%s3247 + $0x1d1] sm:$0xff]
      %v3598 = vld [vmem:[%s3247 + $0x1e9] sm:$0xff]
      %v3599 = vld [vmem:[%s3247 + $0x1f1] sm:$0xff]
      %v3600 = vpack.c.bf16 %v3568, %v3568
      %v3601 = vpack.c.bf16 %v3569, %v3569
      %v3602 = vpack.c.bf16 %v3570, %v3570
      %v3603 = vpack.c.bf16 %v3571, %v3571
      %v3604 = vpack.c.bf16 %v3572, %v3572
      %v3605 = vpack.c.bf16 %v3573, %v3573
      %v3606 = vpack.c.bf16 %v3574, %v3574
      %v3607 = vpack.c.bf16 %v3575, %v3575
      %v3608 = vpack.c.bf16 %v3576, %v3576
      %v3609 = vpack.c.bf16 %v3577, %v3577
      %v3610 = vpack.c.bf16 %v3578, %v3578
      %v3611 = vpack.c.bf16 %v3579, %v3579
      %v3612 = vpack.c.bf16 %v3580, %v3580
      %v3613 = vpack.c.bf16 %v3581, %v3581
      %v3614 = vpack.c.bf16 %v3582, %v3582
      %v3615 = vpack.c.bf16 %v3583, %v3583
      %v3616 = vpack.c.bf16 %v3584, %v3584
      %v3617 = vpack.c.bf16 %v3585, %v3585
      %v3618 = vpack.c.bf16 %v3586, %v3586
      %v3619 = vpack.c.bf16 %v3587, %v3587
      %v3620 = vpack.c.bf16 %v3588, %v3588
      %v3621 = vpack.c.bf16 %v3589, %v3589
      %v3622 = vpack.c.bf16 %v3590, %v3590
      %v3623 = vpack.c.bf16 %v3591, %v3591
      %v3624 = vpack.c.bf16 %v3592, %v3592
      %v3625 = vpack.c.bf16 %v3593, %v3593
      %v3626 = vpack.c.bf16 %v3594, %v3594
      %v3627 = vpack.c.bf16 %v3595, %v3595
      %v3628 = vpack.c.bf16 %v3596, %v3596
      %v3629 = vpack.c.bf16 %v3597, %v3597
      %v3630 = vpack.c.bf16 %v3598, %v3598
      %v3631 = vpack.c.bf16 %v3599, %v3599
      %s3632 = scalar_lea.vmem [#allocation2], 64
      %v3633 = vld [vmem:[%s3632 + $0x7] sm:$0xff]
      %v3634 = vld [vmem:[%s3632 + $0xf] sm:$0xff]
      %v3635 = vld [vmem:[%s3632 + $0x27] sm:$0xff]
      %v3636 = vld [vmem:[%s3632 + $0x2f] sm:$0xff]
      %v3637 = vld [vmem:[%s3632 + $0x47] sm:$0xff]
      %v3638 = vld [vmem:[%s3632 + $0x4f] sm:$0xff]
      %v3639 = vld [vmem:[%s3632 + $0x67] sm:$0xff]
      %v3640 = vld [vmem:[%s3632 + $0x6f] sm:$0xff]
      %v3641 = vld [vmem:[%s3632 + $0x87] sm:$0xff]
      %v3642 = vld [vmem:[%s3632 + $0x8f] sm:$0xff]
      %v3643 = vld [vmem:[%s3632 + $0xa7] sm:$0xff]
      %v3644 = vld [vmem:[%s3632 + $0xaf] sm:$0xff]
      %v3645 = vld [vmem:[%s3632 + $0xc7] sm:$0xff]
      %v3646 = vld [vmem:[%s3632 + $0xcf] sm:$0xff]
      %v3647 = vld [vmem:[%s3632 + $0xe7] sm:$0xff]
      %v3648 = vld [vmem:[%s3632 + $0xef] sm:$0xff]
      %v3649 = vld [vmem:[%s3632 + $0x107] sm:$0xff]
      %v3650 = vld [vmem:[%s3632 + $0x10f] sm:$0xff]
      %v3651 = vld [vmem:[%s3632 + $0x127] sm:$0xff]
      %v3652 = vld [vmem:[%s3632 + $0x12f] sm:$0xff]
      %v3653 = vld [vmem:[%s3632 + $0x147] sm:$0xff]
      %v3654 = vld [vmem:[%s3632 + $0x14f] sm:$0xff]
      %v3655 = vld [vmem:[%s3632 + $0x167] sm:$0xff]
      %v3656 = vld [vmem:[%s3632 + $0x16f] sm:$0xff]
      %v3657 = vld [vmem:[%s3632 + $0x187] sm:$0xff]
      %v3658 = vld [vmem:[%s3632 + $0x18f] sm:$0xff]
      %v3659 = vld [vmem:[%s3632 + $0x1a7] sm:$0xff]
      %v3660 = vld [vmem:[%s3632 + $0x1af] sm:$0xff]
      %v3661 = vld [vmem:[%s3632 + $0x1c7] sm:$0xff]
      %v3662 = vld [vmem:[%s3632 + $0x1cf] sm:$0xff]
      %v3663 = vld [vmem:[%s3632 + $0x1e7] sm:$0xff]
      %v3664 = vld [vmem:[%s3632 + $0x1ef] sm:$0xff]
      %v3665 = vpack.c.bf16 %v3633, %v3633
      %v3666 = vpack.c.bf16 %v3634, %v3634
      %v3667 = vpack.c.bf16 %v3635, %v3635
      %v3668 = vpack.c.bf16 %v3636, %v3636
      %v3669 = vpack.c.bf16 %v3637, %v3637
      %v3670 = vpack.c.bf16 %v3638, %v3638
      %v3671 = vpack.c.bf16 %v3639, %v3639
      %v3672 = vpack.c.bf16 %v3640, %v3640
      %v3673 = vpack.c.bf16 %v3641, %v3641
      %v3674 = vpack.c.bf16 %v3642, %v3642
      %v3675 = vpack.c.bf16 %v3643, %v3643
      %v3676 = vpack.c.bf16 %v3644, %v3644
      %v3677 = vpack.c.bf16 %v3645, %v3645
      %v3678 = vpack.c.bf16 %v3646, %v3646
      %v3679 = vpack.c.bf16 %v3647, %v3647
      %v3680 = vpack.c.bf16 %v3648, %v3648
      %v3681 = vpack.c.bf16 %v3649, %v3649
      %v3682 = vpack.c.bf16 %v3650, %v3650
      %v3683 = vpack.c.bf16 %v3651, %v3651
      %v3684 = vpack.c.bf16 %v3652, %v3652
      %v3685 = vpack.c.bf16 %v3653, %v3653
      %v3686 = vpack.c.bf16 %v3654, %v3654
      %v3687 = vpack.c.bf16 %v3655, %v3655
      %v3688 = vpack.c.bf16 %v3656, %v3656
      %v3689 = vpack.c.bf16 %v3657, %v3657
      %v3690 = vpack.c.bf16 %v3658, %v3658
      %v3691 = vpack.c.bf16 %v3659, %v3659
      %v3692 = vpack.c.bf16 %v3660, %v3660
      %v3693 = vpack.c.bf16 %v3661, %v3661
      %v3694 = vpack.c.bf16 %v3662, %v3662
      %v3695 = vpack.c.bf16 %v3663, %v3663
      %v3696 = vpack.c.bf16 %v3664, %v3664
      %v3697 = vld [vmem:[%s3632 + $0x8] sm:$0xff]
      %v3698 = vld [vmem:[%s3632 + $0x10] sm:$0xff]
      %v3699 = vld [vmem:[%s3632 + $0x28] sm:$0xff]
      %v3700 = vld [vmem:[%s3632 + $0x30] sm:$0xff]
      %v3701 = vld [vmem:[%s3632 + $0x48] sm:$0xff]
      %v3702 = vld [vmem:[%s3632 + $0x50] sm:$0xff]
      %v3703 = vld [vmem:[%s3632 + $0x68] sm:$0xff]
      %v3704 = vld [vmem:[%s3632 + $0x70] sm:$0xff]
      %v3705 = vld [vmem:[%s3632 + $0x88] sm:$0xff]
      %v3706 = vld [vmem:[%s3632 + $0x90] sm:$0xff]
      %v3707 = vld [vmem:[%s3632 + $0xa8] sm:$0xff]
      %v3708 = vld [vmem:[%s3632 + $0xb0] sm:$0xff]
      %v3709 = vld [vmem:[%s3632 + $0xc8] sm:$0xff]
      %v3710 = vld [vmem:[%s3632 + $0xd0] sm:$0xff]
      %v3711 = vld [vmem:[%s3632 + $0xe8] sm:$0xff]
      %v3712 = vld [vmem:[%s3632 + $0xf0] sm:$0xff]
      %v3713 = vld [vmem:[%s3632 + $0x108] sm:$0xff]
      %v3714 = vld [vmem:[%s3632 + $0x110] sm:$0xff]
      %v3715 = vld [vmem:[%s3632 + $0x128] sm:$0xff]
      %v3716 = vld [vmem:[%s3632 + $0x130] sm:$0xff]
      %v3717 = vld [vmem:[%s3632 + $0x148] sm:$0xff]
      %v3718 = vld [vmem:[%s3632 + $0x150] sm:$0xff]
      %v3719 = vld [vmem:[%s3632 + $0x168] sm:$0xff]
      %v3720 = vld [vmem:[%s3632 + $0x170] sm:$0xff]
      %v3721 = vld [vmem:[%s3632 + $0x188] sm:$0xff]
      %v3722 = vld [vmem:[%s3632 + $0x190] sm:$0xff]
      %v3723 = vld [vmem:[%s3632 + $0x1a8] sm:$0xff]
      %v3724 = vld [vmem:[%s3632 + $0x1b0] sm:$0xff]
      %v3725 = vld [vmem:[%s3632 + $0x1c8] sm:$0xff]
      %v3726 = vld [vmem:[%s3632 + $0x1d0] sm:$0xff]
      %v3727 = vld [vmem:[%s3632 + $0x1e8] sm:$0xff]
      %v3728 = vld [vmem:[%s3632 + $0x1f0] sm:$0xff]
      %v3729 = vpack.c.bf16 %v3697, %v3697
      %v3730 = vpack.c.bf16 %v3698, %v3698
      %v3731 = vpack.c.bf16 %v3699, %v3699
      %v3732 = vpack.c.bf16 %v3700, %v3700
      %v3733 = vpack.c.bf16 %v3701, %v3701
      %v3734 = vpack.c.bf16 %v3702, %v3702
      %v3735 = vpack.c.bf16 %v3703, %v3703
      %v3736 = vpack.c.bf16 %v3704, %v3704
      %v3737 = vpack.c.bf16 %v3705, %v3705
      %v3738 = vpack.c.bf16 %v3706, %v3706
      %v3739 = vpack.c.bf16 %v3707, %v3707
      %v3740 = vpack.c.bf16 %v3708, %v3708
      %v3741 = vpack.c.bf16 %v3709, %v3709
      %v3742 = vpack.c.bf16 %v3710, %v3710
      %v3743 = vpack.c.bf16 %v3711, %v3711
      %v3744 = vpack.c.bf16 %v3712, %v3712
      %v3745 = vpack.c.bf16 %v3713, %v3713
      %v3746 = vpack.c.bf16 %v3714, %v3714
      %v3747 = vpack.c.bf16 %v3715, %v3715
      %v3748 = vpack.c.bf16 %v3716, %v3716
      %v3749 = vpack.c.bf16 %v3717, %v3717
      %v3750 = vpack.c.bf16 %v3718, %v3718
      %v3751 = vpack.c.bf16 %v3719, %v3719
      %v3752 = vpack.c.bf16 %v3720, %v3720
      %v3753 = vpack.c.bf16 %v3721, %v3721
      %v3754 = vpack.c.bf16 %v3722, %v3722
      %v3755 = vpack.c.bf16 %v3723, %v3723
      %v3756 = vpack.c.bf16 %v3724, %v3724
      %v3757 = vpack.c.bf16 %v3725, %v3725
      %v3758 = vpack.c.bf16 %v3726, %v3726
      %v3759 = vpack.c.bf16 %v3727, %v3727
      %v3760 = vpack.c.bf16 %v3728, %v3728
      %v3761 = vld [vmem:[%s3632 + $0x9] sm:$0xff]
      %v3762 = vld [vmem:[%s3632 + $0x11] sm:$0xff]
      %v3763 = vld [vmem:[%s3632 + $0x29] sm:$0xff]
      %v3764 = vld [vmem:[%s3632 + $0x31] sm:$0xff]
      %v3765 = vld [vmem:[%s3632 + $0x49] sm:$0xff]
      %v3766 = vld [vmem:[%s3632 + $0x51] sm:$0xff]
      %v3767 = vld [vmem:[%s3632 + $0x69] sm:$0xff]
      %v3768 = vld [vmem:[%s3632 + $0x71] sm:$0xff]
      %v3769 = vld [vmem:[%s3632 + $0x89] sm:$0xff]
      %v3770 = vld [vmem:[%s3632 + $0x91] sm:$0xff]
      %v3771 = vld [vmem:[%s3632 + $0xa9] sm:$0xff]
      %v3772 = vld [vmem:[%s3632 + $0xb1] sm:$0xff]
      %v3773 = vld [vmem:[%s3632 + $0xc9] sm:$0xff]
      %v3774 = vld [vmem:[%s3632 + $0xd1] sm:$0xff]
      %v3775 = vld [vmem:[%s3632 + $0xe9] sm:$0xff]
      %v3776 = vld [vmem:[%s3632 + $0xf1] sm:$0xff]
      %v3777 = vld [vmem:[%s3632 + $0x109] sm:$0xff]
      %v3778 = vld [vmem:[%s3632 + $0x111] sm:$0xff]
      %v3779 = vld [vmem:[%s3632 + $0x129] sm:$0xff]
      %v3780 = vld [vmem:[%s3632 + $0x131] sm:$0xff]
      %v3781 = vld [vmem:[%s3632 + $0x149] sm:$0xff]
      %v3782 = vld [vmem:[%s3632 + $0x151] sm:$0xff]
      %v3783 = vld [vmem:[%s3632 + $0x169] sm:$0xff]
      %v3784 = vld [vmem:[%s3632 + $0x171] sm:$0xff]
      %v3785 = vld [vmem:[%s3632 + $0x189] sm:$0xff]
      %v3786 = vld [vmem:[%s3632 + $0x191] sm:$0xff]
      %v3787 = vld [vmem:[%s3632 + $0x1a9] sm:$0xff]
      %v3788 = vld [vmem:[%s3632 + $0x1b1] sm:$0xff]
      %v3789 = vld [vmem:[%s3632 + $0x1c9] sm:$0xff]
      %v3790 = vld [vmem:[%s3632 + $0x1d1] sm:$0xff]
      %v3791 = vld [vmem:[%s3632 + $0x1e9] sm:$0xff]
      %v3792 = vld [vmem:[%s3632 + $0x1f1] sm:$0xff]
      %v3793 = vpack.c.bf16 %v3761, %v3761
      %v3794 = vpack.c.bf16 %v3762, %v3762
      %v3795 = vpack.c.bf16 %v3763, %v3763
      %v3796 = vpack.c.bf16 %v3764, %v3764
      %v3797 = vpack.c.bf16 %v3765, %v3765
      %v3798 = vpack.c.bf16 %v3766, %v3766
      %v3799 = vpack.c.bf16 %v3767, %v3767
      %v3800 = vpack.c.bf16 %v3768, %v3768
      %v3801 = vpack.c.bf16 %v3769, %v3769
      %v3802 = vpack.c.bf16 %v3770, %v3770
      %v3803 = vpack.c.bf16 %v3771, %v3771
      %v3804 = vpack.c.bf16 %v3772, %v3772
      %v3805 = vpack.c.bf16 %v3773, %v3773
      %v3806 = vpack.c.bf16 %v3774, %v3774
      %v3807 = vpack.c.bf16 %v3775, %v3775
      %v3808 = vpack.c.bf16 %v3776, %v3776
      %v3809 = vpack.c.bf16 %v3777, %v3777
      %v3810 = vpack.c.bf16 %v3778, %v3778
      %v3811 = vpack.c.bf16 %v3779, %v3779
      %v3812 = vpack.c.bf16 %v3780, %v3780
      %v3813 = vpack.c.bf16 %v3781, %v3781
      %v3814 = vpack.c.bf16 %v3782, %v3782
      %v3815 = vpack.c.bf16 %v3783, %v3783
      %v3816 = vpack.c.bf16 %v3784, %v3784
      %v3817 = vpack.c.bf16 %v3785, %v3785
      %v3818 = vpack.c.bf16 %v3786, %v3786
      %v3819 = vpack.c.bf16 %v3787, %v3787
      %v3820 = vpack.c.bf16 %v3788, %v3788
      %v3821 = vpack.c.bf16 %v3789, %v3789
      %v3822 = vpack.c.bf16 %v3790, %v3790
      %v3823 = vpack.c.bf16 %v3791, %v3791
      %v3824 = vpack.c.bf16 %v3792, %v3792
      %v3857 = vunpack.c.l.b16 %v3312
      %v3858 = vunpack.c.l.b16 %v3313
      %v3859 = vunpack.c.l.b16 %v3314
      %v3860 = vunpack.c.l.b16 %v3315
      %v3861 = vunpack.c.l.b16 %v3316
      %v3862 = vunpack.c.l.b16 %v3317
      %v3863 = vunpack.c.l.b16 %v3318
      %v3864 = vunpack.c.l.b16 %v3319
      %v3865 = vunpack.c.l.b16 %v3320
      %v3866 = vunpack.c.l.b16 %v3321
      %v3867 = vunpack.c.l.b16 %v3322
      %v3868 = vunpack.c.l.b16 %v3323
      %v3869 = vunpack.c.l.b16 %v3324
      %v3870 = vunpack.c.l.b16 %v3325
      %v3871 = vunpack.c.l.b16 %v3326
      %v3872 = vunpack.c.l.b16 %v3327
      %v3873 = vunpack.c.l.b16 %v3328
      %v3874 = vunpack.c.l.b16 %v3329
      %v3875 = vunpack.c.l.b16 %v3330
      %v3876 = vunpack.c.l.b16 %v3331
      %v3877 = vunpack.c.l.b16 %v3332
      %v3878 = vunpack.c.l.b16 %v3333
      %v3879 = vunpack.c.l.b16 %v3334
      %v3880 = vunpack.c.l.b16 %v3335
      %v3881 = vunpack.c.l.b16 %v3336
      %v3882 = vunpack.c.l.b16 %v3337
      %v3883 = vunpack.c.l.b16 %v3338
      %v3884 = vunpack.c.l.b16 %v3339
      %v3885 = vunpack.c.l.b16 %v3340
      %v3886 = vunpack.c.l.b16 %v3341
      %v3887 = vunpack.c.l.b16 %v3342
      %v3888 = vunpack.c.l.b16 %v3343
      %v3889 = vpack.c.b16 %v3858, %v3857
      %v3890 = vpack.c.b16 %v3860, %v3859
      %v3891 = vpack.c.b16 %v3862, %v3861
      %v3892 = vpack.c.b16 %v3864, %v3863
      %v3893 = vpack.c.b16 %v3866, %v3865
      %v3894 = vpack.c.b16 %v3868, %v3867
      %v3895 = vpack.c.b16 %v3870, %v3869
      %v3896 = vpack.c.b16 %v3872, %v3871
      %v3897 = vpack.c.b16 %v3874, %v3873
      %v3898 = vpack.c.b16 %v3876, %v3875
      %v3899 = vpack.c.b16 %v3878, %v3877
      %v3900 = vpack.c.b16 %v3880, %v3879
      %v3901 = vpack.c.b16 %v3882, %v3881
      %v3902 = vpack.c.b16 %v3884, %v3883
      %v3903 = vpack.c.b16 %v3886, %v3885
      %v3904 = vpack.c.b16 %v3888, %v3887
      %v3953 = vunpack.c.l.b16 %v3376
      %v3954 = vunpack.c.l.b16 %v3377
      %v3955 = vunpack.c.l.b16 %v3378
      %v3956 = vunpack.c.l.b16 %v3379
      %v3957 = vunpack.c.l.b16 %v3380
      %v3958 = vunpack.c.l.b16 %v3381
      %v3959 = vunpack.c.l.b16 %v3382
      %v3960 = vunpack.c.l.b16 %v3383
      %v3961 = vunpack.c.l.b16 %v3384
      %v3962 = vunpack.c.l.b16 %v3385
      %v3963 = vunpack.c.l.b16 %v3386
      %v3964 = vunpack.c.l.b16 %v3387
      %v3965 = vunpack.c.l.b16 %v3388
      %v3966 = vunpack.c.l.b16 %v3389
      %v3967 = vunpack.c.l.b16 %v3390
      %v3968 = vunpack.c.l.b16 %v3391
      %v3969 = vunpack.c.l.b16 %v3392
      %v3970 = vunpack.c.l.b16 %v3393
      %v3971 = vunpack.c.l.b16 %v3394
      %v3972 = vunpack.c.l.b16 %v3395
      %v3973 = vunpack.c.l.b16 %v3396
      %v3974 = vunpack.c.l.b16 %v3397
      %v3975 = vunpack.c.l.b16 %v3398
      %v3976 = vunpack.c.l.b16 %v3399
      %v3977 = vunpack.c.l.b16 %v3400
      %v3978 = vunpack.c.l.b16 %v3401
      %v3979 = vunpack.c.l.b16 %v3402
      %v3980 = vunpack.c.l.b16 %v3403
      %v3981 = vunpack.c.l.b16 %v3404
      %v3982 = vunpack.c.l.b16 %v3405
      %v3983 = vunpack.c.l.b16 %v3406
      %v3984 = vunpack.c.l.b16 %v3407
      %v3985 = vpack.c.b16 %v3954, %v3953
      %v3986 = vpack.c.b16 %v3956, %v3955
      %v3987 = vpack.c.b16 %v3958, %v3957
      %v3988 = vpack.c.b16 %v3960, %v3959
      %v3989 = vpack.c.b16 %v3962, %v3961
      %v3990 = vpack.c.b16 %v3964, %v3963
      %v3991 = vpack.c.b16 %v3966, %v3965
      %v3992 = vpack.c.b16 %v3968, %v3967
      %v3993 = vpack.c.b16 %v3970, %v3969
      %v3994 = vpack.c.b16 %v3972, %v3971
      %v3995 = vpack.c.b16 %v3974, %v3973
      %v3996 = vpack.c.b16 %v3976, %v3975
      %v3997 = vpack.c.b16 %v3978, %v3977
      %v3998 = vpack.c.b16 %v3980, %v3979
      %v3999 = vpack.c.b16 %v3982, %v3981
      %v4000 = vpack.c.b16 %v3984, %v3983
      %v4049 = vunpack.c.l.b16 %v3440
      %v4050 = vunpack.c.l.b16 %v3441
      %v4051 = vunpack.c.l.b16 %v3442
      %v4052 = vunpack.c.l.b16 %v3443
      %v4053 = vunpack.c.l.b16 %v3444
      %v4054 = vunpack.c.l.b16 %v3445
      %v4055 = vunpack.c.l.b16 %v3446
      %v4056 = vunpack.c.l.b16 %v3447
      %v4057 = vunpack.c.l.b16 %v3448
      %v4058 = vunpack.c.l.b16 %v3449
      %v4059 = vunpack.c.l.b16 %v3450
      %v4060 = vunpack.c.l.b16 %v3451
      %v4061 = vunpack.c.l.b16 %v3452
      %v4062 = vunpack.c.l.b16 %v3453
      %v4063 = vunpack.c.l.b16 %v3454
      %v4064 = vunpack.c.l.b16 %v3455
      %v4065 = vunpack.c.l.b16 %v3456
      %v4066 = vunpack.c.l.b16 %v3457
      %v4067 = vunpack.c.l.b16 %v3458
      %v4068 = vunpack.c.l.b16 %v3459
      %v4069 = vunpack.c.l.b16 %v3460
      %v4070 = vunpack.c.l.b16 %v3461
      %v4071 = vunpack.c.l.b16 %v3462
      %v4072 = vunpack.c.l.b16 %v3463
      %v4073 = vunpack.c.l.b16 %v3464
      %v4074 = vunpack.c.l.b16 %v3465
      %v4075 = vunpack.c.l.b16 %v3466
      %v4076 = vunpack.c.l.b16 %v3467
      %v4077 = vunpack.c.l.b16 %v3468
      %v4078 = vunpack.c.l.b16 %v3469
      %v4079 = vunpack.c.l.b16 %v3470
      %v4080 = vunpack.c.l.b16 %v3471
      %v4081 = vpack.c.b16 %v4050, %v4049
      %v4082 = vpack.c.b16 %v4052, %v4051
      %v4083 = vpack.c.b16 %v4054, %v4053
      %v4084 = vpack.c.b16 %v4056, %v4055
      %v4085 = vpack.c.b16 %v4058, %v4057
      %v4086 = vpack.c.b16 %v4060, %v4059
      %v4087 = vpack.c.b16 %v4062, %v4061
      %v4088 = vpack.c.b16 %v4064, %v4063
      %v4089 = vpack.c.b16 %v4066, %v4065
      %v4090 = vpack.c.b16 %v4068, %v4067
      %v4091 = vpack.c.b16 %v4070, %v4069
      %v4092 = vpack.c.b16 %v4072, %v4071
      %v4093 = vpack.c.b16 %v4074, %v4073
      %v4094 = vpack.c.b16 %v4076, %v4075
      %v4095 = vpack.c.b16 %v4078, %v4077
      %v4096 = vpack.c.b16 %v4080, %v4079
      %v4145 = vunpack.c.l.b16 %v3504
      %v4146 = vunpack.c.l.b16 %v3505
      %v4147 = vunpack.c.l.b16 %v3506
      %v4148 = vunpack.c.l.b16 %v3507
      %v4149 = vunpack.c.l.b16 %v3508
      %v4150 = vunpack.c.l.b16 %v3509
      %v4151 = vunpack.c.l.b16 %v3510
      %v4152 = vunpack.c.l.b16 %v3511
      %v4153 = vunpack.c.l.b16 %v3512
      %v4154 = vunpack.c.l.b16 %v3513
      %v4155 = vunpack.c.l.b16 %v3514
      %v4156 = vunpack.c.l.b16 %v3515
      %v4157 = vunpack.c.l.b16 %v3516
      %v4158 = vunpack.c.l.b16 %v3517
      %v4159 = vunpack.c.l.b16 %v3518
      %v4160 = vunpack.c.l.b16 %v3519
      %v4161 = vunpack.c.l.b16 %v3520
      %v4162 = vunpack.c.l.b16 %v3521
      %v4163 = vunpack.c.l.b16 %v3522
      %v4164 = vunpack.c.l.b16 %v3523
      %v4165 = vunpack.c.l.b16 %v3524
      %v4166 = vunpack.c.l.b16 %v3525
      %v4167 = vunpack.c.l.b16 %v3526
      %v4168 = vunpack.c.l.b16 %v3527
      %v4169 = vunpack.c.l.b16 %v3528
      %v4170 = vunpack.c.l.b16 %v3529
      %v4171 = vunpack.c.l.b16 %v3530
      %v4172 = vunpack.c.l.b16 %v3531
      %v4173 = vunpack.c.l.b16 %v3532
      %v4174 = vunpack.c.l.b16 %v3533
      %v4175 = vunpack.c.l.b16 %v3534
      %v4176 = vunpack.c.l.b16 %v3535
      %v4177 = vpack.c.b16 %v4146, %v4145
      %v4178 = vpack.c.b16 %v4148, %v4147
      %v4179 = vpack.c.b16 %v4150, %v4149
      %v4180 = vpack.c.b16 %v4152, %v4151
      %v4181 = vpack.c.b16 %v4154, %v4153
      %v4182 = vpack.c.b16 %v4156, %v4155
      %v4183 = vpack.c.b16 %v4158, %v4157
      %v4184 = vpack.c.b16 %v4160, %v4159
      %v4185 = vpack.c.b16 %v4162, %v4161
      %v4186 = vpack.c.b16 %v4164, %v4163
      %v4187 = vpack.c.b16 %v4166, %v4165
      %v4188 = vpack.c.b16 %v4168, %v4167
      %v4189 = vpack.c.b16 %v4170, %v4169
      %v4190 = vpack.c.b16 %v4172, %v4171
      %v4191 = vpack.c.b16 %v4174, %v4173
      %v4192 = vpack.c.b16 %v4176, %v4175
      %v4241 = vunpack.c.l.b16 %v3536
      %v4242 = vunpack.c.l.b16 %v3537
      %v4243 = vunpack.c.l.b16 %v3538
      %v4244 = vunpack.c.l.b16 %v3539
      %v4245 = vunpack.c.l.b16 %v3540
      %v4246 = vunpack.c.l.b16 %v3541
      %v4247 = vunpack.c.l.b16 %v3542
      %v4248 = vunpack.c.l.b16 %v3543
      %v4249 = vunpack.c.l.b16 %v3544
      %v4250 = vunpack.c.l.b16 %v3545
      %v4251 = vunpack.c.l.b16 %v3546
      %v4252 = vunpack.c.l.b16 %v3547
      %v4253 = vunpack.c.l.b16 %v3548
      %v4254 = vunpack.c.l.b16 %v3549
      %v4255 = vunpack.c.l.b16 %v3550
      %v4256 = vunpack.c.l.b16 %v3551
      %v4257 = vunpack.c.l.b16 %v3552
      %v4258 = vunpack.c.l.b16 %v3553
      %v4259 = vunpack.c.l.b16 %v3554
      %v4260 = vunpack.c.l.b16 %v3555
      %v4261 = vunpack.c.l.b16 %v3556
      %v4262 = vunpack.c.l.b16 %v3557
      %v4263 = vunpack.c.l.b16 %v3558
      %v4264 = vunpack.c.l.b16 %v3559
      %v4265 = vunpack.c.l.b16 %v3560
      %v4266 = vunpack.c.l.b16 %v3561
      %v4267 = vunpack.c.l.b16 %v3562
      %v4268 = vunpack.c.l.b16 %v3563
      %v4269 = vunpack.c.l.b16 %v3564
      %v4270 = vunpack.c.l.b16 %v3565
      %v4271 = vunpack.c.l.b16 %v3566
      %v4272 = vunpack.c.l.b16 %v3567
      %v4273 = vpack.c.b16 %v4242, %v4241
      %v4274 = vpack.c.b16 %v4244, %v4243
      %v4275 = vpack.c.b16 %v4246, %v4245
      %v4276 = vpack.c.b16 %v4248, %v4247
      %v4277 = vpack.c.b16 %v4250, %v4249
      %v4278 = vpack.c.b16 %v4252, %v4251
      %v4279 = vpack.c.b16 %v4254, %v4253
      %v4280 = vpack.c.b16 %v4256, %v4255
      %v4281 = vpack.c.b16 %v4258, %v4257
      %v4282 = vpack.c.b16 %v4260, %v4259
      %v4283 = vpack.c.b16 %v4262, %v4261
      %v4284 = vpack.c.b16 %v4264, %v4263
      %v4285 = vpack.c.b16 %v4266, %v4265
      %v4286 = vpack.c.b16 %v4268, %v4267
      %v4287 = vpack.c.b16 %v4270, %v4269
      %v4288 = vpack.c.b16 %v4272, %v4271
      %v4337 = vunpack.c.l.b16 %v3600
      %v4338 = vunpack.c.l.b16 %v3601
      %v4339 = vunpack.c.l.b16 %v3602
      %v4340 = vunpack.c.l.b16 %v3603
      %v4341 = vunpack.c.l.b16 %v3604
      %v4342 = vunpack.c.l.b16 %v3605
      %v4343 = vunpack.c.l.b16 %v3606
      %v4344 = vunpack.c.l.b16 %v3607
      %v4345 = vunpack.c.l.b16 %v3608
      %v4346 = vunpack.c.l.b16 %v3609
      %v4347 = vunpack.c.l.b16 %v3610
      %v4348 = vunpack.c.l.b16 %v3611
      %v4349 = vunpack.c.l.b16 %v3612
      %v4350 = vunpack.c.l.b16 %v3613
      %v4351 = vunpack.c.l.b16 %v3614
      %v4352 = vunpack.c.l.b16 %v3615
      %v4353 = vunpack.c.l.b16 %v3616
      %v4354 = vunpack.c.l.b16 %v3617
      %v4355 = vunpack.c.l.b16 %v3618
      %v4356 = vunpack.c.l.b16 %v3619
      %v4357 = vunpack.c.l.b16 %v3620
      %v4358 = vunpack.c.l.b16 %v3621
      %v4359 = vunpack.c.l.b16 %v3622
      %v4360 = vunpack.c.l.b16 %v3623
      %v4361 = vunpack.c.l.b16 %v3624
      %v4362 = vunpack.c.l.b16 %v3625
      %v4363 = vunpack.c.l.b16 %v3626
      %v4364 = vunpack.c.l.b16 %v3627
      %v4365 = vunpack.c.l.b16 %v3628
      %v4366 = vunpack.c.l.b16 %v3629
      %v4367 = vunpack.c.l.b16 %v3630
      %v4368 = vunpack.c.l.b16 %v3631
      %v4369 = vpack.c.b16 %v4338, %v4337
      %v4370 = vpack.c.b16 %v4340, %v4339
      %v4371 = vpack.c.b16 %v4342, %v4341
      %v4372 = vpack.c.b16 %v4344, %v4343
      %v4373 = vpack.c.b16 %v4346, %v4345
      %v4374 = vpack.c.b16 %v4348, %v4347
      %v4375 = vpack.c.b16 %v4350, %v4349
      %v4376 = vpack.c.b16 %v4352, %v4351
      %v4377 = vpack.c.b16 %v4354, %v4353
      %v4378 = vpack.c.b16 %v4356, %v4355
      %v4379 = vpack.c.b16 %v4358, %v4357
      %v4380 = vpack.c.b16 %v4360, %v4359
      %v4381 = vpack.c.b16 %v4362, %v4361
      %v4382 = vpack.c.b16 %v4364, %v4363
      %v4383 = vpack.c.b16 %v4366, %v4365
      %v4384 = vpack.c.b16 %v4368, %v4367
      %v4433 = vunpack.c.l.b16 %v3665
      %v4434 = vunpack.c.l.b16 %v3666
      %v4435 = vunpack.c.l.b16 %v3667
      %v4436 = vunpack.c.l.b16 %v3668
      %v4437 = vunpack.c.l.b16 %v3669
      %v4438 = vunpack.c.l.b16 %v3670
      %v4439 = vunpack.c.l.b16 %v3671
      %v4440 = vunpack.c.l.b16 %v3672
      %v4441 = vunpack.c.l.b16 %v3673
      %v4442 = vunpack.c.l.b16 %v3674
      %v4443 = vunpack.c.l.b16 %v3675
      %v4444 = vunpack.c.l.b16 %v3676
      %v4445 = vunpack.c.l.b16 %v3677
      %v4446 = vunpack.c.l.b16 %v3678
      %v4447 = vunpack.c.l.b16 %v3679
      %v4448 = vunpack.c.l.b16 %v3680
      %v4449 = vunpack.c.l.b16 %v3681
      %v4450 = vunpack.c.l.b16 %v3682
      %v4451 = vunpack.c.l.b16 %v3683
      %v4452 = vunpack.c.l.b16 %v3684
      %v4453 = vunpack.c.l.b16 %v3685
      %v4454 = vunpack.c.l.b16 %v3686
      %v4455 = vunpack.c.l.b16 %v3687
      %v4456 = vunpack.c.l.b16 %v3688
      %v4457 = vunpack.c.l.b16 %v3689
      %v4458 = vunpack.c.l.b16 %v3690
      %v4459 = vunpack.c.l.b16 %v3691
      %v4460 = vunpack.c.l.b16 %v3692
      %v4461 = vunpack.c.l.b16 %v3693
      %v4462 = vunpack.c.l.b16 %v3694
      %v4463 = vunpack.c.l.b16 %v3695
      %v4464 = vunpack.c.l.b16 %v3696
      %v4465 = vpack.c.b16 %v4434, %v4433
      %v4466 = vpack.c.b16 %v4436, %v4435
      %v4467 = vpack.c.b16 %v4438, %v4437
      %v4468 = vpack.c.b16 %v4440, %v4439
      %v4469 = vpack.c.b16 %v4442, %v4441
      %v4470 = vpack.c.b16 %v4444, %v4443
      %v4471 = vpack.c.b16 %v4446, %v4445
      %v4472 = vpack.c.b16 %v4448, %v4447
      %v4473 = vpack.c.b16 %v4450, %v4449
      %v4474 = vpack.c.b16 %v4452, %v4451
      %v4475 = vpack.c.b16 %v4454, %v4453
      %v4476 = vpack.c.b16 %v4456, %v4455
      %v4477 = vpack.c.b16 %v4458, %v4457
      %v4478 = vpack.c.b16 %v4460, %v4459
      %v4479 = vpack.c.b16 %v4462, %v4461
      %v4480 = vpack.c.b16 %v4464, %v4463
      %v4529 = vunpack.c.l.b16 %v3729
      %v4530 = vunpack.c.l.b16 %v3730
      %v4531 = vunpack.c.l.b16 %v3731
      %v4532 = vunpack.c.l.b16 %v3732
      %v4533 = vunpack.c.l.b16 %v3733
      %v4534 = vunpack.c.l.b16 %v3734
      %v4535 = vunpack.c.l.b16 %v3735
      %v4536 = vunpack.c.l.b16 %v3736
      %v4537 = vunpack.c.l.b16 %v3737
      %v4538 = vunpack.c.l.b16 %v3738
      %v4539 = vunpack.c.l.b16 %v3739
      %v4540 = vunpack.c.l.b16 %v3740
      %v4541 = vunpack.c.l.b16 %v3741
      %v4542 = vunpack.c.l.b16 %v3742
      %v4543 = vunpack.c.l.b16 %v3743
      %v4544 = vunpack.c.l.b16 %v3744
      %v4545 = vunpack.c.l.b16 %v3745
      %v4546 = vunpack.c.l.b16 %v3746
      %v4547 = vunpack.c.l.b16 %v3747
      %v4548 = vunpack.c.l.b16 %v3748
      %v4549 = vunpack.c.l.b16 %v3749
      %v4550 = vunpack.c.l.b16 %v3750
      %v4551 = vunpack.c.l.b16 %v3751
      %v4552 = vunpack.c.l.b16 %v3752
      %v4553 = vunpack.c.l.b16 %v3753
      %v4554 = vunpack.c.l.b16 %v3754
      %v4555 = vunpack.c.l.b16 %v3755
      %v4556 = vunpack.c.l.b16 %v3756
      %v4557 = vunpack.c.l.b16 %v3757
      %v4558 = vunpack.c.l.b16 %v3758
      %v4559 = vunpack.c.l.b16 %v3759
      %v4560 = vunpack.c.l.b16 %v3760
      %v4561 = vpack.c.b16 %v4530, %v4529
      %v4562 = vpack.c.b16 %v4532, %v4531
      %v4563 = vpack.c.b16 %v4534, %v4533
      %v4564 = vpack.c.b16 %v4536, %v4535
      %v4565 = vpack.c.b16 %v4538, %v4537
      %v4566 = vpack.c.b16 %v4540, %v4539
      %v4567 = vpack.c.b16 %v4542, %v4541
      %v4568 = vpack.c.b16 %v4544, %v4543
      %v4569 = vpack.c.b16 %v4546, %v4545
      %v4570 = vpack.c.b16 %v4548, %v4547
      %v4571 = vpack.c.b16 %v4550, %v4549
      %v4572 = vpack.c.b16 %v4552, %v4551
      %v4573 = vpack.c.b16 %v4554, %v4553
      %v4574 = vpack.c.b16 %v4556, %v4555
      %v4575 = vpack.c.b16 %v4558, %v4557
      %v4576 = vpack.c.b16 %v4560, %v4559
      %v4625 = vunpack.c.l.b16 %v3793
      %v4626 = vunpack.c.l.b16 %v3794
      %v4627 = vunpack.c.l.b16 %v3795
      %v4628 = vunpack.c.l.b16 %v3796
      %v4629 = vunpack.c.l.b16 %v3797
      %v4630 = vunpack.c.l.b16 %v3798
      %v4631 = vunpack.c.l.b16 %v3799
      %v4632 = vunpack.c.l.b16 %v3800
      %v4633 = vunpack.c.l.b16 %v3801
      %v4634 = vunpack.c.l.b16 %v3802
      %v4635 = vunpack.c.l.b16 %v3803
      %v4636 = vunpack.c.l.b16 %v3804
      %v4637 = vunpack.c.l.b16 %v3805
      %v4638 = vunpack.c.l.b16 %v3806
      %v4639 = vunpack.c.l.b16 %v3807
      %v4640 = vunpack.c.l.b16 %v3808
      %v4641 = vunpack.c.l.b16 %v3809
      %v4642 = vunpack.c.l.b16 %v3810
      %v4643 = vunpack.c.l.b16 %v3811
      %v4644 = vunpack.c.l.b16 %v3812
      %v4645 = vunpack.c.l.b16 %v3813
      %v4646 = vunpack.c.l.b16 %v3814
      %v4647 = vunpack.c.l.b16 %v3815
      %v4648 = vunpack.c.l.b16 %v3816
      %v4649 = vunpack.c.l.b16 %v3817
      %v4650 = vunpack.c.l.b16 %v3818
      %v4651 = vunpack.c.l.b16 %v3819
      %v4652 = vunpack.c.l.b16 %v3820
      %v4653 = vunpack.c.l.b16 %v3821
      %v4654 = vunpack.c.l.b16 %v3822
      %v4655 = vunpack.c.l.b16 %v3823
      %v4656 = vunpack.c.l.b16 %v3824
      %v4657 = vpack.c.b16 %v4626, %v4625
      %v4658 = vpack.c.b16 %v4628, %v4627
      %v4659 = vpack.c.b16 %v4630, %v4629
      %v4660 = vpack.c.b16 %v4632, %v4631
      %v4661 = vpack.c.b16 %v4634, %v4633
      %v4662 = vpack.c.b16 %v4636, %v4635
      %v4663 = vpack.c.b16 %v4638, %v4637
      %v4664 = vpack.c.b16 %v4640, %v4639
      %v4665 = vpack.c.b16 %v4642, %v4641
      %v4666 = vpack.c.b16 %v4644, %v4643
      %v4667 = vpack.c.b16 %v4646, %v4645
      %v4668 = vpack.c.b16 %v4648, %v4647
      %v4669 = vpack.c.b16 %v4650, %v4649
      %v4670 = vpack.c.b16 %v4652, %v4651
      %v4671 = vpack.c.b16 %v4654, %v4653
      %v4672 = vpack.c.b16 %v4656, %v4655
      %v4689 = vld [vmem:[%s4] sm:$0xf]
      %v4690 = vld [vmem:[%s4 + $0x4] sm:$0xf]
      %v4691 = vld [vmem:[%s4 + $0x8] sm:$0xf]
      %v4692 = vld [vmem:[%s4 + $0xc] sm:$0xf]
      %v4693 = vld [vmem:[%s4 + $0x10] sm:$0xf]
      %v4694 = vld [vmem:[%s4 + $0x14] sm:$0xf]
      %v4695 = vld [vmem:[%s4 + $0x18] sm:$0xf]
      %v4696 = vld [vmem:[%s4 + $0x1c] sm:$0xf]
      %v4697 = vld [vmem:[%s4 + $0x20] sm:$0xf]
      %v4698 = vld [vmem:[%s4 + $0x24] sm:$0xf]
      %v4699 = vld [vmem:[%s4 + $0x28] sm:$0xf]
      %v4700 = vld [vmem:[%s4 + $0x2c] sm:$0xf]
      %v4701 = vld [vmem:[%s4 + $0x30] sm:$0xf]
      %v4702 = vld [vmem:[%s4 + $0x34] sm:$0xf]
      %v4703 = vld [vmem:[%s4 + $0x38] sm:$0xf]
      %v4704 = vld [vmem:[%s4 + $0x3c] sm:$0xf]
      %v4705 = vld [vmem:[%s4 + $0x40] sm:$0xf]
      %v4706 = vld [vmem:[%s4 + $0x44] sm:$0xf]
      %v4707 = vld [vmem:[%s4 + $0x48] sm:$0xf]
      %v4708 = vld [vmem:[%s4 + $0x4c] sm:$0xf]
      %v4709 = vld [vmem:[%s4 + $0x50] sm:$0xf]
      %v4710 = vld [vmem:[%s4 + $0x54] sm:$0xf]
      %v4711 = vld [vmem:[%s4 + $0x58] sm:$0xf]
      %v4712 = vld [vmem:[%s4 + $0x5c] sm:$0xf]
      %v4713 = vld [vmem:[%s4 + $0x60] sm:$0xf]
      %v4714 = vld [vmem:[%s4 + $0x64] sm:$0xf]
      %v4715 = vld [vmem:[%s4 + $0x68] sm:$0xf]
      %v4716 = vld [vmem:[%s4 + $0x6c] sm:$0xf]
      %v4717 = vld [vmem:[%s4 + $0x70] sm:$0xf]
      %v4718 = vld [vmem:[%s4 + $0x74] sm:$0xf]
      %v4719 = vld [vmem:[%s4 + $0x78] sm:$0xf]
      %v4720 = vld [vmem:[%s4 + $0x7c] sm:$0xf]
      %v4721 = vld [vmem:[%s4 + $0x80] sm:$0xf]
      %v4722 = vld [vmem:[%s4 + $0x84] sm:$0xf]
      %v4723 = vld [vmem:[%s4 + $0x88] sm:$0xf]
      %v4724 = vld [vmem:[%s4 + $0x8c] sm:$0xf]
      %v4725 = vld [vmem:[%s4 + $0x90] sm:$0xf]
      %v4726 = vld [vmem:[%s4 + $0x94] sm:$0xf]
      %v4727 = vld [vmem:[%s4 + $0x98] sm:$0xf]
      %v4728 = vld [vmem:[%s4 + $0x9c] sm:$0xf]
      %v4729 = vld [vmem:[%s4 + $0xa0] sm:$0xf]
      %v4730 = vld [vmem:[%s4 + $0xa4] sm:$0xf]
      %v4731 = vld [vmem:[%s4 + $0xa8] sm:$0xf]
      %v4732 = vld [vmem:[%s4 + $0xac] sm:$0xf]
      %v4733 = vld [vmem:[%s4 + $0xb0] sm:$0xf]
      %v4734 = vld [vmem:[%s4 + $0xb4] sm:$0xf]
      %v4735 = vld [vmem:[%s4 + $0xb8] sm:$0xf]
      %v4736 = vld [vmem:[%s4 + $0xbc] sm:$0xf]
      %v4737 = vld [vmem:[%s4 + $0xc0] sm:$0xf]
      %v4738 = vld [vmem:[%s4 + $0xc4] sm:$0xf]
      %v4739 = vld [vmem:[%s4 + $0xc8] sm:$0xf]
      %v4740 = vld [vmem:[%s4 + $0xcc] sm:$0xf]
      %v4741 = vld [vmem:[%s4 + $0xd0] sm:$0xf]
      %v4742 = vld [vmem:[%s4 + $0xd4] sm:$0xf]
      %v4743 = vld [vmem:[%s4 + $0xd8] sm:$0xf]
      %v4744 = vld [vmem:[%s4 + $0xdc] sm:$0xf]
      %v4745 = vld [vmem:[%s4 + $0xe0] sm:$0xf]
      %v4746 = vld [vmem:[%s4 + $0xe4] sm:$0xf]
      %v4747 = vld [vmem:[%s4 + $0xe8] sm:$0xf]
      %v4748 = vld [vmem:[%s4 + $0xec] sm:$0xf]
      %v4749 = vld [vmem:[%s4 + $0xf0] sm:$0xf]
      %v4750 = vld [vmem:[%s4 + $0xf4] sm:$0xf]
      %v4751 = vld [vmem:[%s4 + $0xf8] sm:$0xf]
      %v4752 = vld [vmem:[%s4 + $0xfc] sm:$0xf]
      %v4753 = vld [vmem:[%s4 + $0x100] sm:$0xf]
      %v4754 = vld [vmem:[%s4 + $0x104] sm:$0xf]
      %v4755 = vld [vmem:[%s4 + $0x108] sm:$0xf]
      %v4756 = vld [vmem:[%s4 + $0x10c] sm:$0xf]
      %v4757 = vld [vmem:[%s4 + $0x110] sm:$0xf]
      %v4758 = vld [vmem:[%s4 + $0x114] sm:$0xf]
      %v4759 = vld [vmem:[%s4 + $0x118] sm:$0xf]
      %v4760 = vld [vmem:[%s4 + $0x11c] sm:$0xf]
      %v4761 = vld [vmem:[%s4 + $0x120] sm:$0xf]
      %v4762 = vld [vmem:[%s4 + $0x124] sm:$0xf]
      %v4763 = vld [vmem:[%s4 + $0x128] sm:$0xf]
      %v4764 = vld [vmem:[%s4 + $0x12c] sm:$0xf]
      %v4765 = vld [vmem:[%s4 + $0x130] sm:$0xf]
      %v4766 = vld [vmem:[%s4 + $0x134] sm:$0xf]
      %v4767 = vld [vmem:[%s4 + $0x138] sm:$0xf]
      %v4768 = vld [vmem:[%s4 + $0x13c] sm:$0xf]
      %v4769 = vld [vmem:[%s4 + $0x140] sm:$0xf]
      %v4770 = vld [vmem:[%s4 + $0x144] sm:$0xf]
      %v4771 = vld [vmem:[%s4 + $0x148] sm:$0xf]
      %v4772 = vld [vmem:[%s4 + $0x14c] sm:$0xf]
      %v4773 = vld [vmem:[%s4 + $0x150] sm:$0xf]
      %v4774 = vld [vmem:[%s4 + $0x154] sm:$0xf]
      %v4775 = vld [vmem:[%s4 + $0x158] sm:$0xf]
      %v4776 = vld [vmem:[%s4 + $0x15c] sm:$0xf]
      %v4777 = vld [vmem:[%s4 + $0x160] sm:$0xf]
      %v4778 = vld [vmem:[%s4 + $0x164] sm:$0xf]
      %v4779 = vld [vmem:[%s4 + $0x168] sm:$0xf]
      %v4780 = vld [vmem:[%s4 + $0x16c] sm:$0xf]
      %v4781 = vld [vmem:[%s4 + $0x170] sm:$0xf]
      %v4782 = vld [vmem:[%s4 + $0x174] sm:$0xf]
      %v4783 = vld [vmem:[%s4 + $0x178] sm:$0xf]
      %v4784 = vld [vmem:[%s4 + $0x17c] sm:$0xf]
      %v4785 = vld [vmem:[%s4 + $0x180] sm:$0xf]
      %v4786 = vld [vmem:[%s4 + $0x184] sm:$0xf]
      %v4787 = vld [vmem:[%s4 + $0x188] sm:$0xf]
      %v4788 = vld [vmem:[%s4 + $0x18c] sm:$0xf]
      %v4789 = vld [vmem:[%s4 + $0x190] sm:$0xf]
      %v4790 = vld [vmem:[%s4 + $0x194] sm:$0xf]
      %v4791 = vld [vmem:[%s4 + $0x198] sm:$0xf]
      %v4792 = vld [vmem:[%s4 + $0x19c] sm:$0xf]
      %v4793 = vld [vmem:[%s4 + $0x1a0] sm:$0xf]
      %v4794 = vld [vmem:[%s4 + $0x1a4] sm:$0xf]
      %v4795 = vld [vmem:[%s4 + $0x1a8] sm:$0xf]
      %v4796 = vld [vmem:[%s4 + $0x1ac] sm:$0xf]
      %v4797 = vld [vmem:[%s4 + $0x1b0] sm:$0xf]
      %v4798 = vld [vmem:[%s4 + $0x1b4] sm:$0xf]
      %v4799 = vld [vmem:[%s4 + $0x1b8] sm:$0xf]
      %v4800 = vld [vmem:[%s4 + $0x1bc] sm:$0xf]
      %v4801 = vld [vmem:[%s4 + $0x1c0] sm:$0xf]
      %v4802 = vld [vmem:[%s4 + $0x1c4] sm:$0xf]
      %v4803 = vld [vmem:[%s4 + $0x1c8] sm:$0xf]
      %v4804 = vld [vmem:[%s4 + $0x1cc] sm:$0xf]
      %v4805 = vld [vmem:[%s4 + $0x1d0] sm:$0xf]
      %v4806 = vld [vmem:[%s4 + $0x1d4] sm:$0xf]
      %v4807 = vld [vmem:[%s4 + $0x1d8] sm:$0xf]
      %v4808 = vld [vmem:[%s4 + $0x1dc] sm:$0xf]
      %v4809 = vld [vmem:[%s4 + $0x1e0] sm:$0xf]
      %v4810 = vld [vmem:[%s4 + $0x1e4] sm:$0xf]
      %v4811 = vld [vmem:[%s4 + $0x1e8] sm:$0xf]
      %v4812 = vld [vmem:[%s4 + $0x1ec] sm:$0xf]
      %v4813 = vld [vmem:[%s4 + $0x1f0] sm:$0xf]
      %v4814 = vld [vmem:[%s4 + $0x1f4] sm:$0xf]
      %v4815 = vld [vmem:[%s4 + $0x1f8] sm:$0xf]
      %v4816 = vld [vmem:[%s4 + $0x1fc] sm:$0xf]
      %v4817 = vld [vmem:[%s4 + $0x200] sm:$0xf]
      %v4818 = vld [vmem:[%s4 + $0x204] sm:$0xf]
      %v4819 = vld [vmem:[%s4 + $0x208] sm:$0xf]
      %v4820 = vld [vmem:[%s4 + $0x20c] sm:$0xf]
      %v4821 = vld [vmem:[%s4 + $0x210] sm:$0xf]
      %v4822 = vld [vmem:[%s4 + $0x214] sm:$0xf]
      %v4823 = vld [vmem:[%s4 + $0x218] sm:$0xf]
      %v4824 = vld [vmem:[%s4 + $0x21c] sm:$0xf]
      %v4825 = vld [vmem:[%s4 + $0x220] sm:$0xf]
      %v4826 = vld [vmem:[%s4 + $0x224] sm:$0xf]
      %v4827 = vld [vmem:[%s4 + $0x228] sm:$0xf]
      %v4828 = vld [vmem:[%s4 + $0x22c] sm:$0xf]
      %v4829 = vld [vmem:[%s4 + $0x230] sm:$0xf]
      %v4830 = vld [vmem:[%s4 + $0x234] sm:$0xf]
      %v4831 = vld [vmem:[%s4 + $0x238] sm:$0xf]
      %v4832 = vld [vmem:[%s4 + $0x23c] sm:$0xf]
      %v4977 = vunpack.c.l.b16 %v4689
      %v4978 = vunpack.c.l.b16 %v4690
      %v4979 = vunpack.c.l.b16 %v4691
      %v4980 = vunpack.c.l.b16 %v4692
      %v4981 = vunpack.c.l.b16 %v4693
      %v4982 = vunpack.c.l.b16 %v4694
      %v4983 = vunpack.c.l.b16 %v4695
      %v4984 = vunpack.c.l.b16 %v4696
      %v4985 = vunpack.c.l.b16 %v4697
      %v4986 = vunpack.c.l.b16 %v4698
      %v4987 = vunpack.c.l.b16 %v4699
      %v4988 = vunpack.c.l.b16 %v4700
      %v4989 = vunpack.c.l.b16 %v4701
      %v4990 = vunpack.c.l.b16 %v4702
      %v4991 = vunpack.c.l.b16 %v4703
      %v4992 = vunpack.c.l.b16 %v4704
      %v4993 = vunpack.c.l.b16 %v4705
      %v4994 = vunpack.c.l.b16 %v4706
      %v4995 = vunpack.c.l.b16 %v4707
      %v4996 = vunpack.c.l.b16 %v4708
      %v4997 = vunpack.c.l.b16 %v4709
      %v4998 = vunpack.c.l.b16 %v4710
      %v4999 = vunpack.c.l.b16 %v4711
      %v5000 = vunpack.c.l.b16 %v4712
      %v5001 = vunpack.c.l.b16 %v4713
      %v5002 = vunpack.c.l.b16 %v4714
      %v5003 = vunpack.c.l.b16 %v4715
      %v5004 = vunpack.c.l.b16 %v4716
      %v5005 = vunpack.c.l.b16 %v4717
      %v5006 = vunpack.c.l.b16 %v4718
      %v5007 = vunpack.c.l.b16 %v4719
      %v5008 = vunpack.c.l.b16 %v4720
      %v5009 = vunpack.c.l.b16 %v4721
      %v5010 = vunpack.c.l.b16 %v4722
      %v5011 = vunpack.c.l.b16 %v4723
      %v5012 = vunpack.c.l.b16 %v4724
      %v5013 = vunpack.c.l.b16 %v4725
      %v5014 = vunpack.c.l.b16 %v4726
      %v5015 = vunpack.c.l.b16 %v4727
      %v5016 = vunpack.c.l.b16 %v4728
      %v5017 = vunpack.c.l.b16 %v4729
      %v5018 = vunpack.c.l.b16 %v4730
      %v5019 = vunpack.c.l.b16 %v4731
      %v5020 = vunpack.c.l.b16 %v4732
      %v5021 = vunpack.c.l.b16 %v4733
      %v5022 = vunpack.c.l.b16 %v4734
      %v5023 = vunpack.c.l.b16 %v4735
      %v5024 = vunpack.c.l.b16 %v4736
      %v5025 = vunpack.c.l.b16 %v4737
      %v5026 = vunpack.c.l.b16 %v4738
      %v5027 = vunpack.c.l.b16 %v4739
      %v5028 = vunpack.c.l.b16 %v4740
      %v5029 = vunpack.c.l.b16 %v4741
      %v5030 = vunpack.c.l.b16 %v4742
      %v5031 = vunpack.c.l.b16 %v4743
      %v5032 = vunpack.c.l.b16 %v4744
      %v5033 = vunpack.c.l.b16 %v4745
      %v5034 = vunpack.c.l.b16 %v4746
      %v5035 = vunpack.c.l.b16 %v4747
      %v5036 = vunpack.c.l.b16 %v4748
      %v5037 = vunpack.c.l.b16 %v4749
      %v5038 = vunpack.c.l.b16 %v4750
      %v5039 = vunpack.c.l.b16 %v4751
      %v5040 = vunpack.c.l.b16 %v4752
      %v5041 = vunpack.c.l.b16 %v4753
      %v5042 = vunpack.c.l.b16 %v4754
      %v5043 = vunpack.c.l.b16 %v4755
      %v5044 = vunpack.c.l.b16 %v4756
      %v5045 = vunpack.c.l.b16 %v4757
      %v5046 = vunpack.c.l.b16 %v4758
      %v5047 = vunpack.c.l.b16 %v4759
      %v5048 = vunpack.c.l.b16 %v4760
      %v5049 = vunpack.c.l.b16 %v4761
      %v5050 = vunpack.c.l.b16 %v4762
      %v5051 = vunpack.c.l.b16 %v4763
      %v5052 = vunpack.c.l.b16 %v4764
      %v5053 = vunpack.c.l.b16 %v4765
      %v5054 = vunpack.c.l.b16 %v4766
      %v5055 = vunpack.c.l.b16 %v4767
      %v5056 = vunpack.c.l.b16 %v4768
      %v5057 = vunpack.c.l.b16 %v4769
      %v5058 = vunpack.c.l.b16 %v4770
      %v5059 = vunpack.c.l.b16 %v4771
      %v5060 = vunpack.c.l.b16 %v4772
      %v5061 = vunpack.c.l.b16 %v4773
      %v5062 = vunpack.c.l.b16 %v4774
      %v5063 = vunpack.c.l.b16 %v4775
      %v5064 = vunpack.c.l.b16 %v4776
      %v5065 = vunpack.c.l.b16 %v4777
      %v5066 = vunpack.c.l.b16 %v4778
      %v5067 = vunpack.c.l.b16 %v4779
      %v5068 = vunpack.c.l.b16 %v4780
      %v5069 = vunpack.c.l.b16 %v4781
      %v5070 = vunpack.c.l.b16 %v4782
      %v5071 = vunpack.c.l.b16 %v4783
      %v5072 = vunpack.c.l.b16 %v4784
      %v5073 = vunpack.c.l.b16 %v4785
      %v5074 = vunpack.c.l.b16 %v4786
      %v5075 = vunpack.c.l.b16 %v4787
      %v5076 = vunpack.c.l.b16 %v4788
      %v5077 = vunpack.c.l.b16 %v4789
      %v5078 = vunpack.c.l.b16 %v4790
      %v5079 = vunpack.c.l.b16 %v4791
      %v5080 = vunpack.c.l.b16 %v4792
      %v5081 = vunpack.c.l.b16 %v4793
      %v5082 = vunpack.c.l.b16 %v4794
      %v5083 = vunpack.c.l.b16 %v4795
      %v5084 = vunpack.c.l.b16 %v4796
      %v5085 = vunpack.c.l.b16 %v4797
      %v5086 = vunpack.c.l.b16 %v4798
      %v5087 = vunpack.c.l.b16 %v4799
      %v5088 = vunpack.c.l.b16 %v4800
      %v5089 = vunpack.c.l.b16 %v4801
      %v5090 = vunpack.c.l.b16 %v4802
      %v5091 = vunpack.c.l.b16 %v4803
      %v5092 = vunpack.c.l.b16 %v4804
      %v5093 = vunpack.c.l.b16 %v4805
      %v5094 = vunpack.c.l.b16 %v4806
      %v5095 = vunpack.c.l.b16 %v4807
      %v5096 = vunpack.c.l.b16 %v4808
      %v5097 = vunpack.c.l.b16 %v4809
      %v5098 = vunpack.c.l.b16 %v4810
      %v5099 = vunpack.c.l.b16 %v4811
      %v5100 = vunpack.c.l.b16 %v4812
      %v5101 = vunpack.c.l.b16 %v4813
      %v5102 = vunpack.c.l.b16 %v4814
      %v5103 = vunpack.c.l.b16 %v4815
      %v5104 = vunpack.c.l.b16 %v4816
      %v5105 = vunpack.c.l.b16 %v4817
      %v5106 = vunpack.c.l.b16 %v4818
      %v5107 = vunpack.c.l.b16 %v4819
      %v5108 = vunpack.c.l.b16 %v4820
      %v5109 = vunpack.c.l.b16 %v4821
      %v5110 = vunpack.c.l.b16 %v4822
      %v5111 = vunpack.c.l.b16 %v4823
      %v5112 = vunpack.c.l.b16 %v4824
      %v5113 = vunpack.c.l.b16 %v4825
      %v5114 = vunpack.c.l.b16 %v4826
      %v5115 = vunpack.c.l.b16 %v4827
      %v5116 = vunpack.c.l.b16 %v4828
      %v5117 = vunpack.c.l.b16 %v4829
      %v5118 = vunpack.c.l.b16 %v4830
      %v5119 = vunpack.c.l.b16 %v4831
      %v5120 = vunpack.c.l.b16 %v4832
      %v5121 = vpack.c.b16 %v4978, %v4977
      %v5122 = vpack.c.b16 %v4980, %v4979
      %v5123 = vpack.c.b16 %v4982, %v4981
      %v5124 = vpack.c.b16 %v4984, %v4983
      %v5125 = vpack.c.b16 %v4986, %v4985
      %v5126 = vpack.c.b16 %v4988, %v4987
      %v5127 = vpack.c.b16 %v4990, %v4989
      %v5128 = vpack.c.b16 %v4992, %v4991
      %v5129 = vpack.c.b16 %v4994, %v4993
      %v5130 = vpack.c.b16 %v4996, %v4995
      %v5131 = vpack.c.b16 %v4998, %v4997
      %v5132 = vpack.c.b16 %v5000, %v4999
      %v5133 = vpack.c.b16 %v5002, %v5001
      %v5134 = vpack.c.b16 %v5004, %v5003
      %v5135 = vpack.c.b16 %v5006, %v5005
      %v5136 = vpack.c.b16 %v5008, %v5007
      %v5137 = vpack.c.b16 %v5010, %v5009
      %v5138 = vpack.c.b16 %v5012, %v5011
      %v5139 = vpack.c.b16 %v5014, %v5013
      %v5140 = vpack.c.b16 %v5016, %v5015
      %v5141 = vpack.c.b16 %v5018, %v5017
      %v5142 = vpack.c.b16 %v5020, %v5019
      %v5143 = vpack.c.b16 %v5022, %v5021
      %v5144 = vpack.c.b16 %v5024, %v5023
      %v5145 = vpack.c.b16 %v5026, %v5025
      %v5146 = vpack.c.b16 %v5028, %v5027
      %v5147 = vpack.c.b16 %v5030, %v5029
      %v5148 = vpack.c.b16 %v5032, %v5031
      %v5149 = vpack.c.b16 %v5034, %v5033
      %v5150 = vpack.c.b16 %v5036, %v5035
      %v5151 = vpack.c.b16 %v5038, %v5037
      %v5152 = vpack.c.b16 %v5040, %v5039
      %v5153 = vpack.c.b16 %v5042, %v5041
      %v5154 = vpack.c.b16 %v5044, %v5043
      %v5155 = vpack.c.b16 %v5046, %v5045
      %v5156 = vpack.c.b16 %v5048, %v5047
      %v5157 = vpack.c.b16 %v5050, %v5049
      %v5158 = vpack.c.b16 %v5052, %v5051
      %v5159 = vpack.c.b16 %v5054, %v5053
      %v5160 = vpack.c.b16 %v5056, %v5055
      %v5161 = vpack.c.b16 %v5058, %v5057
      %v5162 = vpack.c.b16 %v5060, %v5059
      %v5163 = vpack.c.b16 %v5062, %v5061
      %v5164 = vpack.c.b16 %v5064, %v5063
      %v5165 = vpack.c.b16 %v5066, %v5065
      %v5166 = vpack.c.b16 %v5068, %v5067
      %v5167 = vpack.c.b16 %v5070, %v5069
      %v5168 = vpack.c.b16 %v5072, %v5071
      %v5169 = vpack.c.b16 %v5074, %v5073
      %v5170 = vpack.c.b16 %v5076, %v5075
      %v5171 = vpack.c.b16 %v5078, %v5077
      %v5172 = vpack.c.b16 %v5080, %v5079
      %v5173 = vpack.c.b16 %v5082, %v5081
      %v5174 = vpack.c.b16 %v5084, %v5083
      %v5175 = vpack.c.b16 %v5086, %v5085
      %v5176 = vpack.c.b16 %v5088, %v5087
      %v5177 = vpack.c.b16 %v5090, %v5089
      %v5178 = vpack.c.b16 %v5092, %v5091
      %v5179 = vpack.c.b16 %v5094, %v5093
      %v5180 = vpack.c.b16 %v5096, %v5095
      %v5181 = vpack.c.b16 %v5098, %v5097
      %v5182 = vpack.c.b16 %v5100, %v5099
      %v5183 = vpack.c.b16 %v5102, %v5101
      %v5184 = vpack.c.b16 %v5104, %v5103
      %v5185 = vpack.c.b16 %v5106, %v5105
      %v5186 = vpack.c.b16 %v5108, %v5107
      %v5187 = vpack.c.b16 %v5110, %v5109
      %v5188 = vpack.c.b16 %v5112, %v5111
      %v5189 = vpack.c.b16 %v5114, %v5113
      %v5190 = vpack.c.b16 %v5116, %v5115
      %v5191 = vpack.c.b16 %v5118, %v5117
      %v5192 = vpack.c.b16 %v5120, %v5119
      %5265 = vmatpush.bf16.msra.mxu0 %v5128
      %5266 = vmatpush.bf16.msra.mxu0 %v5127
      %5267 = vmatpush.bf16.msra.mxu0 %v5126
      %5268 = vmatpush.bf16.msra.mxu0 %v5125
      %5269 = vmatpush.bf16.msra.mxu0 %v5124
      %5270 = vmatpush.bf16.msra.mxu0 %v5123
      %5271 = vmatpush.bf16.msra.mxu0 %v5122
      %5272 = vmatpush.bf16.msra.mxu0 %v5121
      %5273 = vmatmul.bf16.gmra.mxu0 %v3889
      %v5274 = vpop.f32.mrf.mxu0
      %v5275 = vadd.f32 0.0, %v5274
      %v5276 = vpop.f32.mrf.mxu0
      %v5277 = vadd.f32 0.0, %v5276
      %5278 = vmatmul.bf16.gmra.mxu0 %v3890
      %v5279 = vpop.f32.mrf.mxu0
      %v5280 = vadd.f32 0.0, %v5279
      %v5281 = vpop.f32.mrf.mxu0
      %v5282 = vadd.f32 0.0, %v5281
      %5283 = vmatmul.bf16.gmra.mxu0 %v3891
      %v5284 = vpop.f32.mrf.mxu0
      %v5285 = vadd.f32 0.0, %v5284
      %v5286 = vpop.f32.mrf.mxu0
      %v5287 = vadd.f32 0.0, %v5286
      %5288 = vmatmul.bf16.gmra.mxu0 %v3892
      %v5289 = vpop.f32.mrf.mxu0
      %v5290 = vadd.f32 0.0, %v5289
      %v5291 = vpop.f32.mrf.mxu0
      %v5292 = vadd.f32 0.0, %v5291
      %5293 = vmatmul.bf16.gmra.mxu0 %v3893
      %v5294 = vpop.f32.mrf.mxu0
      %v5295 = vadd.f32 0.0, %v5294
      %v5296 = vpop.f32.mrf.mxu0
      %v5297 = vadd.f32 0.0, %v5296
      %5298 = vmatmul.bf16.gmra.mxu0 %v3894
      %v5299 = vpop.f32.mrf.mxu0
      %v5300 = vadd.f32 0.0, %v5299
      %v5301 = vpop.f32.mrf.mxu0
      %v5302 = vadd.f32 0.0, %v5301
      %5303 = vmatmul.bf16.gmra.mxu0 %v3895
      %v5304 = vpop.f32.mrf.mxu0
      %v5305 = vadd.f32 0.0, %v5304
      %v5306 = vpop.f32.mrf.mxu0
      %v5307 = vadd.f32 0.0, %v5306
      %5308 = vmatmul.bf16.gmra.mxu0 %v3896
      %v5309 = vpop.f32.mrf.mxu0
      %v5310 = vadd.f32 0.0, %v5309
      %v5311 = vpop.f32.mrf.mxu0
      %v5312 = vadd.f32 0.0, %v5311
      %5313 = vmatmul.bf16.gmra.mxu0 %v3897
      %v5314 = vpop.f32.mrf.mxu0
      %v5315 = vadd.f32 0.0, %v5314
      %v5316 = vpop.f32.mrf.mxu0
      %v5317 = vadd.f32 0.0, %v5316
      %5318 = vmatmul.bf16.gmra.mxu0 %v3898
      %v5319 = vpop.f32.mrf.mxu0
      %v5320 = vadd.f32 0.0, %v5319
      %v5321 = vpop.f32.mrf.mxu0
      %v5322 = vadd.f32 0.0, %v5321
      %5323 = vmatmul.bf16.gmra.mxu0 %v3899
      %v5324 = vpop.f32.mrf.mxu0
      %v5325 = vadd.f32 0.0, %v5324
      %v5326 = vpop.f32.mrf.mxu0
      %v5327 = vadd.f32 0.0, %v5326
      %5328 = vmatmul.bf16.gmra.mxu0 %v3900
      %v5329 = vpop.f32.mrf.mxu0
      %v5330 = vadd.f32 0.0, %v5329
      %v5331 = vpop.f32.mrf.mxu0
      %v5332 = vadd.f32 0.0, %v5331
      %5333 = vmatmul.bf16.gmra.mxu0 %v3901
      %v5334 = vpop.f32.mrf.mxu0
      %v5335 = vadd.f32 0.0, %v5334
      %v5336 = vpop.f32.mrf.mxu0
      %v5337 = vadd.f32 0.0, %v5336
      %5338 = vmatmul.bf16.gmra.mxu0 %v3902
      %v5339 = vpop.f32.mrf.mxu0
      %v5340 = vadd.f32 0.0, %v5339
      %v5341 = vpop.f32.mrf.mxu0
      %v5342 = vadd.f32 0.0, %v5341
      %5343 = vmatmul.bf16.gmra.mxu0 %v3903
      %v5344 = vpop.f32.mrf.mxu0
      %v5345 = vadd.f32 0.0, %v5344
      %v5346 = vpop.f32.mrf.mxu0
      %v5347 = vadd.f32 0.0, %v5346
      %5348 = vmatmul.bf16.gmra.mxu0 %v3904
      %v5349 = vpop.f32.mrf.mxu0
      %v5350 = vadd.f32 0.0, %v5349
      %v5351 = vpop.f32.mrf.mxu0
      %v5352 = vadd.f32 0.0, %v5351
      %5353 = vdwg.mxu0
      %5354 = vmatpush.bf16.msra.mxu0 %v5136
      %5355 = vmatpush.bf16.msra.mxu0 %v5135
      %5356 = vmatpush.bf16.msra.mxu0 %v5134
      %5357 = vmatpush.bf16.msra.mxu0 %v5133
      %5358 = vmatpush.bf16.msra.mxu0 %v5132
      %5359 = vmatpush.bf16.msra.mxu0 %v5131
      %5360 = vmatpush.bf16.msra.mxu0 %v5130
      %5361 = vmatpush.bf16.msra.mxu0 %v5129
      %5362 = vmatmul.bf16.gmra.mxu0 %v3985
      %v5363 = vpop.f32.mrf.mxu0
      %v5364 = vadd.f32 %v5275, %v5363
      %v5365 = vpop.f32.mrf.mxu0
      %v5366 = vadd.f32 %v5277, %v5365
      %5367 = vmatmul.bf16.gmra.mxu0 %v3986
      %v5368 = vpop.f32.mrf.mxu0
      %v5369 = vadd.f32 %v5280, %v5368
      %v5370 = vpop.f32.mrf.mxu0
      %v5371 = vadd.f32 %v5282, %v5370
      %5372 = vmatmul.bf16.gmra.mxu0 %v3987
      %v5373 = vpop.f32.mrf.mxu0
      %v5374 = vadd.f32 %v5285, %v5373
      %v5375 = vpop.f32.mrf.mxu0
      %v5376 = vadd.f32 %v5287, %v5375
      %5377 = vmatmul.bf16.gmra.mxu0 %v3988
      %v5378 = vpop.f32.mrf.mxu0
      %v5379 = vadd.f32 %v5290, %v5378
      %v5380 = vpop.f32.mrf.mxu0
      %v5381 = vadd.f32 %v5292, %v5380
      %5382 = vmatmul.bf16.gmra.mxu0 %v3989
      %v5383 = vpop.f32.mrf.mxu0
      %v5384 = vadd.f32 %v5295, %v5383
      %v5385 = vpop.f32.mrf.mxu0
      %v5386 = vadd.f32 %v5297, %v5385
      %5387 = vmatmul.bf16.gmra.mxu0 %v3990
      %v5388 = vpop.f32.mrf.mxu0
      %v5389 = vadd.f32 %v5300, %v5388
      %v5390 = vpop.f32.mrf.mxu0
      %v5391 = vadd.f32 %v5302, %v5390
      %5392 = vmatmul.bf16.gmra.mxu0 %v3991
      %v5393 = vpop.f32.mrf.mxu0
      %v5394 = vadd.f32 %v5305, %v5393
      %v5395 = vpop.f32.mrf.mxu0
      %v5396 = vadd.f32 %v5307, %v5395
      %5397 = vmatmul.bf16.gmra.mxu0 %v3992
      %v5398 = vpop.f32.mrf.mxu0
      %v5399 = vadd.f32 %v5310, %v5398
      %v5400 = vpop.f32.mrf.mxu0
      %v5401 = vadd.f32 %v5312, %v5400
      %5402 = vmatmul.bf16.gmra.mxu0 %v3993
      %v5403 = vpop.f32.mrf.mxu0
      %v5404 = vadd.f32 %v5315, %v5403
      %v5405 = vpop.f32.mrf.mxu0
      %v5406 = vadd.f32 %v5317, %v5405
      %5407 = vmatmul.bf16.gmra.mxu0 %v3994
      %v5408 = vpop.f32.mrf.mxu0
      %v5409 = vadd.f32 %v5320, %v5408
      %v5410 = vpop.f32.mrf.mxu0
      %v5411 = vadd.f32 %v5322, %v5410
      %5412 = vmatmul.bf16.gmra.mxu0 %v3995
      %v5413 = vpop.f32.mrf.mxu0
      %v5414 = vadd.f32 %v5325, %v5413
      %v5415 = vpop.f32.mrf.mxu0
      %v5416 = vadd.f32 %v5327, %v5415
      %5417 = vmatmul.bf16.gmra.mxu0 %v3996
      %v5418 = vpop.f32.mrf.mxu0
      %v5419 = vadd.f32 %v5330, %v5418
      %v5420 = vpop.f32.mrf.mxu0
      %v5421 = vadd.f32 %v5332, %v5420
      %5422 = vmatmul.bf16.gmra.mxu0 %v3997
      %v5423 = vpop.f32.mrf.mxu0
      %v5424 = vadd.f32 %v5335, %v5423
      %v5425 = vpop.f32.mrf.mxu0
      %v5426 = vadd.f32 %v5337, %v5425
      %5427 = vmatmul.bf16.gmra.mxu0 %v3998
      %v5428 = vpop.f32.mrf.mxu0
      %v5429 = vadd.f32 %v5340, %v5428
      %v5430 = vpop.f32.mrf.mxu0
      %v5431 = vadd.f32 %v5342, %v5430
      %5432 = vmatmul.bf16.gmra.mxu0 %v3999
      %v5433 = vpop.f32.mrf.mxu0
      %v5434 = vadd.f32 %v5345, %v5433
      %v5435 = vpop.f32.mrf.mxu0
      %v5436 = vadd.f32 %v5347, %v5435
      %5437 = vmatmul.bf16.gmra.mxu0 %v4000
      %v5438 = vpop.f32.mrf.mxu0
      %v5439 = vadd.f32 %v5350, %v5438
      %v5440 = vpop.f32.mrf.mxu0
      %v5441 = vadd.f32 %v5352, %v5440
      %5442 = vdwg.mxu0
      %5443 = vmatpush.bf16.msra.mxu0 %v5144
      %5444 = vmatpush.bf16.msra.mxu0 %v5143
      %5445 = vmatpush.bf16.msra.mxu0 %v5142
      %5446 = vmatpush.bf16.msra.mxu0 %v5141
      %5447 = vmatpush.bf16.msra.mxu0 %v5140
      %5448 = vmatpush.bf16.msra.mxu0 %v5139
      %5449 = vmatpush.bf16.msra.mxu0 %v5138
      %5450 = vmatpush.bf16.msra.mxu0 %v5137
      %5451 = vmatmul.bf16.gmra.mxu0 %v4081
      %v5452 = vpop.f32.mrf.mxu0
      %v5453 = vadd.f32 %v5364, %v5452
      %v5454 = vpop.f32.mrf.mxu0
      %v5455 = vadd.f32 %v5366, %v5454
      %5456 = vmatmul.bf16.gmra.mxu0 %v4082
      %v5457 = vpop.f32.mrf.mxu0
      %v5458 = vadd.f32 %v5369, %v5457
      %v5459 = vpop.f32.mrf.mxu0
      %v5460 = vadd.f32 %v5371, %v5459
      %5461 = vmatmul.bf16.gmra.mxu0 %v4083
      %v5462 = vpop.f32.mrf.mxu0
      %v5463 = vadd.f32 %v5374, %v5462
      %v5464 = vpop.f32.mrf.mxu0
      %v5465 = vadd.f32 %v5376, %v5464
      %5466 = vmatmul.bf16.gmra.mxu0 %v4084
      %v5467 = vpop.f32.mrf.mxu0
      %v5468 = vadd.f32 %v5379, %v5467
      %v5469 = vpop.f32.mrf.mxu0
      %v5470 = vadd.f32 %v5381, %v5469
      %5471 = vmatmul.bf16.gmra.mxu0 %v4085
      %v5472 = vpop.f32.mrf.mxu0
      %v5473 = vadd.f32 %v5384, %v5472
      %v5474 = vpop.f32.mrf.mxu0
      %v5475 = vadd.f32 %v5386, %v5474
      %5476 = vmatmul.bf16.gmra.mxu0 %v4086
      %v5477 = vpop.f32.mrf.mxu0
      %v5478 = vadd.f32 %v5389, %v5477
      %v5479 = vpop.f32.mrf.mxu0
      %v5480 = vadd.f32 %v5391, %v5479
      %5481 = vmatmul.bf16.gmra.mxu0 %v4087
      %v5482 = vpop.f32.mrf.mxu0
      %v5483 = vadd.f32 %v5394, %v5482
      %v5484 = vpop.f32.mrf.mxu0
      %v5485 = vadd.f32 %v5396, %v5484
      %5486 = vmatmul.bf16.gmra.mxu0 %v4088
      %v5487 = vpop.f32.mrf.mxu0
      %v5488 = vadd.f32 %v5399, %v5487
      %v5489 = vpop.f32.mrf.mxu0
      %v5490 = vadd.f32 %v5401, %v5489
      %5491 = vmatmul.bf16.gmra.mxu0 %v4089
      %v5492 = vpop.f32.mrf.mxu0
      %v5493 = vadd.f32 %v5404, %v5492
      %v5494 = vpop.f32.mrf.mxu0
      %v5495 = vadd.f32 %v5406, %v5494
      %5496 = vmatmul.bf16.gmra.mxu0 %v4090
      %v5497 = vpop.f32.mrf.mxu0
      %v5498 = vadd.f32 %v5409, %v5497
      %v5499 = vpop.f32.mrf.mxu0
      %v5500 = vadd.f32 %v5411, %v5499
      %5501 = vmatmul.bf16.gmra.mxu0 %v4091
      %v5502 = vpop.f32.mrf.mxu0
      %v5503 = vadd.f32 %v5414, %v5502
      %v5504 = vpop.f32.mrf.mxu0
      %v5505 = vadd.f32 %v5416, %v5504
      %5506 = vmatmul.bf16.gmra.mxu0 %v4092
      %v5507 = vpop.f32.mrf.mxu0
      %v5508 = vadd.f32 %v5419, %v5507
      %v5509 = vpop.f32.mrf.mxu0
      %v5510 = vadd.f32 %v5421, %v5509
      %5511 = vmatmul.bf16.gmra.mxu0 %v4093
      %v5512 = vpop.f32.mrf.mxu0
      %v5513 = vadd.f32 %v5424, %v5512
      %v5514 = vpop.f32.mrf.mxu0
      %v5515 = vadd.f32 %v5426, %v5514
      %5516 = vmatmul.bf16.gmra.mxu0 %v4094
      %v5517 = vpop.f32.mrf.mxu0
      %v5518 = vadd.f32 %v5429, %v5517
      %v5519 = vpop.f32.mrf.mxu0
      %v5520 = vadd.f32 %v5431, %v5519
      %5521 = vmatmul.bf16.gmra.mxu0 %v4095
      %v5522 = vpop.f32.mrf.mxu0
      %v5523 = vadd.f32 %v5434, %v5522
      %v5524 = vpop.f32.mrf.mxu0
      %v5525 = vadd.f32 %v5436, %v5524
      %5526 = vmatmul.bf16.gmra.mxu0 %v4096
      %v5527 = vpop.f32.mrf.mxu0
      %v5528 = vadd.f32 %v5439, %v5527
      %v5529 = vpop.f32.mrf.mxu0
      %v5530 = vadd.f32 %v5441, %v5529
      %5531 = vdwg.mxu0
      %5532 = vmatpush.bf16.msra.mxu0 %v5152
      %5533 = vmatpush.bf16.msra.mxu0 %v5151
      %5534 = vmatpush.bf16.msra.mxu0 %v5150
      %5535 = vmatpush.bf16.msra.mxu0 %v5149
      %5536 = vmatpush.bf16.msra.mxu0 %v5148
      %5537 = vmatpush.bf16.msra.mxu0 %v5147
      %5538 = vmatpush.bf16.msra.mxu0 %v5146
      %5539 = vmatpush.bf16.msra.mxu0 %v5145
      %5540 = vmatmul.bf16.gmra.mxu0 %v4177
      %v5541 = vpop.f32.mrf.mxu0
      %v5542 = vadd.f32 %v5453, %v5541
      %v5543 = vpop.f32.mrf.mxu0
      %v5544 = vadd.f32 %v5455, %v5543
      %5545 = vmatmul.bf16.gmra.mxu0 %v4178
      %v5546 = vpop.f32.mrf.mxu0
      %v5547 = vadd.f32 %v5458, %v5546
      %v5548 = vpop.f32.mrf.mxu0
      %v5549 = vadd.f32 %v5460, %v5548
      %5550 = vmatmul.bf16.gmra.mxu0 %v4179
      %v5551 = vpop.f32.mrf.mxu0
      %v5552 = vadd.f32 %v5463, %v5551
      %v5553 = vpop.f32.mrf.mxu0
      %v5554 = vadd.f32 %v5465, %v5553
      %5555 = vmatmul.bf16.gmra.mxu0 %v4180
      %v5556 = vpop.f32.mrf.mxu0
      %v5557 = vadd.f32 %v5468, %v5556
      %v5558 = vpop.f32.mrf.mxu0
      %v5559 = vadd.f32 %v5470, %v5558
      %5560 = vmatmul.bf16.gmra.mxu0 %v4181
      %v5561 = vpop.f32.mrf.mxu0
      %v5562 = vadd.f32 %v5473, %v5561
      %v5563 = vpop.f32.mrf.mxu0
      %v5564 = vadd.f32 %v5475, %v5563
      %5565 = vmatmul.bf16.gmra.mxu0 %v4182
      %v5566 = vpop.f32.mrf.mxu0
      %v5567 = vadd.f32 %v5478, %v5566
      %v5568 = vpop.f32.mrf.mxu0
      %v5569 = vadd.f32 %v5480, %v5568
      %5570 = vmatmul.bf16.gmra.mxu0 %v4183
      %v5571 = vpop.f32.mrf.mxu0
      %v5572 = vadd.f32 %v5483, %v5571
      %v5573 = vpop.f32.mrf.mxu0
      %v5574 = vadd.f32 %v5485, %v5573
      %5575 = vmatmul.bf16.gmra.mxu0 %v4184
      %v5576 = vpop.f32.mrf.mxu0
      %v5577 = vadd.f32 %v5488, %v5576
      %v5578 = vpop.f32.mrf.mxu0
      %v5579 = vadd.f32 %v5490, %v5578
      %5580 = vmatmul.bf16.gmra.mxu0 %v4185
      %v5581 = vpop.f32.mrf.mxu0
      %v5582 = vadd.f32 %v5493, %v5581
      %v5583 = vpop.f32.mrf.mxu0
      %v5584 = vadd.f32 %v5495, %v5583
      %5585 = vmatmul.bf16.gmra.mxu0 %v4186
      %v5586 = vpop.f32.mrf.mxu0
      %v5587 = vadd.f32 %v5498, %v5586
      %v5588 = vpop.f32.mrf.mxu0
      %v5589 = vadd.f32 %v5500, %v5588
      %5590 = vmatmul.bf16.gmra.mxu0 %v4187
      %v5591 = vpop.f32.mrf.mxu0
      %v5592 = vadd.f32 %v5503, %v5591
      %v5593 = vpop.f32.mrf.mxu0
      %v5594 = vadd.f32 %v5505, %v5593
      %5595 = vmatmul.bf16.gmra.mxu0 %v4188
      %v5596 = vpop.f32.mrf.mxu0
      %v5597 = vadd.f32 %v5508, %v5596
      %v5598 = vpop.f32.mrf.mxu0
      %v5599 = vadd.f32 %v5510, %v5598
      %5600 = vmatmul.bf16.gmra.mxu0 %v4189
      %v5601 = vpop.f32.mrf.mxu0
      %v5602 = vadd.f32 %v5513, %v5601
      %v5603 = vpop.f32.mrf.mxu0
      %v5604 = vadd.f32 %v5515, %v5603
      %5605 = vmatmul.bf16.gmra.mxu0 %v4190
      %v5606 = vpop.f32.mrf.mxu0
      %v5607 = vadd.f32 %v5518, %v5606
      %v5608 = vpop.f32.mrf.mxu0
      %v5609 = vadd.f32 %v5520, %v5608
      %5610 = vmatmul.bf16.gmra.mxu0 %v4191
      %v5611 = vpop.f32.mrf.mxu0
      %v5612 = vadd.f32 %v5523, %v5611
      %v5613 = vpop.f32.mrf.mxu0
      %v5614 = vadd.f32 %v5525, %v5613
      %5615 = vmatmul.bf16.gmra.mxu0 %v4192
      %v5616 = vpop.f32.mrf.mxu0
      %v5617 = vadd.f32 %v5528, %v5616
      %v5618 = vpop.f32.mrf.mxu0
      %v5619 = vadd.f32 %v5530, %v5618
      %5620 = vdwg.mxu0
      %5621 = vmatpush.bf16.msra.mxu0 %v5160
      %5622 = vmatpush.bf16.msra.mxu0 %v5159
      %5623 = vmatpush.bf16.msra.mxu0 %v5158
      %5624 = vmatpush.bf16.msra.mxu0 %v5157
      %5625 = vmatpush.bf16.msra.mxu0 %v5156
      %5626 = vmatpush.bf16.msra.mxu0 %v5155
      %5627 = vmatpush.bf16.msra.mxu0 %v5154
      %5628 = vmatpush.bf16.msra.mxu0 %v5153
      %5629 = vmatmul.bf16.gmra.mxu0 %v4273
      %v5630 = vpop.f32.mrf.mxu0
      %v5631 = vadd.f32 %v5542, %v5630
      %v5632 = vpop.f32.mrf.mxu0
      %v5633 = vadd.f32 %v5544, %v5632
      %5634 = vmatmul.bf16.gmra.mxu0 %v4274
      %v5635 = vpop.f32.mrf.mxu0
      %v5636 = vadd.f32 %v5547, %v5635
      %v5637 = vpop.f32.mrf.mxu0
      %v5638 = vadd.f32 %v5549, %v5637
      %5639 = vmatmul.bf16.gmra.mxu0 %v4275
      %v5640 = vpop.f32.mrf.mxu0
      %v5641 = vadd.f32 %v5552, %v5640
      %v5642 = vpop.f32.mrf.mxu0
      %v5643 = vadd.f32 %v5554, %v5642
      %5644 = vmatmul.bf16.gmra.mxu0 %v4276
      %v5645 = vpop.f32.mrf.mxu0
      %v5646 = vadd.f32 %v5557, %v5645
      %v5647 = vpop.f32.mrf.mxu0
      %v5648 = vadd.f32 %v5559, %v5647
      %5649 = vmatmul.bf16.gmra.mxu0 %v4277
      %v5650 = vpop.f32.mrf.mxu0
      %v5651 = vadd.f32 %v5562, %v5650
      %v5652 = vpop.f32.mrf.mxu0
      %v5653 = vadd.f32 %v5564, %v5652
      %5654 = vmatmul.bf16.gmra.mxu0 %v4278
      %v5655 = vpop.f32.mrf.mxu0
      %v5656 = vadd.f32 %v5567, %v5655
      %v5657 = vpop.f32.mrf.mxu0
      %v5658 = vadd.f32 %v5569, %v5657
      %5659 = vmatmul.bf16.gmra.mxu0 %v4279
      %v5660 = vpop.f32.mrf.mxu0
      %v5661 = vadd.f32 %v5572, %v5660
      %v5662 = vpop.f32.mrf.mxu0
      %v5663 = vadd.f32 %v5574, %v5662
      %5664 = vmatmul.bf16.gmra.mxu0 %v4280
      %v5665 = vpop.f32.mrf.mxu0
      %v5666 = vadd.f32 %v5577, %v5665
      %v5667 = vpop.f32.mrf.mxu0
      %v5668 = vadd.f32 %v5579, %v5667
      %5669 = vmatmul.bf16.gmra.mxu0 %v4281
      %v5670 = vpop.f32.mrf.mxu0
      %v5671 = vadd.f32 %v5582, %v5670
      %v5672 = vpop.f32.mrf.mxu0
      %v5673 = vadd.f32 %v5584, %v5672
      %5674 = vmatmul.bf16.gmra.mxu0 %v4282
      %v5675 = vpop.f32.mrf.mxu0
      %v5676 = vadd.f32 %v5587, %v5675
      %v5677 = vpop.f32.mrf.mxu0
      %v5678 = vadd.f32 %v5589, %v5677
      %5679 = vmatmul.bf16.gmra.mxu0 %v4283
      %v5680 = vpop.f32.mrf.mxu0
      %v5681 = vadd.f32 %v5592, %v5680
      %v5682 = vpop.f32.mrf.mxu0
      %v5683 = vadd.f32 %v5594, %v5682
      %5684 = vmatmul.bf16.gmra.mxu0 %v4284
      %v5685 = vpop.f32.mrf.mxu0
      %v5686 = vadd.f32 %v5597, %v5685
      %v5687 = vpop.f32.mrf.mxu0
      %v5688 = vadd.f32 %v5599, %v5687
      %5689 = vmatmul.bf16.gmra.mxu0 %v4285
      %v5690 = vpop.f32.mrf.mxu0
      %v5691 = vadd.f32 %v5602, %v5690
      %v5692 = vpop.f32.mrf.mxu0
      %v5693 = vadd.f32 %v5604, %v5692
      %5694 = vmatmul.bf16.gmra.mxu0 %v4286
      %v5695 = vpop.f32.mrf.mxu0
      %v5696 = vadd.f32 %v5607, %v5695
      %v5697 = vpop.f32.mrf.mxu0
      %v5698 = vadd.f32 %v5609, %v5697
      %5699 = vmatmul.bf16.gmra.mxu0 %v4287
      %v5700 = vpop.f32.mrf.mxu0
      %v5701 = vadd.f32 %v5612, %v5700
      %v5702 = vpop.f32.mrf.mxu0
      %v5703 = vadd.f32 %v5614, %v5702
      %5704 = vmatmul.bf16.gmra.mxu0 %v4288
      %v5705 = vpop.f32.mrf.mxu0
      %v5706 = vadd.f32 %v5617, %v5705
      %v5707 = vpop.f32.mrf.mxu0
      %v5708 = vadd.f32 %v5619, %v5707
      %5709 = vdwg.mxu0
      %5710 = vmatpush.bf16.msra.mxu0 %v5168
      %5711 = vmatpush.bf16.msra.mxu0 %v5167
      %5712 = vmatpush.bf16.msra.mxu0 %v5166
      %5713 = vmatpush.bf16.msra.mxu0 %v5165
      %5714 = vmatpush.bf16.msra.mxu0 %v5164
      %5715 = vmatpush.bf16.msra.mxu0 %v5163
      %5716 = vmatpush.bf16.msra.mxu0 %v5162
      %5717 = vmatpush.bf16.msra.mxu0 %v5161
      %5718 = vmatmul.bf16.gmra.mxu0 %v4369
      %v5719 = vpop.f32.mrf.mxu0
      %v5720 = vadd.f32 %v5631, %v5719
      %v5721 = vpop.f32.mrf.mxu0
      %v5722 = vadd.f32 %v5633, %v5721
      %5723 = vmatmul.bf16.gmra.mxu0 %v4370
      %v5724 = vpop.f32.mrf.mxu0
      %v5725 = vadd.f32 %v5636, %v5724
      %v5726 = vpop.f32.mrf.mxu0
      %v5727 = vadd.f32 %v5638, %v5726
      %5728 = vmatmul.bf16.gmra.mxu0 %v4371
      %v5729 = vpop.f32.mrf.mxu0
      %v5730 = vadd.f32 %v5641, %v5729
      %v5731 = vpop.f32.mrf.mxu0
      %v5732 = vadd.f32 %v5643, %v5731
      %5733 = vmatmul.bf16.gmra.mxu0 %v4372
      %v5734 = vpop.f32.mrf.mxu0
      %v5735 = vadd.f32 %v5646, %v5734
      %v5736 = vpop.f32.mrf.mxu0
      %v5737 = vadd.f32 %v5648, %v5736
      %5738 = vmatmul.bf16.gmra.mxu0 %v4373
      %v5739 = vpop.f32.mrf.mxu0
      %v5740 = vadd.f32 %v5651, %v5739
      %v5741 = vpop.f32.mrf.mxu0
      %v5742 = vadd.f32 %v5653, %v5741
      %5743 = vmatmul.bf16.gmra.mxu0 %v4374
      %v5744 = vpop.f32.mrf.mxu0
      %v5745 = vadd.f32 %v5656, %v5744
      %v5746 = vpop.f32.mrf.mxu0
      %v5747 = vadd.f32 %v5658, %v5746
      %5748 = vmatmul.bf16.gmra.mxu0 %v4375
      %v5749 = vpop.f32.mrf.mxu0
      %v5750 = vadd.f32 %v5661, %v5749
      %v5751 = vpop.f32.mrf.mxu0
      %v5752 = vadd.f32 %v5663, %v5751
      %5753 = vmatmul.bf16.gmra.mxu0 %v4376
      %v5754 = vpop.f32.mrf.mxu0
      %v5755 = vadd.f32 %v5666, %v5754
      %v5756 = vpop.f32.mrf.mxu0
      %v5757 = vadd.f32 %v5668, %v5756
      %5758 = vmatmul.bf16.gmra.mxu0 %v4377
      %v5759 = vpop.f32.mrf.mxu0
      %v5760 = vadd.f32 %v5671, %v5759
      %v5761 = vpop.f32.mrf.mxu0
      %v5762 = vadd.f32 %v5673, %v5761
      %5763 = vmatmul.bf16.gmra.mxu0 %v4378
      %v5764 = vpop.f32.mrf.mxu0
      %v5765 = vadd.f32 %v5676, %v5764
      %v5766 = vpop.f32.mrf.mxu0
      %v5767 = vadd.f32 %v5678, %v5766
      %5768 = vmatmul.bf16.gmra.mxu0 %v4379
      %v5769 = vpop.f32.mrf.mxu0
      %v5770 = vadd.f32 %v5681, %v5769
      %v5771 = vpop.f32.mrf.mxu0
      %v5772 = vadd.f32 %v5683, %v5771
      %5773 = vmatmul.bf16.gmra.mxu0 %v4380
      %v5774 = vpop.f32.mrf.mxu0
      %v5775 = vadd.f32 %v5686, %v5774
      %v5776 = vpop.f32.mrf.mxu0
      %v5777 = vadd.f32 %v5688, %v5776
      %5778 = vmatmul.bf16.gmra.mxu0 %v4381
      %v5779 = vpop.f32.mrf.mxu0
      %v5780 = vadd.f32 %v5691, %v5779
      %v5781 = vpop.f32.mrf.mxu0
      %v5782 = vadd.f32 %v5693, %v5781
      %5783 = vmatmul.bf16.gmra.mxu0 %v4382
      %v5784 = vpop.f32.mrf.mxu0
      %v5785 = vadd.f32 %v5696, %v5784
      %v5786 = vpop.f32.mrf.mxu0
      %v5787 = vadd.f32 %v5698, %v5786
      %5788 = vmatmul.bf16.gmra.mxu0 %v4383
      %v5789 = vpop.f32.mrf.mxu0
      %v5790 = vadd.f32 %v5701, %v5789
      %v5791 = vpop.f32.mrf.mxu0
      %v5792 = vadd.f32 %v5703, %v5791
      %5793 = vmatmul.bf16.gmra.mxu0 %v4384
      %v5794 = vpop.f32.mrf.mxu0
      %v5795 = vadd.f32 %v5706, %v5794
      %v5796 = vpop.f32.mrf.mxu0
      %v5797 = vadd.f32 %v5708, %v5796
      %5798 = vdwg.mxu0
      %5799 = vmatpush.bf16.msra.mxu0 %v5176
      %5800 = vmatpush.bf16.msra.mxu0 %v5175
      %5801 = vmatpush.bf16.msra.mxu0 %v5174
      %5802 = vmatpush.bf16.msra.mxu0 %v5173
      %5803 = vmatpush.bf16.msra.mxu0 %v5172
      %5804 = vmatpush.bf16.msra.mxu0 %v5171
      %5805 = vmatpush.bf16.msra.mxu0 %v5170
      %5806 = vmatpush.bf16.msra.mxu0 %v5169
      %5807 = vmatmul.bf16.gmra.mxu0 %v4465
      %v5808 = vpop.f32.mrf.mxu0
      %v5809 = vadd.f32 %v5720, %v5808
      %v5810 = vpop.f32.mrf.mxu0
      %v5811 = vadd.f32 %v5722, %v5810
      %5812 = vmatmul.bf16.gmra.mxu0 %v4466
      %v5813 = vpop.f32.mrf.mxu0
      %v5814 = vadd.f32 %v5725, %v5813
      %v5815 = vpop.f32.mrf.mxu0
      %v5816 = vadd.f32 %v5727, %v5815
      %5817 = vmatmul.bf16.gmra.mxu0 %v4467
      %v5818 = vpop.f32.mrf.mxu0
      %v5819 = vadd.f32 %v5730, %v5818
      %v5820 = vpop.f32.mrf.mxu0
      %v5821 = vadd.f32 %v5732, %v5820
      %5822 = vmatmul.bf16.gmra.mxu0 %v4468
      %v5823 = vpop.f32.mrf.mxu0
      %v5824 = vadd.f32 %v5735, %v5823
      %v5825 = vpop.f32.mrf.mxu0
      %v5826 = vadd.f32 %v5737, %v5825
      %5827 = vmatmul.bf16.gmra.mxu0 %v4469
      %v5828 = vpop.f32.mrf.mxu0
      %v5829 = vadd.f32 %v5740, %v5828
      %v5830 = vpop.f32.mrf.mxu0
      %v5831 = vadd.f32 %v5742, %v5830
      %5832 = vmatmul.bf16.gmra.mxu0 %v4470
      %v5833 = vpop.f32.mrf.mxu0
      %v5834 = vadd.f32 %v5745, %v5833
      %v5835 = vpop.f32.mrf.mxu0
      %v5836 = vadd.f32 %v5747, %v5835
      %5837 = vmatmul.bf16.gmra.mxu0 %v4471
      %v5838 = vpop.f32.mrf.mxu0
      %v5839 = vadd.f32 %v5750, %v5838
      %v5840 = vpop.f32.mrf.mxu0
      %v5841 = vadd.f32 %v5752, %v5840
      %5842 = vmatmul.bf16.gmra.mxu0 %v4472
      %v5843 = vpop.f32.mrf.mxu0
      %v5844 = vadd.f32 %v5755, %v5843
      %v5845 = vpop.f32.mrf.mxu0
      %v5846 = vadd.f32 %v5757, %v5845
      %5847 = vmatmul.bf16.gmra.mxu0 %v4473
      %v5848 = vpop.f32.mrf.mxu0
      %v5849 = vadd.f32 %v5760, %v5848
      %v5850 = vpop.f32.mrf.mxu0
      %v5851 = vadd.f32 %v5762, %v5850
      %5852 = vmatmul.bf16.gmra.mxu0 %v4474
      %v5853 = vpop.f32.mrf.mxu0
      %v5854 = vadd.f32 %v5765, %v5853
      %v5855 = vpop.f32.mrf.mxu0
      %v5856 = vadd.f32 %v5767, %v5855
      %5857 = vmatmul.bf16.gmra.mxu0 %v4475
      %v5858 = vpop.f32.mrf.mxu0
      %v5859 = vadd.f32 %v5770, %v5858
      %v5860 = vpop.f32.mrf.mxu0
      %v5861 = vadd.f32 %v5772, %v5860
      %5862 = vmatmul.bf16.gmra.mxu0 %v4476
      %v5863 = vpop.f32.mrf.mxu0
      %v5864 = vadd.f32 %v5775, %v5863
      %v5865 = vpop.f32.mrf.mxu0
      %v5866 = vadd.f32 %v5777, %v5865
      %5867 = vmatmul.bf16.gmra.mxu0 %v4477
      %v5868 = vpop.f32.mrf.mxu0
      %v5869 = vadd.f32 %v5780, %v5868
      %v5870 = vpop.f32.mrf.mxu0
      %v5871 = vadd.f32 %v5782, %v5870
      %5872 = vmatmul.bf16.gmra.mxu0 %v4478
      %v5873 = vpop.f32.mrf.mxu0
      %v5874 = vadd.f32 %v5785, %v5873
      %v5875 = vpop.f32.mrf.mxu0
      %v5876 = vadd.f32 %v5787, %v5875
      %5877 = vmatmul.bf16.gmra.mxu0 %v4479
      %v5878 = vpop.f32.mrf.mxu0
      %v5879 = vadd.f32 %v5790, %v5878
      %v5880 = vpop.f32.mrf.mxu0
      %v5881 = vadd.f32 %v5792, %v5880
      %5882 = vmatmul.bf16.gmra.mxu0 %v4480
      %v5883 = vpop.f32.mrf.mxu0
      %v5884 = vadd.f32 %v5795, %v5883
      %v5885 = vpop.f32.mrf.mxu0
      %v5886 = vadd.f32 %v5797, %v5885
      %5887 = vdwg.mxu0
      %5888 = vmatpush.bf16.msra.mxu0 %v5184
      %5889 = vmatpush.bf16.msra.mxu0 %v5183
      %5890 = vmatpush.bf16.msra.mxu0 %v5182
      %5891 = vmatpush.bf16.msra.mxu0 %v5181
      %5892 = vmatpush.bf16.msra.mxu0 %v5180
      %5893 = vmatpush.bf16.msra.mxu0 %v5179
      %5894 = vmatpush.bf16.msra.mxu0 %v5178
      %5895 = vmatpush.bf16.msra.mxu0 %v5177
      %5896 = vmatmul.bf16.gmra.mxu0 %v4561
      %v5897 = vpop.f32.mrf.mxu0
      %v5898 = vadd.f32 %v5809, %v5897
      %v5899 = vpop.f32.mrf.mxu0
      %v5900 = vadd.f32 %v5811, %v5899
      %5901 = vmatmul.bf16.gmra.mxu0 %v4562
      %v5902 = vpop.f32.mrf.mxu0
      %v5903 = vadd.f32 %v5814, %v5902
      %v5904 = vpop.f32.mrf.mxu0
      %v5905 = vadd.f32 %v5816, %v5904
      %5906 = vmatmul.bf16.gmra.mxu0 %v4563
      %v5907 = vpop.f32.mrf.mxu0
      %v5908 = vadd.f32 %v5819, %v5907
      %v5909 = vpop.f32.mrf.mxu0
      %v5910 = vadd.f32 %v5821, %v5909
      %5911 = vmatmul.bf16.gmra.mxu0 %v4564
      %v5912 = vpop.f32.mrf.mxu0
      %v5913 = vadd.f32 %v5824, %v5912
      %v5914 = vpop.f32.mrf.mxu0
      %v5915 = vadd.f32 %v5826, %v5914
      %5916 = vmatmul.bf16.gmra.mxu0 %v4565
      %v5917 = vpop.f32.mrf.mxu0
      %v5918 = vadd.f32 %v5829, %v5917
      %v5919 = vpop.f32.mrf.mxu0
      %v5920 = vadd.f32 %v5831, %v5919
      %5921 = vmatmul.bf16.gmra.mxu0 %v4566
      %v5922 = vpop.f32.mrf.mxu0
      %v5923 = vadd.f32 %v5834, %v5922
      %v5924 = vpop.f32.mrf.mxu0
      %v5925 = vadd.f32 %v5836, %v5924
      %5926 = vmatmul.bf16.gmra.mxu0 %v4567
      %v5927 = vpop.f32.mrf.mxu0
      %v5928 = vadd.f32 %v5839, %v5927
      %v5929 = vpop.f32.mrf.mxu0
      %v5930 = vadd.f32 %v5841, %v5929
      %5931 = vmatmul.bf16.gmra.mxu0 %v4568
      %v5932 = vpop.f32.mrf.mxu0
      %v5933 = vadd.f32 %v5844, %v5932
      %v5934 = vpop.f32.mrf.mxu0
      %v5935 = vadd.f32 %v5846, %v5934
      %5936 = vmatmul.bf16.gmra.mxu0 %v4569
      %v5937 = vpop.f32.mrf.mxu0
      %v5938 = vadd.f32 %v5849, %v5937
      %v5939 = vpop.f32.mrf.mxu0
      %v5940 = vadd.f32 %v5851, %v5939
      %5941 = vmatmul.bf16.gmra.mxu0 %v4570
      %v5942 = vpop.f32.mrf.mxu0
      %v5943 = vadd.f32 %v5854, %v5942
      %v5944 = vpop.f32.mrf.mxu0
      %v5945 = vadd.f32 %v5856, %v5944
      %5946 = vmatmul.bf16.gmra.mxu0 %v4571
      %v5947 = vpop.f32.mrf.mxu0
      %v5948 = vadd.f32 %v5859, %v5947
      %v5949 = vpop.f32.mrf.mxu0
      %v5950 = vadd.f32 %v5861, %v5949
      %5951 = vmatmul.bf16.gmra.mxu0 %v4572
      %v5952 = vpop.f32.mrf.mxu0
      %v5953 = vadd.f32 %v5864, %v5952
      %v5954 = vpop.f32.mrf.mxu0
      %v5955 = vadd.f32 %v5866, %v5954
      %5956 = vmatmul.bf16.gmra.mxu0 %v4573
      %v5957 = vpop.f32.mrf.mxu0
      %v5958 = vadd.f32 %v5869, %v5957
      %v5959 = vpop.f32.mrf.mxu0
      %v5960 = vadd.f32 %v5871, %v5959
      %5961 = vmatmul.bf16.gmra.mxu0 %v4574
      %v5962 = vpop.f32.mrf.mxu0
      %v5963 = vadd.f32 %v5874, %v5962
      %v5964 = vpop.f32.mrf.mxu0
      %v5965 = vadd.f32 %v5876, %v5964
      %5966 = vmatmul.bf16.gmra.mxu0 %v4575
      %v5967 = vpop.f32.mrf.mxu0
      %v5968 = vadd.f32 %v5879, %v5967
      %v5969 = vpop.f32.mrf.mxu0
      %v5970 = vadd.f32 %v5881, %v5969
      %5971 = vmatmul.bf16.gmra.mxu0 %v4576
      %v5972 = vpop.f32.mrf.mxu0
      %v5973 = vadd.f32 %v5884, %v5972
      %v5974 = vpop.f32.mrf.mxu0
      %v5975 = vadd.f32 %v5886, %v5974
      %5976 = vdwg.mxu0
      %5977 = vmatpush.bf16.msra.mxu0 %v5192
      %5978 = vmatpush.bf16.msra.mxu0 %v5191
      %5979 = vmatpush.bf16.msra.mxu0 %v5190
      %5980 = vmatpush.bf16.msra.mxu0 %v5189
      %5981 = vmatpush.bf16.msra.mxu0 %v5188
      %5982 = vmatpush.bf16.msra.mxu0 %v5187
      %5983 = vmatpush.bf16.msra.mxu0 %v5186
      %5984 = vmatpush.bf16.msra.mxu0 %v5185
      %5985 = vmatmul.bf16.gmra.mxu0 %v4657
      %v5986 = vpop.f32.mrf.mxu0
      %v5987 = vadd.f32 %v5898, %v5986
      %v5988 = vpop.f32.mrf.mxu0
      %v5989 = vadd.f32 %v5900, %v5988
      %5990 = vmatmul.bf16.gmra.mxu0 %v4658
      %v5991 = vpop.f32.mrf.mxu0
      %v5992 = vadd.f32 %v5903, %v5991
      %v5993 = vpop.f32.mrf.mxu0
      %v5994 = vadd.f32 %v5905, %v5993
      %5995 = vmatmul.bf16.gmra.mxu0 %v4659
      %v5996 = vpop.f32.mrf.mxu0
      %v5997 = vadd.f32 %v5908, %v5996
      %v5998 = vpop.f32.mrf.mxu0
      %v5999 = vadd.f32 %v5910, %v5998
      %6000 = vmatmul.bf16.gmra.mxu0 %v4660
      %v6001 = vpop.f32.mrf.mxu0
      %v6002 = vadd.f32 %v5913, %v6001
      %v6003 = vpop.f32.mrf.mxu0
      %v6004 = vadd.f32 %v5915, %v6003
      %6005 = vmatmul.bf16.gmra.mxu0 %v4661
      %v6006 = vpop.f32.mrf.mxu0
      %v6007 = vadd.f32 %v5918, %v6006
      %v6008 = vpop.f32.mrf.mxu0
      %v6009 = vadd.f32 %v5920, %v6008
      %6010 = vmatmul.bf16.gmra.mxu0 %v4662
      %v6011 = vpop.f32.mrf.mxu0
      %v6012 = vadd.f32 %v5923, %v6011
      %v6013 = vpop.f32.mrf.mxu0
      %v6014 = vadd.f32 %v5925, %v6013
      %6015 = vmatmul.bf16.gmra.mxu0 %v4663
      %v6016 = vpop.f32.mrf.mxu0
      %v6017 = vadd.f32 %v5928, %v6016
      %v6018 = vpop.f32.mrf.mxu0
      %v6019 = vadd.f32 %v5930, %v6018
      %6020 = vmatmul.bf16.gmra.mxu0 %v4664
      %v6021 = vpop.f32.mrf.mxu0
      %v6022 = vadd.f32 %v5933, %v6021
      %v6023 = vpop.f32.mrf.mxu0
      %v6024 = vadd.f32 %v5935, %v6023
      %6025 = vmatmul.bf16.gmra.mxu0 %v4665
      %v6026 = vpop.f32.mrf.mxu0
      %v6027 = vadd.f32 %v5938, %v6026
      %v6028 = vpop.f32.mrf.mxu0
      %v6029 = vadd.f32 %v5940, %v6028
      %6030 = vmatmul.bf16.gmra.mxu0 %v4666
      %v6031 = vpop.f32.mrf.mxu0
      %v6032 = vadd.f32 %v5943, %v6031
      %v6033 = vpop.f32.mrf.mxu0
      %v6034 = vadd.f32 %v5945, %v6033
      %6035 = vmatmul.bf16.gmra.mxu0 %v4667
      %v6036 = vpop.f32.mrf.mxu0
      %v6037 = vadd.f32 %v5948, %v6036
      %v6038 = vpop.f32.mrf.mxu0
      %v6039 = vadd.f32 %v5950, %v6038
      %6040 = vmatmul.bf16.gmra.mxu0 %v4668
      %v6041 = vpop.f32.mrf.mxu0
      %v6042 = vadd.f32 %v5953, %v6041
      %v6043 = vpop.f32.mrf.mxu0
      %v6044 = vadd.f32 %v5955, %v6043
      %6045 = vmatmul.bf16.gmra.mxu0 %v4669
      %v6046 = vpop.f32.mrf.mxu0
      %v6047 = vadd.f32 %v5958, %v6046
      %v6048 = vpop.f32.mrf.mxu0
      %v6049 = vadd.f32 %v5960, %v6048
      %6050 = vmatmul.bf16.gmra.mxu0 %v4670
      %v6051 = vpop.f32.mrf.mxu0
      %v6052 = vadd.f32 %v5963, %v6051
      %v6053 = vpop.f32.mrf.mxu0
      %v6054 = vadd.f32 %v5965, %v6053
      %6055 = vmatmul.bf16.gmra.mxu0 %v4671
      %v6056 = vpop.f32.mrf.mxu0
      %v6057 = vadd.f32 %v5968, %v6056
      %v6058 = vpop.f32.mrf.mxu0
      %v6059 = vadd.f32 %v5970, %v6058
      %6060 = vmatmul.bf16.gmra.mxu0 %v4672
      %v6061 = vpop.f32.mrf.mxu0
      %v6062 = vadd.f32 %v5973, %v6061
      %v6063 = vpop.f32.mrf.mxu0
      %v6064 = vadd.f32 %v5975, %v6063
      %6065 = vdwg.mxu0
      %v6066 = vld [vmem:[%s5] sm:$0x1]
      %v6068 = vperm.slane %v6066, 0
      %v6070 = vmul.f32 %v5987, %v6068
      %v6071 = vmul.f32 %v5989, %v6068
      %v6072 = vmul.f32 %v5992, %v6068
      %v6073 = vmul.f32 %v5994, %v6068
      %v6074 = vmul.f32 %v5997, %v6068
      %v6075 = vmul.f32 %v5999, %v6068
      %v6076 = vmul.f32 %v6002, %v6068
      %v6077 = vmul.f32 %v6004, %v6068
      %v6078 = vmul.f32 %v6007, %v6068
      %v6079 = vmul.f32 %v6009, %v6068
      %v6080 = vmul.f32 %v6012, %v6068
      %v6081 = vmul.f32 %v6014, %v6068
      %v6082 = vmul.f32 %v6017, %v6068
      %v6083 = vmul.f32 %v6019, %v6068
      %v6084 = vmul.f32 %v6022, %v6068
      %v6085 = vmul.f32 %v6024, %v6068
      %v6086 = vmul.f32 %v6027, %v6068
      %v6087 = vmul.f32 %v6029, %v6068
      %v6088 = vmul.f32 %v6032, %v6068
      %v6089 = vmul.f32 %v6034, %v6068
      %v6090 = vmul.f32 %v6037, %v6068
      %v6091 = vmul.f32 %v6039, %v6068
      %v6092 = vmul.f32 %v6042, %v6068
      %v6093 = vmul.f32 %v6044, %v6068
      %v6094 = vmul.f32 %v6047, %v6068
      %v6095 = vmul.f32 %v6049, %v6068
      %v6096 = vmul.f32 %v6052, %v6068
      %v6097 = vmul.f32 %v6054, %v6068
      %v6098 = vmul.f32 %v6057, %v6068
      %v6099 = vmul.f32 %v6059, %v6068
      %v6100 = vmul.f32 %v6062, %v6068
      %v6101 = vmul.f32 %v6064, %v6068
      %v6102 = vld [vmem:[%s6] sm:$0x1]
      %v6104 = vperm.slane %v6102, 0
      %v6106 = vadd.f32 %v6070, %v6104
      %v6107 = vadd.f32 %v6071, %v6104
      %v6108 = vadd.f32 %v6072, %v6104
      %v6109 = vadd.f32 %v6073, %v6104
      %v6110 = vadd.f32 %v6074, %v6104
      %v6111 = vadd.f32 %v6075, %v6104
      %v6112 = vadd.f32 %v6076, %v6104
      %v6113 = vadd.f32 %v6077, %v6104
      %v6114 = vadd.f32 %v6078, %v6104
      %v6115 = vadd.f32 %v6079, %v6104
      %v6116 = vadd.f32 %v6080, %v6104
      %v6117 = vadd.f32 %v6081, %v6104
      %v6118 = vadd.f32 %v6082, %v6104
      %v6119 = vadd.f32 %v6083, %v6104
      %v6120 = vadd.f32 %v6084, %v6104
      %v6121 = vadd.f32 %v6085, %v6104
      %v6122 = vadd.f32 %v6086, %v6104
      %v6123 = vadd.f32 %v6087, %v6104
      %v6124 = vadd.f32 %v6088, %v6104
      %v6125 = vadd.f32 %v6089, %v6104
      %v6126 = vadd.f32 %v6090, %v6104
      %v6127 = vadd.f32 %v6091, %v6104
      %v6128 = vadd.f32 %v6092, %v6104
      %v6129 = vadd.f32 %v6093, %v6104
      %v6130 = vadd.f32 %v6094, %v6104
      %v6131 = vadd.f32 %v6095, %v6104
      %v6132 = vadd.f32 %v6096, %v6104
      %v6133 = vadd.f32 %v6097, %v6104
      %v6134 = vadd.f32 %v6098, %v6104
      %v6135 = vadd.f32 %v6099, %v6104
      %v6136 = vadd.f32 %v6100, %v6104
      %v6137 = vadd.f32 %v6101, %v6104
      %v6138 = vadd.f32 %v6106, %v280
      %v6139 = vadd.f32 %v6107, %v281
      %v6140 = vadd.f32 %v6108, %v282
      %v6141 = vadd.f32 %v6109, %v283
      %v6142 = vadd.f32 %v6110, %v284
      %v6143 = vadd.f32 %v6111, %v285
      %v6144 = vadd.f32 %v6112, %v286
      %v6145 = vadd.f32 %v6113, %v287
      %v6146 = vadd.f32 %v6114, %v288
      %v6147 = vadd.f32 %v6115, %v289
      %v6148 = vadd.f32 %v6116, %v290
      %v6149 = vadd.f32 %v6117, %v291
      %v6150 = vadd.f32 %v6118, %v292
      %v6151 = vadd.f32 %v6119, %v293
      %v6152 = vadd.f32 %v6120, %v294
      %v6153 = vadd.f32 %v6121, %v295
      %v6154 = vadd.f32 %v6122, %v296
      %v6155 = vadd.f32 %v6123, %v297
      %v6156 = vadd.f32 %v6124, %v298
      %v6157 = vadd.f32 %v6125, %v299
      %v6158 = vadd.f32 %v6126, %v300
      %v6159 = vadd.f32 %v6127, %v301
      %v6160 = vadd.f32 %v6128, %v302
      %v6161 = vadd.f32 %v6129, %v303
      %v6162 = vadd.f32 %v6130, %v304
      %v6163 = vadd.f32 %v6131, %v305
      %v6164 = vadd.f32 %v6132, %v306
      %v6165 = vadd.f32 %v6133, %v307
      %v6166 = vadd.f32 %v6134, %v308
      %v6167 = vadd.f32 %v6135, %v309
      %v6168 = vadd.f32 %v6136, %v310
      %v6169 = vadd.f32 %v6137, %v311
      %v6170 = vmax.f32 %v6138, 0.0
      %v6171 = vmax.f32 %v6139, 0.0
      %v6172 = vmax.f32 %v6140, 0.0
      %v6173 = vmax.f32 %v6141, 0.0
      %v6174 = vmax.f32 %v6142, 0.0
      %v6175 = vmax.f32 %v6143, 0.0
      %v6176 = vmax.f32 %v6144, 0.0
      %v6177 = vmax.f32 %v6145, 0.0
      %v6178 = vmax.f32 %v6146, 0.0
      %v6179 = vmax.f32 %v6147, 0.0
      %v6180 = vmax.f32 %v6148, 0.0
      %v6181 = vmax.f32 %v6149, 0.0
      %v6182 = vmax.f32 %v6150, 0.0
      %v6183 = vmax.f32 %v6151, 0.0
      %v6184 = vmax.f32 %v6152, 0.0
      %v6185 = vmax.f32 %v6153, 0.0
      %v6186 = vmax.f32 %v6154, 0.0
      %v6187 = vmax.f32 %v6155, 0.0
      %v6188 = vmax.f32 %v6156, 0.0
      %v6189 = vmax.f32 %v6157, 0.0
      %v6190 = vmax.f32 %v6158, 0.0
      %v6191 = vmax.f32 %v6159, 0.0
      %v6192 = vmax.f32 %v6160, 0.0
      %v6193 = vmax.f32 %v6161, 0.0
      %v6194 = vmax.f32 %v6162, 0.0
      %v6195 = vmax.f32 %v6163, 0.0
      %v6196 = vmax.f32 %v6164, 0.0
      %v6197 = vmax.f32 %v6165, 0.0
      %v6198 = vmax.f32 %v6166, 0.0
      %v6199 = vmax.f32 %v6167, 0.0
      %v6200 = vmax.f32 %v6168, 0.0
      %v6201 = vmax.f32 %v6169, 0.0
      %6202 = vst [vmem:[%s278] sm:$0xff] %v6170
      %6203 = vst [vmem:[%s278 + $0x8] sm:$0xff] %v6171
      %6204 = vst [vmem:[%s278 + $0x10] sm:$0xff] %v6172
      %6205 = vst [vmem:[%s278 + $0x18] sm:$0xff] %v6173
      %6206 = vst [vmem:[%s278 + $0x20] sm:$0xff] %v6174
      %6207 = vst [vmem:[%s278 + $0x28] sm:$0xff] %v6175
      %6208 = vst [vmem:[%s278 + $0x30] sm:$0xff] %v6176
      %6209 = vst [vmem:[%s278 + $0x38] sm:$0xff] %v6177
      %6210 = vst [vmem:[%s278 + $0x40] sm:$0xff] %v6178
      %6211 = vst [vmem:[%s278 + $0x48] sm:$0xff] %v6179
      %6212 = vst [vmem:[%s278 + $0x50] sm:$0xff] %v6180
      %6213 = vst [vmem:[%s278 + $0x58] sm:$0xff] %v6181
      %6214 = vst [vmem:[%s278 + $0x60] sm:$0xff] %v6182
      %6215 = vst [vmem:[%s278 + $0x68] sm:$0xff] %v6183
      %6216 = vst [vmem:[%s278 + $0x70] sm:$0xff] %v6184
      %6217 = vst [vmem:[%s278 + $0x78] sm:$0xff] %v6185
      %6218 = vst [vmem:[%s278 + $0x80] sm:$0xff] %v6186
      %6219 = vst [vmem:[%s278 + $0x88] sm:$0xff] %v6187
      %6220 = vst [vmem:[%s278 + $0x90] sm:$0xff] %v6188
      %6221 = vst [vmem:[%s278 + $0x98] sm:$0xff] %v6189
      %6222 = vst [vmem:[%s278 + $0xa0] sm:$0xff] %v6190
      %6223 = vst [vmem:[%s278 + $0xa8] sm:$0xff] %v6191
      %6224 = vst [vmem:[%s278 + $0xb0] sm:$0xff] %v6192
      %6225 = vst [vmem:[%s278 + $0xb8] sm:$0xff] %v6193
      %6226 = vst [vmem:[%s278 + $0xc0] sm:$0xff] %v6194
      %6227 = vst [vmem:[%s278 + $0xc8] sm:$0xff] %v6195
      %6228 = vst [vmem:[%s278 + $0xd0] sm:$0xff] %v6196
      %6229 = vst [vmem:[%s278 + $0xd8] sm:$0xff] %v6197
      %6230 = vst [vmem:[%s278 + $0xe0] sm:$0xff] %v6198
      %6231 = vst [vmem:[%s278 + $0xe8] sm:$0xff] %v6199
      %6232 = vst [vmem:[%s278 + $0xf0] sm:$0xff] %v6200
      %6233 = vst [vmem:[%s278 + $0xf8] sm:$0xff] %v6201
      %p6234 = scmp.lt.s32.totalorder %s18, 3
      %s6235 = scalar_select %p6234, %s18, 3
      %s6236 = smul.addr %s6235, 32
      %s6237 = smul.addr %s6236, 8
      %s6238 = scalar_lea.vmem %s7, %s6237
      // Predicated region
      $region49: #{basic_block.1} parent=47 // pred_check
        %p6239 = pneg %p188
      $region50: #{basic_block.1} parent=47 // pred_check_branch
        %6241 = sbr.rel (%p6239) target = $region52
      $region51: #{basic_block.1} parent=47 // pred_region
        _
      $region52: #{basic_block.1} parent=47 // pred_fallthru
        _
    $region48: #{basic_block.1} parent=5 // pred_fallthru
      _
    %p6242 = scmp.le.s32.totalorder 2, %s13
    // Predicated region
    $region53: #{basic_block.1} parent=5 // pred_check
      %p6243 = pneg %p6242
    $region54: #{basic_block.1} parent=5 // pred_check_branch
      %6245 = sbr.rel (%p6243) target = $region56
    $region55: #{basic_block.1} parent=5 // pred_region
      %s6246 = ssub.s32 %s13, 2
      // Predicated region
      $region57: #{basic_block.1} parent=55 // pred_check
        %p6247 = pneg %p194
      $region58: #{basic_block.1} parent=55 // pred_check_branch
        %6249 = sbr.rel (%p6247) target = $region60
      $region59: #{basic_block.1} parent=55 // pred_region
        %p6250 = scmp.lt.s32.totalorder %s19, 3
        %s6251 = scalar_select %p6250, %s19, 3
        %s6252 = smul.addr %s6251, 32
        %s6253 = smul.addr %s6252, 8
        %s6254 = scalar_lea.vmem %s7, %s6253
      $region60: #{basic_block.1} parent=55 // pred_fallthru
        _
    $region56: #{basic_block.1} parent=5 // pred_fallthru
      _
  $region6: #{basic_block.1} parent=0 // loop_footer
    %s17 = sadd.s32 1, %s13
  $region7: #{basic_block.1} parent=0 // loop_footer_branch
    %12 = sbr.rel target = $region3
  $region8: #{basic_block.1} parent=0 // loop_exit
    _

</llo_original>
